<compile_context>
chip_gen: v5e
topology: v5e:2x2
jax: 0.10.0
libtpu: 0.0.40
codegen_flags: <defaults>
</compile_context>

<pallas_src>
import math

import jax
import jax.numpy as jnp
from jax.experimental import pallas as pl
from jax.experimental.pallas import tpu as pltpu

ALPHA = 1.0   # Graph_sampler.alpha
BETA = 0.5    # Graph_sampler.beta


def _softmax_cols(x):
    """Softmax over axis 0 of a 2-D tile; approx reciprocal runs on the EUP."""
    m = jnp.max(x, axis=0, keepdims=True)
    e = jnp.exp(x - m)
    return e * pl.reciprocal(jnp.sum(e, axis=0, keepdims=True), approx=True)


def graph_sampler_kernel(feat_ref, loc_ref, loct_ref, w1_ref, b12_ref, w2_ref,
                         c12_ref, wf_ref, bf_ref, out_ref, h1_scr, sig_scr):
    Bt = loc_ref.shape[0]
    N = loc_ref.shape[1]

    b12 = b12_ref[...]                    # (2, Hh) f32
    b1 = b12[0:1, :]
    b2 = b12[1:2, :]
    c1 = c12_ref[0]                       # (S, N) bf16
    c2 = c12_ref[1]

    # ---- shared slab matmul (MXU, bf16):  (Bt*N, F) @ (F, Hh)
    s1 = jnp.dot(feat_ref[...], w1_ref[...],
                 preferred_element_type=jnp.float32)          # (Bt*N, Hh) f32

    # ---- per-image: similarity adjacency (VPU broadcasts + EUP recip) + GCN1
    adjs = []
    for b in range(Bt):
        loc_b = loc_ref[b]                # (N, 2)
        loct_b = loct_ref[b]              # (2, N)
        dx = loc_b[:, 0:1] - loct_b[0:1, :]                   # (N, N) broadcast sub
        dy = loc_b[:, 1:2] - loct_b[1:2, :]
        d_sq = dx * dx + dy * dy
        adj16 = pl.reciprocal(ALPHA + BETA * d_sq, approx=True).astype(jnp.bfloat16)
        adjs.append(adj16)

        s1_b = s1[b * N:(b + 1) * N, :].astype(jnp.bfloat16)
        h1_b = jnp.maximum(
            jnp.dot(adj16, s1_b, preferred_element_type=jnp.float32) + b1, 0.0)
        # TODO(synk): F.dropout(p=0.2, training=True) is stochastic; inference
        # (identity) semantics are used here.
        h1_scr[pl.ds(b * N, N), :] = h1_b

    # ---- shared slab matmul for layer 2:  (Bt*N, Hh) @ (Hh, Hh)
    h1_slab16 = h1_scr[...].astype(jnp.bfloat16)
    s2 = jnp.dot(h1_slab16, w2_ref[...],
                 preferred_element_type=jnp.float32)          # (Bt*N, Hh) f32

    # ---- per-image: GCN2, collapsers, column softmaxes, sig reduction
    for b in range(Bt):
        adj16 = adjs[b]
        s2_b = s2[b * N:(b + 1) * N, :].astype(jnp.bfloat16)
        h2_b = jnp.maximum(
            jnp.dot(adj16, s2_b, preferred_element_type=jnp.float32) + b2, 0.0)

        h1_b16 = h1_scr[pl.ds(b * N, N), :].astype(jnp.bfloat16)
        t1 = jnp.dot(c1, h1_b16, preferred_element_type=jnp.float32)        # (S, Hh)
        t2 = jnp.dot(c2, h2_b.astype(jnp.bfloat16),
                     preferred_element_type=jnp.float32)
        g1 = _softmax_cols(t1)
        g2 = _softmax_cols(t2)
        sig_scr[:, pl.ds(b, 1)] = jnp.sum(g1 + g2, axis=1, keepdims=True)   # (S, 1)

    # ---- batched fcf + exact softmax: one (Bt, O) store per grid step
    logits = jax.lax.dot_general(sig_scr[...], wf_ref[...],
                                 (((0,), (0,)), ((), ())),
                                 preferred_element_type=jnp.float32)        # (Bt, O)
    logits = logits + bf_ref[...]
    m = jnp.max(logits, axis=-1, keepdims=True)
    e = jnp.exp(logits - m)
    out_ref[...] = e / jnp.sum(e, axis=-1, keepdims=True)


def build_params(key, num_features=3, hidden_graph=32, sig_size=16,
                 num_sample=8, output=10):
    ks = jax.random.split(key, 8)
    stdv = 1.0 / math.sqrt(hidden_graph)
    w1 = jax.random.uniform(ks[0], (num_features, hidden_graph), jnp.float32, -stdv, stdv)
    b1 = jax.random.uniform(ks[1], (1, hidden_graph), jnp.float32, -stdv, stdv)
    w2 = jax.random.uniform(ks[2], (hidden_graph, hidden_graph), jnp.float32, -stdv, stdv)
    b2 = jax.random.uniform(ks[3], (1, hidden_graph), jnp.float32, -stdv, stdv)
    c1 = jax.random.normal(ks[4], (sig_size, num_sample), jnp.float32)
    c2 = jax.random.normal(ks[5], (sig_size, num_sample), jnp.float32)
    stdvf = 1.0 / math.sqrt(sig_size)
    wf = jax.random.uniform(ks[6], (sig_size, output), jnp.float32, -stdvf, stdvf)
    bf = jax.random.uniform(ks[7], (1, output), jnp.float32, -stdvf, stdvf)
    # TODO(synk): m_g_params / (pi, mu, sigma, rho) mixture bookkeeping from
    # forward() is computed but unused on the uniform-sampling path; omitted.
    return dict(w1=w1, b1=b1, w2=w2, b2=b2, c1=c1, c2=c2, wf=wf, bf=bf,
                num_sample=num_sample)


def graph_sampler_forward(x, params, sample_key, block_b=8):
    B, C, H, W = x.shape
    N = params["num_sample"]

    # sample_points(uniform=True): loc = 2*rand(N,2)-1, logprob = -2*ones(N)
    locs = 2.0 * jax.random.uniform(sample_key, (B, N, 2), dtype=jnp.float32) - 1.0
    full_log_prob = jnp.full((B,), -2.0 * N, jnp.float32)   # logprob.sum() per image

    # get_pixel_value: denormalize (row scales by H, col by W), clamp, gather.
    row = jnp.clip((0.5 * ((locs[..., 0] + 1.0) * H) - 0.1).astype(jnp.int32), 0, H - 1)
    col = jnp.clip((0.5 * ((locs[..., 1] + 1.0) * W) - 0.1).astype(jnp.int32), 0, W - 1)
    pix = x[jnp.arange(B)[:, None], :, row, col]            # (B, N, C)
    feat = jnp.concatenate([pix, locs], axis=-1)            # (B, N, C+2)

    F = feat.shape[-1]
    Hh = params["w1"].shape[1]
    S = params["c1"].shape[0]
    O = params["wf"].shape[1]

    # ---- batch blocking: Bt images per grid step, pad B up to a multiple of Bt
    Bt = min(block_b, B)
    Bp = ((B + Bt - 1) // Bt) * Bt
    if Bp != B:
        pad = Bp - B
        feat = jnp.concatenate([feat, jnp.zeros((pad, N, F), feat.dtype)], axis=0)
        locs_p = jnp.concatenate([locs, jnp.zeros((pad, N, 2), locs.dtype)], axis=0)
    else:
        locs_p = locs

    feat2d = feat.reshape(Bp * N, F).astype(jnp.bfloat16)   # slab layout for the MXU
    loc_t = jnp.transpose(locs_p, (0, 2, 1))                # (Bp, 2, N) for row broadcasts

    w1 = params["w1"].astype(jnp.bfloat16)
    w2 = params["w2"].astype(jnp.bfloat16)
    b12 = jnp.concatenate([params["b1"], params["b2"]], axis=0)                  # (2, Hh)
    c12 = jnp.stack([params["c1"], params["c2"]], axis=0).astype(jnp.bfloat16)   # (2, S, N)

    out = pl.pallas_call(
        graph_sampler_kernel,
        out_shape=jax.ShapeDtypeStruct((Bp, O), jnp.float32),
        grid=(Bp // Bt,),
        in_specs=[
            pl.BlockSpec((Bt * N, F), lambda i: (i, 0)),       # feat slab (bf16)
            pl.BlockSpec((Bt, N, 2), lambda i: (i, 0, 0)),     # locs
            pl.BlockSpec((Bt, 2, N), lambda i: (i, 0, 0)),     # locs transposed
            pl.BlockSpec((F, Hh), lambda i: (0, 0)),           # W1 (bf16)
            pl.BlockSpec((2, Hh), lambda i: (0, 0)),           # b1 ++ b2
            pl.BlockSpec((Hh, Hh), lambda i: (0, 0)),          # W2 (bf16)
            pl.BlockSpec((2, S, N), lambda i: (0, 0, 0)),      # collapser1/2 (bf16)
            pl.BlockSpec((S, O), lambda i: (0, 0)),            # Wf
            pl.BlockSpec((1, O), lambda i: (0, 0)),            # bf
        ],
        out_specs=pl.BlockSpec((Bt, O), lambda i: (i, 0)),
        scratch_shapes=[
            pltpu.VMEM((Bt * N, Hh), jnp.float32),   # h1 slab
            pltpu.VMEM((S, Bt), jnp.float32),        # sig columns
        ],
        compiler_params=pltpu.CompilerParams(dimension_semantics=("parallel",)),
    )(feat2d, locs_p, loc_t, w1, b12, w2, c12, params["wf"], params["bf"])

    probs = out[:B]                 # softmax(fcf(sig)); padded rows dropped
    return probs, full_log_prob


if __name__ == "__main__":
    key = jax.random.PRNGKey(0)
    pkey, xkey, skey = jax.random.split(key, 3)

    # num_features = C + 2 (pixel channels ++ sampled (row, col) coordinates)
    B, C, H, W = 16, 3, 16, 16
    params = build_params(pkey, num_features=C + 2, hidden_graph=32,
                          sig_size=16, num_sample=8, output=10)
    x = jax.random.normal(xkey, (B, C, H, W), jnp.float32)

    probs, full_log_prob = graph_sampler_forward(x, params, skey, block_b=8)
    probs, full_log_prob = jax.block_until_ready((probs, full_log_prob))

    assert probs.shape == (B, 10)
    assert full_log_prob.shape == (B,)
    assert bool(jnp.all(jnp.isfinite(probs)))
    # the final fcf softmax is exact -> each row sums to 1
    assert bool(jnp.allclose(jnp.sum(probs, axis=-1), 1.0, atol=1e-5))
    print("KERNEL_OK")
</pallas_src>

<mosaic_0001>
module attributes {stable_mosaic.version = 11 : i64} {
  func.func @graph_sampler_kernel(%arg0: i32, %arg1: memref<64x5xbf16, #tpu.memory_space<vmem>>, %arg2: memref<8x8x2xf32, #tpu.memory_space<vmem>>, %arg3: memref<8x2x8xf32, #tpu.memory_space<vmem>>, %arg4: memref<5x32xbf16, #tpu.memory_space<vmem>>, %arg5: memref<2x32xf32, #tpu.memory_space<vmem>>, %arg6: memref<32x32xbf16, #tpu.memory_space<vmem>>, %arg7: memref<2x16x8xbf16, #tpu.memory_space<vmem>>, %arg8: memref<16x10xf32, #tpu.memory_space<vmem>>, %arg9: memref<1x10xf32, #tpu.memory_space<vmem>>, %arg10: memref<8x10xf32, #tpu.memory_space<vmem>>, %arg11: memref<64x32xf32, #tpu.memory_space<vmem>>, %arg12: memref<16x8xf32, #tpu.memory_space<vmem>>) attributes {dimension_semantics = [#tpu.dimension_semantics<parallel>], iteration_bounds = array<i64: 2>, scalar_prefetch = 0 : i64, scratch_operands = 2 : i64, tpu.core_type = #tpu.core_type<tc>, window_params = [{transform_indices = @transform_0, window_bounds = array<i64: 64, 5>}, {transform_indices = @transform_1, window_bounds = array<i64: 8, 8, 2>}, {transform_indices = @transform_2, window_bounds = array<i64: 8, 2, 8>}, {pipeline_mode = #tpu.pipeline_mode<synchronous>, transform_indices = @transform_3, window_bounds = array<i64: 5, 32>}, {pipeline_mode = #tpu.pipeline_mode<synchronous>, transform_indices = @transform_4, window_bounds = array<i64: 2, 32>}, {pipeline_mode = #tpu.pipeline_mode<synchronous>, transform_indices = @transform_5, window_bounds = array<i64: 32, 32>}, {pipeline_mode = #tpu.pipeline_mode<synchronous>, transform_indices = @transform_6, window_bounds = array<i64: 2, 16, 8>}, {pipeline_mode = #tpu.pipeline_mode<synchronous>, transform_indices = @transform_7, window_bounds = array<i64: 16, 10>}, {pipeline_mode = #tpu.pipeline_mode<synchronous>, transform_indices = @transform_8, window_bounds = array<i64: 1, 10>}, {transform_indices = @transform_9, window_bounds = array<i64: 8, 10>}]} {
    %c0 = arith.constant 0 : index
    %c0_0 = arith.constant 0 : index
    %0 = vector.load %arg5[%c0, %c0_0] : memref<2x32xf32, #tpu.memory_space<vmem>>, vector<2x32xf32>
    %1 = vector.extract_strided_slice %0 {offsets = [0, 0], sizes = [1, 32], strides = [1, 1]} : vector<2x32xf32> to vector<1x32xf32>
    %2 = vector.extract_strided_slice %0 {offsets = [1, 0], sizes = [1, 32], strides = [1, 1]} : vector<2x32xf32> to vector<1x32xf32>
    %c0_1 = arith.constant 0 : index
    %c0_2 = arith.constant 0 : index
    %c0_3 = arith.constant 0 : index
    %3 = vector.load %arg7[%c0_1, %c0_2, %c0_3] : memref<2x16x8xbf16, #tpu.memory_space<vmem>>, vector<1x16x8xbf16>
    %4 = vector.shape_cast %3 : vector<1x16x8xbf16> to vector<16x8xbf16>
    %c1 = arith.constant 1 : index
    %c0_4 = arith.constant 0 : index
    %c0_5 = arith.constant 0 : index
    %5 = vector.load %arg7[%c1, %c0_4, %c0_5] : memref<2x16x8xbf16, #tpu.memory_space<vmem>>, vector<1x16x8xbf16>
    %6 = vector.shape_cast %5 : vector<1x16x8xbf16> to vector<16x8xbf16>
    %c0_6 = arith.constant 0 : index
    %c0_7 = arith.constant 0 : index
    %7 = vector.load %arg1[%c0_6, %c0_7] : memref<64x5xbf16, #tpu.memory_space<vmem>>, vector<64x5xbf16>
    %c0_8 = arith.constant 0 : index
    %c0_9 = arith.constant 0 : index
    %8 = vector.load %arg4[%c0_8, %c0_9] : memref<5x32xbf16, #tpu.memory_space<vmem>>, vector<5x32xbf16>
    %cst = arith.constant dense<0.000000e+00> : vector<64x32xf32>
    %9 = tpu.matmul %7, %8, %cst {dimension_numbers = #tpu.dot_dimension_numbers<[1], [0], [0], [1], [0, 0, 1, 1], [], []>} : vector<64x5xbf16>, vector<5x32xbf16>, vector<64x32xf32> -> vector<64x32xf32>
    %c0_10 = arith.constant 0 : index
    %c0_11 = arith.constant 0 : index
    %c0_12 = arith.constant 0 : index
    %10 = vector.load %arg2[%c0_10, %c0_11, %c0_12] : memref<8x8x2xf32, #tpu.memory_space<vmem>>, vector<1x8x2xf32>
    %11 = vector.shape_cast %10 : vector<1x8x2xf32> to vector<8x2xf32>
    %c0_13 = arith.constant 0 : index
    %c0_14 = arith.constant 0 : index
    %c0_15 = arith.constant 0 : index
    %12 = vector.load %arg3[%c0_13, %c0_14, %c0_15] : memref<8x2x8xf32, #tpu.memory_space<vmem>>, vector<1x2x8xf32>
    %13 = vector.shape_cast %12 : vector<1x2x8xf32> to vector<2x8xf32>
    %14 = vector.extract_strided_slice %11 {offsets = [0, 0], sizes = [8, 1], strides = [1, 1]} : vector<8x2xf32> to vector<8x1xf32>
    %15 = vector.extract_strided_slice %13 {offsets = [0, 0], sizes = [1, 8], strides = [1, 1]} : vector<2x8xf32> to vector<1x8xf32>
    %16 = vector.broadcast %14 : vector<8x1xf32> to vector<8x8xf32>
    %17 = vector.broadcast %15 : vector<1x8xf32> to vector<8x8xf32>
    %18 = arith.subf %16, %17 : vector<8x8xf32>
    %19 = vector.extract_strided_slice %11 {offsets = [0, 1], sizes = [8, 1], strides = [1, 1]} : vector<8x2xf32> to vector<8x1xf32>
    %20 = vector.extract_strided_slice %13 {offsets = [1, 0], sizes = [1, 8], strides = [1, 1]} : vector<2x8xf32> to vector<1x8xf32>
    %21 = vector.broadcast %19 : vector<8x1xf32> to vector<8x8xf32>
    %22 = vector.broadcast %20 : vector<1x8xf32> to vector<8x8xf32>
    %23 = arith.subf %21, %22 : vector<8x8xf32>
    %24 = arith.mulf %18, %18 : vector<8x8xf32>
    %25 = arith.mulf %23, %23 : vector<8x8xf32>
    %26 = arith.addf %24, %25 : vector<8x8xf32>
    %cst_16 = arith.constant 5.000000e-01 : f32
    %27 = vector.broadcast %cst_16 : f32 to vector<8x8xf32>
    %28 = arith.mulf %27, %26 : vector<8x8xf32>
    %cst_17 = arith.constant 1.000000e+00 : f32
    %29 = vector.broadcast %cst_17 : f32 to vector<8x8xf32>
    %30 = arith.addf %29, %28 : vector<8x8xf32>
    %31 = tpu.reciprocal %30 {approx = true} : vector<8x8xf32> -> vector<8x8xf32>
    %32 = arith.truncf %31 : vector<8x8xf32> to vector<8x8xbf16>
    %33 = vector.extract_strided_slice %9 {offsets = [0, 0], sizes = [8, 32], strides = [1, 1]} : vector<64x32xf32> to vector<8x32xf32>
    %34 = arith.truncf %33 : vector<8x32xf32> to vector<8x32xbf16>
    %cst_18 = arith.constant dense<0.000000e+00> : vector<8x32xf32>
    %35 = tpu.matmul %32, %34, %cst_18 {dimension_numbers = #tpu.dot_dimension_numbers<[1], [0], [0], [1], [0, 0, 1, 1], [], []>} : vector<8x8xbf16>, vector<8x32xbf16>, vector<8x32xf32> -> vector<8x32xf32>
    %36 = vector.broadcast %1 : vector<1x32xf32> to vector<8x32xf32>
    %37 = arith.addf %35, %36 : vector<8x32xf32>
    %cst_19 = arith.constant 0.000000e+00 : f32
    %38 = vector.broadcast %cst_19 : f32 to vector<8x32xf32>
    %39 = arith.maximumf %37, %38 : vector<8x32xf32>
    %c0_20 = arith.constant 0 : index
    %c0_21 = arith.constant 0 : index
    %40 = vector.load %arg11[%c0_20, %c0_21] : memref<64x32xf32, #tpu.memory_space<vmem>>, vector<8x32xf32>
    tpu.vector_store %arg11[%c0_20, %c0_21], %39 {strides = array<i32>} : memref<64x32xf32, #tpu.memory_space<vmem>>, vector<8x32xf32>,
    %c1_22 = arith.constant 1 : index
    %c0_23 = arith.constant 0 : index
    %c0_24 = arith.constant 0 : index
    %41 = vector.load %arg2[%c1_22, %c0_23, %c0_24] : memref<8x8x2xf32, #tpu.memory_space<vmem>>, vector<1x8x2xf32>
    %42 = vector.shape_cast %41 : vector<1x8x2xf32> to vector<8x2xf32>
    %c1_25 = arith.constant 1 : index
    %c0_26 = arith.constant 0 : index
    %c0_27 = arith.constant 0 : index
    %43 = vector.load %arg3[%c1_25, %c0_26, %c0_27] : memref<8x2x8xf32, #tpu.memory_space<vmem>>, vector<1x2x8xf32>
    %44 = vector.shape_cast %43 : vector<1x2x8xf32> to vector<2x8xf32>
    %45 = vector.extract_strided_slice %42 {offsets = [0, 0], sizes = [8, 1], strides = [1, 1]} : vector<8x2xf32> to vector<8x1xf32>
    %46 = vector.extract_strided_slice %44 {offsets = [0, 0], sizes = [1, 8], strides = [1, 1]} : vector<2x8xf32> to vector<1x8xf32>
    %47 = vector.broadcast %45 : vector<8x1xf32> to vector<8x8xf32>
    %48 = vector.broadcast %46 : vector<1x8xf32> to vector<8x8xf32>
    %49 = arith.subf %47, %48 : vector<8x8xf32>
    %50 = vector.extract_strided_slice %42 {offsets = [0, 1], sizes = [8, 1], strides = [1, 1]} : vector<8x2xf32> to vector<8x1xf32>
    %51 = vector.extract_strided_slice %44 {offsets = [1, 0], sizes = [1, 8], strides = [1, 1]} : vector<2x8xf32> to vector<1x8xf32>
    %52 = vector.broadcast %50 : vector<8x1xf32> to vector<8x8xf32>
    %53 = vector.broadcast %51 : vector<1x8xf32> to vector<8x8xf32>
    %54 = arith.subf %52, %53 : vector<8x8xf32>
    %55 = arith.mulf %49, %49 : vector<8x8xf32>
    %56 = arith.mulf %54, %54 : vector<8x8xf32>
    %57 = arith.addf %55, %56 : vector<8x8xf32>
    %cst_28 = arith.constant 5.000000e-01 : f32
    %58 = vector.broadcast %cst_28 : f32 to vector<8x8xf32>
    %59 = arith.mulf %58, %57 : vector<8x8xf32>
    %cst_29 = arith.constant 1.000000e+00 : f32
    %60 = vector.broadcast %cst_29 : f32 to vector<8x8xf32>
    %61 = arith.addf %60, %59 : vector<8x8xf32>
    %62 = tpu.reciprocal %61 {approx = true} : vector<8x8xf32> -> vector<8x8xf32>
    %63 = arith.truncf %62 : vector<8x8xf32> to vector<8x8xbf16>
    %64 = vector.extract_strided_slice %9 {offsets = [8, 0], sizes = [8, 32], strides = [1, 1]} : vector<64x32xf32> to vector<8x32xf32>
    %65 = arith.truncf %64 : vector<8x32xf32> to vector<8x32xbf16>
    %cst_30 = arith.constant dense<0.000000e+00> : vector<8x32xf32>
    %66 = tpu.matmul %63, %65, %cst_30 {dimension_numbers = #tpu.dot_dimension_numbers<[1], [0], [0], [1], [0, 0, 1, 1], [], []>} : vector<8x8xbf16>, vector<8x32xbf16>, vector<8x32xf32> -> vector<8x32xf32>
    %67 = vector.broadcast %1 : vector<1x32xf32> to vector<8x32xf32>
    %68 = arith.addf %66, %67 : vector<8x32xf32>
    %cst_31 = arith.constant 0.000000e+00 : f32
    %69 = vector.broadcast %cst_31 : f32 to vector<8x32xf32>
    %70 = arith.maximumf %68, %69 : vector<8x32xf32>
    %c8 = arith.constant 8 : index
    %c0_32 = arith.constant 0 : index
    %71 = vector.load %arg11[%c8, %c0_32] : memref<64x32xf32, #tpu.memory_space<vmem>>, vector<8x32xf32>
    tpu.vector_store %arg11[%c8, %c0_32], %70 {strides = array<i32>} : memref<64x32xf32, #tpu.memory_space<vmem>>, vector<8x32xf32>,
    %c2 = arith.constant 2 : index
    %c0_33 = arith.constant 0 : index
    %c0_34 = arith.constant 0 : index
    %72 = vector.load %arg2[%c2, %c0_33, %c0_34] : memref<8x8x2xf32, #tpu.memory_space<vmem>>, vector<1x8x2xf32>
    %73 = vector.shape_cast %72 : vector<1x8x2xf32> to vector<8x2xf32>
    %c2_35 = arith.constant 2 : index
    %c0_36 = arith.constant 0 : index
    %c0_37 = arith.constant 0 : index
    %74 = vector.load %arg3[%c2_35, %c0_36, %c0_37] : memref<8x2x8xf32, #tpu.memory_space<vmem>>, vector<1x2x8xf32>
    %75 = vector.shape_cast %74 : vector<1x2x8xf32> to vector<2x8xf32>
    %76 = vector.extract_strided_slice %73 {offsets = [0, 0], sizes = [8, 1], strides = [1, 1]} : vector<8x2xf32> to vector<8x1xf32>
    %77 = vector.extract_strided_slice %75 {offsets = [0, 0], sizes = [1, 8], strides = [1, 1]} : vector<2x8xf32> to vector<1x8xf32>
    %78 = vector.broadcast %76 : vector<8x1xf32> to vector<8x8xf32>
    %79 = vector.broadcast %77 : vector<1x8xf32> to vector<8x8xf32>
    %80 = arith.subf %78, %79 : vector<8x8xf32>
    %81 = vector.extract_strided_slice %73 {offsets = [0, 1], sizes = [8, 1], strides = [1, 1]} : vector<8x2xf32> to vector<8x1xf32>
    %82 = vector.extract_strided_slice %75 {offsets = [1, 0], sizes = [1, 8], strides = [1, 1]} : vector<2x8xf32> to vector<1x8xf32>
    %83 = vector.broadcast %81 : vector<8x1xf32> to vector<8x8xf32>
    %84 = vector.broadcast %82 : vector<1x8xf32> to vector<8x8xf32>
    %85 = arith.subf %83, %84 : vector<8x8xf32>
    %86 = arith.mulf %80, %80 : vector<8x8xf32>
    %87 = arith.mulf %85, %85 : vector<8x8xf32>
    %88 = arith.addf %86, %87 : vector<8x8xf32>
    %cst_38 = arith.constant 5.000000e-01 : f32
    %89 = vector.broadcast %cst_38 : f32 to vector<8x8xf32>
    %90 = arith.mulf %89, %88 : vector<8x8xf32>
    %cst_39 = arith.constant 1.000000e+00 : f32
    %91 = vector.broadcast %cst_39 : f32 to vector<8x8xf32>
    %92 = arith.addf %91, %90 : vector<8x8xf32>
    %93 = tpu.reciprocal %92 {approx = true} : vector<8x8xf32> -> vector<8x8xf32>
    %94 = arith.truncf %93 : vector<8x8xf32> to vector<8x8xbf16>
    %95 = vector.extract_strided_slice %9 {offsets = [16, 0], sizes = [8, 32], strides = [1, 1]} : vector<64x32xf32> to vector<8x32xf32>
    %96 = arith.truncf %95 : vector<8x32xf32> to vector<8x32xbf16>
    %cst_40 = arith.constant dense<0.000000e+00> : vector<8x32xf32>
    %97 = tpu.matmul %94, %96, %cst_40 {dimension_numbers = #tpu.dot_dimension_numbers<[1], [0], [0], [1], [0, 0, 1, 1], [], []>} : vector<8x8xbf16>, vector<8x32xbf16>, vector<8x32xf32> -> vector<8x32xf32>
    %98 = vector.broadcast %1 : vector<1x32xf32> to vector<8x32xf32>
    %99 = arith.addf %97, %98 : vector<8x32xf32>
    %cst_41 = arith.constant 0.000000e+00 : f32
    %100 = vector.broadcast %cst_41 : f32 to vector<8x32xf32>
    %101 = arith.maximumf %99, %100 : vector<8x32xf32>
    %c16 = arith.constant 16 : index
    %c0_42 = arith.constant 0 : index
    %102 = vector.load %arg11[%c16, %c0_42] : memref<64x32xf32, #tpu.memory_space<vmem>>, vector<8x32xf32>
    tpu.vector_store %arg11[%c16, %c0_42], %101 {strides = array<i32>} : memref<64x32xf32, #tpu.memory_space<vmem>>, vector<8x32xf32>,
    %c3 = arith.constant 3 : index
    %c0_43 = arith.constant 0 : index
    %c0_44 = arith.constant 0 : index
    %103 = vector.load %arg2[%c3, %c0_43, %c0_44] : memref<8x8x2xf32, #tpu.memory_space<vmem>>, vector<1x8x2xf32>
    %104 = vector.shape_cast %103 : vector<1x8x2xf32> to vector<8x2xf32>
    %c3_45 = arith.constant 3 : index
    %c0_46 = arith.constant 0 : index
    %c0_47 = arith.constant 0 : index
    %105 = vector.load %arg3[%c3_45, %c0_46, %c0_47] : memref<8x2x8xf32, #tpu.memory_space<vmem>>, vector<1x2x8xf32>
    %106 = vector.shape_cast %105 : vector<1x2x8xf32> to vector<2x8xf32>
    %107 = vector.extract_strided_slice %104 {offsets = [0, 0], sizes = [8, 1], strides = [1, 1]} : vector<8x2xf32> to vector<8x1xf32>
    %108 = vector.extract_strided_slice %106 {offsets = [0, 0], sizes = [1, 8], strides = [1, 1]} : vector<2x8xf32> to vector<1x8xf32>
    %109 = vector.broadcast %107 : vector<8x1xf32> to vector<8x8xf32>
    %110 = vector.broadcast %108 : vector<1x8xf32> to vector<8x8xf32>
    %111 = arith.subf %109, %110 : vector<8x8xf32>
    %112 = vector.extract_strided_slice %104 {offsets = [0, 1], sizes = [8, 1], strides = [1, 1]} : vector<8x2xf32> to vector<8x1xf32>
    %113 = vector.extract_strided_slice %106 {offsets = [1, 0], sizes = [1, 8], strides = [1, 1]} : vector<2x8xf32> to vector<1x8xf32>
    %114 = vector.broadcast %112 : vector<8x1xf32> to vector<8x8xf32>
    %115 = vector.broadcast %113 : vector<1x8xf32> to vector<8x8xf32>
    %116 = arith.subf %114, %115 : vector<8x8xf32>
    %117 = arith.mulf %111, %111 : vector<8x8xf32>
    %118 = arith.mulf %116, %116 : vector<8x8xf32>
    %119 = arith.addf %117, %118 : vector<8x8xf32>
    %cst_48 = arith.constant 5.000000e-01 : f32
    %120 = vector.broadcast %cst_48 : f32 to vector<8x8xf32>
    %121 = arith.mulf %120, %119 : vector<8x8xf32>
    %cst_49 = arith.constant 1.000000e+00 : f32
    %122 = vector.broadcast %cst_49 : f32 to vector<8x8xf32>
    %123 = arith.addf %122, %121 : vector<8x8xf32>
    %124 = tpu.reciprocal %123 {approx = true} : vector<8x8xf32> -> vector<8x8xf32>
    %125 = arith.truncf %124 : vector<8x8xf32> to vector<8x8xbf16>
    %126 = vector.extract_strided_slice %9 {offsets = [24, 0], sizes = [8, 32], strides = [1, 1]} : vector<64x32xf32> to vector<8x32xf32>
    %127 = arith.truncf %126 : vector<8x32xf32> to vector<8x32xbf16>
    %cst_50 = arith.constant dense<0.000000e+00> : vector<8x32xf32>
    %128 = tpu.matmul %125, %127, %cst_50 {dimension_numbers = #tpu.dot_dimension_numbers<[1], [0], [0], [1], [0, 0, 1, 1], [], []>} : vector<8x8xbf16>, vector<8x32xbf16>, vector<8x32xf32> -> vector<8x32xf32>
    %129 = vector.broadcast %1 : vector<1x32xf32> to vector<8x32xf32>
    %130 = arith.addf %128, %129 : vector<8x32xf32>
    %cst_51 = arith.constant 0.000000e+00 : f32
    %131 = vector.broadcast %cst_51 : f32 to vector<8x32xf32>
    %132 = arith.maximumf %130, %131 : vector<8x32xf32>
    %c24 = arith.constant 24 : index
    %c0_52 = arith.constant 0 : index
    %133 = vector.load %arg11[%c24, %c0_52] : memref<64x32xf32, #tpu.memory_space<vmem>>, vector<8x32xf32>
    tpu.vector_store %arg11[%c24, %c0_52], %132 {strides = array<i32>} : memref<64x32xf32, #tpu.memory_space<vmem>>, vector<8x32xf32>,
    %c4 = arith.constant 4 : index
    %c0_53 = arith.constant 0 : index
    %c0_54 = arith.constant 0 : index
    %134 = vector.load %arg2[%c4, %c0_53, %c0_54] : memref<8x8x2xf32, #tpu.memory_space<vmem>>, vector<1x8x2xf32>
    %135 = vector.shape_cast %134 : vector<1x8x2xf32> to vector<8x2xf32>
    %c4_55 = arith.constant 4 : index
    %c0_56 = arith.constant 0 : index
    %c0_57 = arith.constant 0 : index
    %136 = vector.load %arg3[%c4_55, %c0_56, %c0_57] : memref<8x2x8xf32, #tpu.memory_space<vmem>>, vector<1x2x8xf32>
    %137 = vector.shape_cast %136 : vector<1x2x8xf32> to vector<2x8xf32>
    %138 = vector.extract_strided_slice %135 {offsets = [0, 0], sizes = [8, 1], strides = [1, 1]} : vector<8x2xf32> to vector<8x1xf32>
    %139 = vector.extract_strided_slice %137 {offsets = [0, 0], sizes = [1, 8], strides = [1, 1]} : vector<2x8xf32> to vector<1x8xf32>
    %140 = vector.broadcast %138 : vector<8x1xf32> to vector<8x8xf32>
    %141 = vector.broadcast %139 : vector<1x8xf32> to vector<8x8xf32>
    %142 = arith.subf %140, %141 : vector<8x8xf32>
    %143 = vector.extract_strided_slice %135 {offsets = [0, 1], sizes = [8, 1], strides = [1, 1]} : vector<8x2xf32> to vector<8x1xf32>
    %144 = vector.extract_strided_slice %137 {offsets = [1, 0], sizes = [1, 8], strides = [1, 1]} : vector<2x8xf32> to vector<1x8xf32>
    %145 = vector.broadcast %143 : vector<8x1xf32> to vector<8x8xf32>
    %146 = vector.broadcast %144 : vector<1x8xf32> to vector<8x8xf32>
    %147 = arith.subf %145, %146 : vector<8x8xf32>
    %148 = arith.mulf %142, %142 : vector<8x8xf32>
    %149 = arith.mulf %147, %147 : vector<8x8xf32>
    %150 = arith.addf %148, %149 : vector<8x8xf32>
    %cst_58 = arith.constant 5.000000e-01 : f32
    %151 = vector.broadcast %cst_58 : f32 to vector<8x8xf32>
    %152 = arith.mulf %151, %150 : vector<8x8xf32>
    %cst_59 = arith.constant 1.000000e+00 : f32
    %153 = vector.broadcast %cst_59 : f32 to vector<8x8xf32>
    %154 = arith.addf %153, %152 : vector<8x8xf32>
    %155 = tpu.reciprocal %154 {approx = true} : vector<8x8xf32> -> vector<8x8xf32>
    %156 = arith.truncf %155 : vector<8x8xf32> to vector<8x8xbf16>
    %157 = vector.extract_strided_slice %9 {offsets = [32, 0], sizes = [8, 32], strides = [1, 1]} : vector<64x32xf32> to vector<8x32xf32>
    %158 = arith.truncf %157 : vector<8x32xf32> to vector<8x32xbf16>
    %cst_60 = arith.constant dense<0.000000e+00> : vector<8x32xf32>
    %159 = tpu.matmul %156, %158, %cst_60 {dimension_numbers = #tpu.dot_dimension_numbers<[1], [0], [0], [1], [0, 0, 1, 1], [], []>} : vector<8x8xbf16>, vector<8x32xbf16>, vector<8x32xf32> -> vector<8x32xf32>
    %160 = vector.broadcast %1 : vector<1x32xf32> to vector<8x32xf32>
    %161 = arith.addf %159, %160 : vector<8x32xf32>
    %cst_61 = arith.constant 0.000000e+00 : f32
    %162 = vector.broadcast %cst_61 : f32 to vector<8x32xf32>
    %163 = arith.maximumf %161, %162 : vector<8x32xf32>
    %c32 = arith.constant 32 : index
    %c0_62 = arith.constant 0 : index
    %164 = vector.load %arg11[%c32, %c0_62] : memref<64x32xf32, #tpu.memory_space<vmem>>, vector<8x32xf32>
    tpu.vector_store %arg11[%c32, %c0_62], %163 {strides = array<i32>} : memref<64x32xf32, #tpu.memory_space<vmem>>, vector<8x32xf32>,
    %c5 = arith.constant 5 : index
    %c0_63 = arith.constant 0 : index
    %c0_64 = arith.constant 0 : index
    %165 = vector.load %arg2[%c5, %c0_63, %c0_64] : memref<8x8x2xf32, #tpu.memory_space<vmem>>, vector<1x8x2xf32>
    %166 = vector.shape_cast %165 : vector<1x8x2xf32> to vector<8x2xf32>
    %c5_65 = arith.constant 5 : index
    %c0_66 = arith.constant 0 : index
    %c0_67 = arith.constant 0 : index
    %167 = vector.load %arg3[%c5_65, %c0_66, %c0_67] : memref<8x2x8xf32, #tpu.memory_space<vmem>>, vector<1x2x8xf32>
    %168 = vector.shape_cast %167 : vector<1x2x8xf32> to vector<2x8xf32>
    %169 = vector.extract_strided_slice %166 {offsets = [0, 0], sizes = [8, 1], strides = [1, 1]} : vector<8x2xf32> to vector<8x1xf32>
    %170 = vector.extract_strided_slice %168 {offsets = [0, 0], sizes = [1, 8], strides = [1, 1]} : vector<2x8xf32> to vector<1x8xf32>
    %171 = vector.broadcast %169 : vector<8x1xf32> to vector<8x8xf32>
    %172 = vector.broadcast %170 : vector<1x8xf32> to vector<8x8xf32>
    %173 = arith.subf %171, %172 : vector<8x8xf32>
    %174 = vector.extract_strided_slice %166 {offsets = [0, 1], sizes = [8, 1], strides = [1, 1]} : vector<8x2xf32> to vector<8x1xf32>
    %175 = vector.extract_strided_slice %168 {offsets = [1, 0], sizes = [1, 8], strides = [1, 1]} : vector<2x8xf32> to vector<1x8xf32>
    %176 = vector.broadcast %174 : vector<8x1xf32> to vector<8x8xf32>
    %177 = vector.broadcast %175 : vector<1x8xf32> to vector<8x8xf32>
    %178 = arith.subf %176, %177 : vector<8x8xf32>
    %179 = arith.mulf %173, %173 : vector<8x8xf32>
    %180 = arith.mulf %178, %178 : vector<8x8xf32>
    %181 = arith.addf %179, %180 : vector<8x8xf32>
    %cst_68 = arith.constant 5.000000e-01 : f32
    %182 = vector.broadcast %cst_68 : f32 to vector<8x8xf32>
    %183 = arith.mulf %182, %181 : vector<8x8xf32>
    %cst_69 = arith.constant 1.000000e+00 : f32
    %184 = vector.broadcast %cst_69 : f32 to vector<8x8xf32>
    %185 = arith.addf %184, %183 : vector<8x8xf32>
    %186 = tpu.reciprocal %185 {approx = true} : vector<8x8xf32> -> vector<8x8xf32>
    %187 = arith.truncf %186 : vector<8x8xf32> to vector<8x8xbf16>
    %188 = vector.extract_strided_slice %9 {offsets = [40, 0], sizes = [8, 32], strides = [1, 1]} : vector<64x32xf32> to vector<8x32xf32>
    %189 = arith.truncf %188 : vector<8x32xf32> to vector<8x32xbf16>
    %cst_70 = arith.constant dense<0.000000e+00> : vector<8x32xf32>
    %190 = tpu.matmul %187, %189, %cst_70 {dimension_numbers = #tpu.dot_dimension_numbers<[1], [0], [0], [1], [0, 0, 1, 1], [], []>} : vector<8x8xbf16>, vector<8x32xbf16>, vector<8x32xf32> -> vector<8x32xf32>
    %191 = vector.broadcast %1 : vector<1x32xf32> to vector<8x32xf32>
    %192 = arith.addf %190, %191 : vector<8x32xf32>
    %cst_71 = arith.constant 0.000000e+00 : f32
    %193 = vector.broadcast %cst_71 : f32 to vector<8x32xf32>
    %194 = arith.maximumf %192, %193 : vector<8x32xf32>
    %c40 = arith.constant 40 : index
    %c0_72 = arith.constant 0 : index
    %195 = vector.load %arg11[%c40, %c0_72] : memref<64x32xf32, #tpu.memory_space<vmem>>, vector<8x32xf32>
    tpu.vector_store %arg11[%c40, %c0_72], %194 {strides = array<i32>} : memref<64x32xf32, #tpu.memory_space<vmem>>, vector<8x32xf32>,
    %c6 = arith.constant 6 : index
    %c0_73 = arith.constant 0 : index
    %c0_74 = arith.constant 0 : index
    %196 = vector.load %arg2[%c6, %c0_73, %c0_74] : memref<8x8x2xf32, #tpu.memory_space<vmem>>, vector<1x8x2xf32>
    %197 = vector.shape_cast %196 : vector<1x8x2xf32> to vector<8x2xf32>
    %c6_75 = arith.constant 6 : index
    %c0_76 = arith.constant 0 : index
    %c0_77 = arith.constant 0 : index
    %198 = vector.load %arg3[%c6_75, %c0_76, %c0_77] : memref<8x2x8xf32, #tpu.memory_space<vmem>>, vector<1x2x8xf32>
    %199 = vector.shape_cast %198 : vector<1x2x8xf32> to vector<2x8xf32>
    %200 = vector.extract_strided_slice %197 {offsets = [0, 0], sizes = [8, 1], strides = [1, 1]} : vector<8x2xf32> to vector<8x1xf32>
    %201 = vector.extract_strided_slice %199 {offsets = [0, 0], sizes = [1, 8], strides = [1, 1]} : vector<2x8xf32> to vector<1x8xf32>
    %202 = vector.broadcast %200 : vector<8x1xf32> to vector<8x8xf32>
    %203 = vector.broadcast %201 : vector<1x8xf32> to vector<8x8xf32>
    %204 = arith.subf %202, %203 : vector<8x8xf32>
    %205 = vector.extract_strided_slice %197 {offsets = [0, 1], sizes = [8, 1], strides = [1, 1]} : vector<8x2xf32> to vector<8x1xf32>
    %206 = vector.extract_strided_slice %199 {offsets = [1, 0], sizes = [1, 8], strides = [1, 1]} : vector<2x8xf32> to vector<1x8xf32>
    %207 = vector.broadcast %205 : vector<8x1xf32> to vector<8x8xf32>
    %208 = vector.broadcast %206 : vector<1x8xf32> to vector<8x8xf32>
    %209 = arith.subf %207, %208 : vector<8x8xf32>
    %210 = arith.mulf %204, %204 : vector<8x8xf32>
    %211 = arith.mulf %209, %209 : vector<8x8xf32>
    %212 = arith.addf %210, %211 : vector<8x8xf32>
    %cst_78 = arith.constant 5.000000e-01 : f32
    %213 = vector.broadcast %cst_78 : f32 to vector<8x8xf32>
    %214 = arith.mulf %213, %212 : vector<8x8xf32>
    %cst_79 = arith.constant 1.000000e+00 : f32
    %215 = vector.broadcast %cst_79 : f32 to vector<8x8xf32>
    %216 = arith.addf %215, %214 : vector<8x8xf32>
    %217 = tpu.reciprocal %216 {approx = true} : vector<8x8xf32> -> vector<8x8xf32>
    %218 = arith.truncf %217 : vector<8x8xf32> to vector<8x8xbf16>
    %219 = vector.extract_strided_slice %9 {offsets = [48, 0], sizes = [8, 32], strides = [1, 1]} : vector<64x32xf32> to vector<8x32xf32>
    %220 = arith.truncf %219 : vector<8x32xf32> to vector<8x32xbf16>
    %cst_80 = arith.constant dense<0.000000e+00> : vector<8x32xf32>
    %221 = tpu.matmul %218, %220, %cst_80 {dimension_numbers = #tpu.dot_dimension_numbers<[1], [0], [0], [1], [0, 0, 1, 1], [], []>} : vector<8x8xbf16>, vector<8x32xbf16>, vector<8x32xf32> -> vector<8x32xf32>
    %222 = vector.broadcast %1 : vector<1x32xf32> to vector<8x32xf32>
    %223 = arith.addf %221, %222 : vector<8x32xf32>
    %cst_81 = arith.constant 0.000000e+00 : f32
    %224 = vector.broadcast %cst_81 : f32 to vector<8x32xf32>
    %225 = arith.maximumf %223, %224 : vector<8x32xf32>
    %c48 = arith.constant 48 : index
    %c0_82 = arith.constant 0 : index
    %226 = vector.load %arg11[%c48, %c0_82] : memref<64x32xf32, #tpu.memory_space<vmem>>, vector<8x32xf32>
    tpu.vector_store %arg11[%c48, %c0_82], %225 {strides = array<i32>} : memref<64x32xf32, #tpu.memory_space<vmem>>, vector<8x32xf32>,
    %c7 = arith.constant 7 : index
    %c0_83 = arith.constant 0 : index
    %c0_84 = arith.constant 0 : index
    %227 = vector.load %arg2[%c7, %c0_83, %c0_84] : memref<8x8x2xf32, #tpu.memory_space<vmem>>, vector<1x8x2xf32>
    %228 = vector.shape_cast %227 : vector<1x8x2xf32> to vector<8x2xf32>
    %c7_85 = arith.constant 7 : index
    %c0_86 = arith.constant 0 : index
    %c0_87 = arith.constant 0 : index
    %229 = vector.load %arg3[%c7_85, %c0_86, %c0_87] : memref<8x2x8xf32, #tpu.memory_space<vmem>>, vector<1x2x8xf32>
    %230 = vector.shape_cast %229 : vector<1x2x8xf32> to vector<2x8xf32>
    %231 = vector.extract_strided_slice %228 {offsets = [0, 0], sizes = [8, 1], strides = [1, 1]} : vector<8x2xf32> to vector<8x1xf32>
    %232 = vector.extract_strided_slice %230 {offsets = [0, 0], sizes = [1, 8], strides = [1, 1]} : vector<2x8xf32> to vector<1x8xf32>
    %233 = vector.broadcast %231 : vector<8x1xf32> to vector<8x8xf32>
    %234 = vector.broadcast %232 : vector<1x8xf32> to vector<8x8xf32>
    %235 = arith.subf %233, %234 : vector<8x8xf32>
    %236 = vector.extract_strided_slice %228 {offsets = [0, 1], sizes = [8, 1], strides = [1, 1]} : vector<8x2xf32> to vector<8x1xf32>
    %237 = vector.extract_strided_slice %230 {offsets = [1, 0], sizes = [1, 8], strides = [1, 1]} : vector<2x8xf32> to vector<1x8xf32>
    %238 = vector.broadcast %236 : vector<8x1xf32> to vector<8x8xf32>
    %239 = vector.broadcast %237 : vector<1x8xf32> to vector<8x8xf32>
    %240 = arith.subf %238, %239 : vector<8x8xf32>
    %241 = arith.mulf %235, %235 : vector<8x8xf32>
    %242 = arith.mulf %240, %240 : vector<8x8xf32>
    %243 = arith.addf %241, %242 : vector<8x8xf32>
    %cst_88 = arith.constant 5.000000e-01 : f32
    %244 = vector.broadcast %cst_88 : f32 to vector<8x8xf32>
    %245 = arith.mulf %244, %243 : vector<8x8xf32>
    %cst_89 = arith.constant 1.000000e+00 : f32
    %246 = vector.broadcast %cst_89 : f32 to vector<8x8xf32>
    %247 = arith.addf %246, %245 : vector<8x8xf32>
    %248 = tpu.reciprocal %247 {approx = true} : vector<8x8xf32> -> vector<8x8xf32>
    %249 = arith.truncf %248 : vector<8x8xf32> to vector<8x8xbf16>
    %250 = vector.extract_strided_slice %9 {offsets = [56, 0], sizes = [8, 32], strides = [1, 1]} : vector<64x32xf32> to vector<8x32xf32>
    %251 = arith.truncf %250 : vector<8x32xf32> to vector<8x32xbf16>
    %cst_90 = arith.constant dense<0.000000e+00> : vector<8x32xf32>
    %252 = tpu.matmul %249, %251, %cst_90 {dimension_numbers = #tpu.dot_dimension_numbers<[1], [0], [0], [1], [0, 0, 1, 1], [], []>} : vector<8x8xbf16>, vector<8x32xbf16>, vector<8x32xf32> -> vector<8x32xf32>
    %253 = vector.broadcast %1 : vector<1x32xf32> to vector<8x32xf32>
    %254 = arith.addf %252, %253 : vector<8x32xf32>
    %cst_91 = arith.constant 0.000000e+00 : f32
    %255 = vector.broadcast %cst_91 : f32 to vector<8x32xf32>
    %256 = arith.maximumf %254, %255 : vector<8x32xf32>
    %c56 = arith.constant 56 : index
    %c0_92 = arith.constant 0 : index
    %257 = vector.load %arg11[%c56, %c0_92] : memref<64x32xf32, #tpu.memory_space<vmem>>, vector<8x32xf32>
    tpu.vector_store %arg11[%c56, %c0_92], %256 {strides = array<i32>} : memref<64x32xf32, #tpu.memory_space<vmem>>, vector<8x32xf32>,
    %c0_93 = arith.constant 0 : index
    %c0_94 = arith.constant 0 : index
    %258 = vector.load %arg11[%c0_93, %c0_94] : memref<64x32xf32, #tpu.memory_space<vmem>>, vector<64x32xf32>
    %259 = arith.truncf %258 : vector<64x32xf32> to vector<64x32xbf16>
    %c0_95 = arith.constant 0 : index
    %c0_96 = arith.constant 0 : index
    %260 = vector.load %arg6[%c0_95, %c0_96] : memref<32x32xbf16, #tpu.memory_space<vmem>>, vector<32x32xbf16>
    %cst_97 = arith.constant dense<0.000000e+00> : vector<64x32xf32>
    %261 = tpu.matmul %259, %260, %cst_97 {dimension_numbers = #tpu.dot_dimension_numbers<[1], [0], [0], [1], [0, 0, 1, 1], [], []>} : vector<64x32xbf16>, vector<32x32xbf16>, vector<64x32xf32> -> vector<64x32xf32>
    %262 = vector.extract_strided_slice %261 {offsets = [0, 0], sizes = [8, 32], strides = [1, 1]} : vector<64x32xf32> to vector<8x32xf32>
    %263 = arith.truncf %262 : vector<8x32xf32> to vector<8x32xbf16>
    %cst_98 = arith.constant dense<0.000000e+00> : vector<8x32xf32>
    %264 = tpu.matmul %32, %263, %cst_98 {dimension_numbers = #tpu.dot_dimension_numbers<[1], [0], [0], [1], [0, 0, 1, 1], [], []>} : vector<8x8xbf16>, vector<8x32xbf16>, vector<8x32xf32> -> vector<8x32xf32>
    %265 = vector.broadcast %2 : vector<1x32xf32> to vector<8x32xf32>
    %266 = arith.addf %264, %265 : vector<8x32xf32>
    %cst_99 = arith.constant 0.000000e+00 : f32
    %267 = vector.broadcast %cst_99 : f32 to vector<8x32xf32>
    %268 = arith.maximumf %266, %267 : vector<8x32xf32>
    %c0_100 = arith.constant 0 : index
    %c0_101 = arith.constant 0 : index
    %269 = vector.load %arg11[%c0_100, %c0_101] : memref<64x32xf32, #tpu.memory_space<vmem>>, vector<8x32xf32>
    %270 = arith.truncf %269 : vector<8x32xf32> to vector<8x32xbf16>
    %cst_102 = arith.constant dense<0.000000e+00> : vector<16x32xf32>
    %271 = tpu.matmul %4, %270, %cst_102 {dimension_numbers = #tpu.dot_dimension_numbers<[1], [0], [0], [1], [0, 0, 1, 1], [], []>} : vector<16x8xbf16>, vector<8x32xbf16>, vector<16x32xf32> -> vector<16x32xf32>
    %272 = arith.truncf %268 : vector<8x32xf32> to vector<8x32xbf16>
    %cst_103 = arith.constant dense<0.000000e+00> : vector<16x32xf32>
    %273 = tpu.matmul %6, %272, %cst_103 {dimension_numbers = #tpu.dot_dimension_numbers<[1], [0], [0], [1], [0, 0, 1, 1], [], []>} : vector<16x8xbf16>, vector<8x32xbf16>, vector<16x32xf32> -> vector<16x32xf32>
    %cst_104 = arith.constant dense<0xFF800000> : vector<32xf32>
    %274 = vector.multi_reduction <maximumf>, %271, %cst_104 [0] : vector<16x32xf32> to vector<32xf32>
    %275 = vector.shape_cast %274 : vector<32xf32> to vector<1x32xf32>
    %276 = vector.broadcast %275 : vector<1x32xf32> to vector<16x32xf32>
    %277 = arith.subf %271, %276 : vector<16x32xf32>
    %278 = math.exp %277 : vector<16x32xf32>
    %cst_105 = arith.constant dense<0.000000e+00> : vector<32xf32>
    %279 = vector.multi_reduction <add>, %278, %cst_105 [0] : vector<16x32xf32> to vector<32xf32>
    %280 = vector.shape_cast %279 : vector<32xf32> to vector<1x32xf32>
    %281 = tpu.reciprocal %280 {approx = true} : vector<1x32xf32> -> vector<1x32xf32>
    %282 = vector.broadcast %281 : vector<1x32xf32> to vector<16x32xf32>
    %283 = arith.mulf %278, %282 : vector<16x32xf32>
    %cst_106 = arith.constant dense<0xFF800000> : vector<32xf32>
    %284 = vector.multi_reduction <maximumf>, %273, %cst_106 [0] : vector<16x32xf32> to vector<32xf32>
    %285 = vector.shape_cast %284 : vector<32xf32> to vector<1x32xf32>
    %286 = vector.broadcast %285 : vector<1x32xf32> to vector<16x32xf32>
    %287 = arith.subf %273, %286 : vector<16x32xf32>
    %288 = math.exp %287 : vector<16x32xf32>
    %cst_107 = arith.constant dense<0.000000e+00> : vector<32xf32>
    %289 = vector.multi_reduction <add>, %288, %cst_107 [0] : vector<16x32xf32> to vector<32xf32>
    %290 = vector.shape_cast %289 : vector<32xf32> to vector<1x32xf32>
    %291 = tpu.reciprocal %290 {approx = true} : vector<1x32xf32> -> vector<1x32xf32>
    %292 = vector.broadcast %291 : vector<1x32xf32> to vector<16x32xf32>
    %293 = arith.mulf %288, %292 : vector<16x32xf32>
    %294 = arith.addf %283, %293 : vector<16x32xf32>
    %cst_108 = arith.constant dense<0.000000e+00> : vector<16xf32>
    %295 = vector.multi_reduction <add>, %294, %cst_108 [1] : vector<16x32xf32> to vector<16xf32>
    %296 = vector.shape_cast %295 : vector<16xf32> to vector<16x1xf32>
    %c0_109 = arith.constant 0 : index
    %c0_110 = arith.constant 0 : index
    %297 = vector.load %arg12[%c0_109, %c0_110] : memref<16x8xf32, #tpu.memory_space<vmem>>, vector<16x1xf32>
    tpu.vector_store %arg12[%c0_109, %c0_110], %296 {strides = array<i32>} : memref<16x8xf32, #tpu.memory_space<vmem>>, vector<16x1xf32>,
    %298 = vector.extract_strided_slice %261 {offsets = [8, 0], sizes = [8, 32], strides = [1, 1]} : vector<64x32xf32> to vector<8x32xf32>
    %299 = arith.truncf %298 : vector<8x32xf32> to vector<8x32xbf16>
    %cst_111 = arith.constant dense<0.000000e+00> : vector<8x32xf32>
    %300 = tpu.matmul %63, %299, %cst_111 {dimension_numbers = #tpu.dot_dimension_numbers<[1], [0], [0], [1], [0, 0, 1, 1], [], []>} : vector<8x8xbf16>, vector<8x32xbf16>, vector<8x32xf32> -> vector<8x32xf32>
    %301 = vector.broadcast %2 : vector<1x32xf32> to vector<8x32xf32>
    %302 = arith.addf %300, %301 : vector<8x32xf32>
    %cst_112 = arith.constant 0.000000e+00 : f32
    %303 = vector.broadcast %cst_112 : f32 to vector<8x32xf32>
    %304 = arith.maximumf %302, %303 : vector<8x32xf32>
    %c8_113 = arith.constant 8 : index
    %c0_114 = arith.constant 0 : index
    %305 = vector.load %arg11[%c8_113, %c0_114] : memref<64x32xf32, #tpu.memory_space<vmem>>, vector<8x32xf32>
    %306 = arith.truncf %305 : vector<8x32xf32> to vector<8x32xbf16>
    %cst_115 = arith.constant dense<0.000000e+00> : vector<16x32xf32>
    %307 = tpu.matmul %4, %306, %cst_115 {dimension_numbers = #tpu.dot_dimension_numbers<[1], [0], [0], [1], [0, 0, 1, 1], [], []>} : vector<16x8xbf16>, vector<8x32xbf16>, vector<16x32xf32> -> vector<16x32xf32>
    %308 = arith.truncf %304 : vector<8x32xf32> to vector<8x32xbf16>
    %cst_116 = arith.constant dense<0.000000e+00> : vector<16x32xf32>
    %309 = tpu.matmul %6, %308, %cst_116 {dimension_numbers = #tpu.dot_dimension_numbers<[1], [0], [0], [1], [0, 0, 1, 1], [], []>} : vector<16x8xbf16>, vector<8x32xbf16>, vector<16x32xf32> -> vector<16x32xf32>
    %cst_117 = arith.constant dense<0xFF800000> : vector<32xf32>
    %310 = vector.multi_reduction <maximumf>, %307, %cst_117 [0] : vector<16x32xf32> to vector<32xf32>
    %311 = vector.shape_cast %310 : vector<32xf32> to vector<1x32xf32>
    %312 = vector.broadcast %311 : vector<1x32xf32> to vector<16x32xf32>
    %313 = arith.subf %307, %312 : vector<16x32xf32>
    %314 = math.exp %313 : vector<16x32xf32>
    %cst_118 = arith.constant dense<0.000000e+00> : vector<32xf32>
    %315 = vector.multi_reduction <add>, %314, %cst_118 [0] : vector<16x32xf32> to vector<32xf32>
    %316 = vector.shape_cast %315 : vector<32xf32> to vector<1x32xf32>
    %317 = tpu.reciprocal %316 {approx = true} : vector<1x32xf32> -> vector<1x32xf32>
    %318 = vector.broadcast %317 : vector<1x32xf32> to vector<16x32xf32>
    %319 = arith.mulf %314, %318 : vector<16x32xf32>
    %cst_119 = arith.constant dense<0xFF800000> : vector<32xf32>
    %320 = vector.multi_reduction <maximumf>, %309, %cst_119 [0] : vector<16x32xf32> to vector<32xf32>
    %321 = vector.shape_cast %320 : vector<32xf32> to vector<1x32xf32>
    %322 = vector.broadcast %321 : vector<1x32xf32> to vector<16x32xf32>
    %323 = arith.subf %309, %322 : vector<16x32xf32>
    %324 = math.exp %323 : vector<16x32xf32>
    %cst_120 = arith.constant dense<0.000000e+00> : vector<32xf32>
    %325 = vector.multi_reduction <add>, %324, %cst_120 [0] : vector<16x32xf32> to vector<32xf32>
    %326 = vector.shape_cast %325 : vector<32xf32> to vector<1x32xf32>
    %327 = tpu.reciprocal %326 {approx = true} : vector<1x32xf32> -> vector<1x32xf32>
    %328 = vector.broadcast %327 : vector<1x32xf32> to vector<16x32xf32>
    %329 = arith.mulf %324, %328 : vector<16x32xf32>
    %330 = arith.addf %319, %329 : vector<16x32xf32>
    %cst_121 = arith.constant dense<0.000000e+00> : vector<16xf32>
    %331 = vector.multi_reduction <add>, %330, %cst_121 [1] : vector<16x32xf32> to vector<16xf32>
    %332 = vector.shape_cast %331 : vector<16xf32> to vector<16x1xf32>
    %c0_122 = arith.constant 0 : index
    %c1_123 = arith.constant 1 : index
    %333 = vector.load %arg12[%c0_122, %c1_123] : memref<16x8xf32, #tpu.memory_space<vmem>>, vector<16x1xf32>
    tpu.vector_store %arg12[%c0_122, %c1_123], %332 {strides = array<i32>} : memref<16x8xf32, #tpu.memory_space<vmem>>, vector<16x1xf32>,
    %334 = vector.extract_strided_slice %261 {offsets = [16, 0], sizes = [8, 32], strides = [1, 1]} : vector<64x32xf32> to vector<8x32xf32>
    %335 = arith.truncf %334 : vector<8x32xf32> to vector<8x32xbf16>
    %cst_124 = arith.constant dense<0.000000e+00> : vector<8x32xf32>
    %336 = tpu.matmul %94, %335, %cst_124 {dimension_numbers = #tpu.dot_dimension_numbers<[1], [0], [0], [1], [0, 0, 1, 1], [], []>} : vector<8x8xbf16>, vector<8x32xbf16>, vector<8x32xf32> -> vector<8x32xf32>
    %337 = vector.broadcast %2 : vector<1x32xf32> to vector<8x32xf32>
    %338 = arith.addf %336, %337 : vector<8x32xf32>
    %cst_125 = arith.constant 0.000000e+00 : f32
    %339 = vector.broadcast %cst_125 : f32 to vector<8x32xf32>
    %340 = arith.maximumf %338, %339 : vector<8x32xf32>
    %c16_126 = arith.constant 16 : index
    %c0_127 = arith.constant 0 : index
    %341 = vector.load %arg11[%c16_126, %c0_127] : memref<64x32xf32, #tpu.memory_space<vmem>>, vector<8x32xf32>
    %342 = arith.truncf %341 : vector<8x32xf32> to vector<8x32xbf16>
    %cst_128 = arith.constant dense<0.000000e+00> : vector<16x32xf32>
    %343 = tpu.matmul %4, %342, %cst_128 {dimension_numbers = #tpu.dot_dimension_numbers<[1], [0], [0], [1], [0, 0, 1, 1], [], []>} : vector<16x8xbf16>, vector<8x32xbf16>, vector<16x32xf32> -> vector<16x32xf32>
    %344 = arith.truncf %340 : vector<8x32xf32> to vector<8x32xbf16>
    %cst_129 = arith.constant dense<0.000000e+00> : vector<16x32xf32>
    %345 = tpu.matmul %6, %344, %cst_129 {dimension_numbers = #tpu.dot_dimension_numbers<[1], [0], [0], [1], [0, 0, 1, 1], [], []>} : vector<16x8xbf16>, vector<8x32xbf16>, vector<16x32xf32> -> vector<16x32xf32>
    %cst_130 = arith.constant dense<0xFF800000> : vector<32xf32>
    %346 = vector.multi_reduction <maximumf>, %343, %cst_130 [0] : vector<16x32xf32> to vector<32xf32>
    %347 = vector.shape_cast %346 : vector<32xf32> to vector<1x32xf32>
    %348 = vector.broadcast %347 : vector<1x32xf32> to vector<16x32xf32>
    %349 = arith.subf %343, %348 : vector<16x32xf32>
    %350 = math.exp %349 : vector<16x32xf32>
    %cst_131 = arith.constant dense<0.000000e+00> : vector<32xf32>
    %351 = vector.multi_reduction <add>, %350, %cst_131 [0] : vector<16x32xf32> to vector<32xf32>
    %352 = vector.shape_cast %351 : vector<32xf32> to vector<1x32xf32>
    %353 = tpu.reciprocal %352 {approx = true} : vector<1x32xf32> -> vector<1x32xf32>
    %354 = vector.broadcast %353 : vector<1x32xf32> to vector<16x32xf32>
    %355 = arith.mulf %350, %354 : vector<16x32xf32>
    %cst_132 = arith.constant dense<0xFF800000> : vector<32xf32>
    %356 = vector.multi_reduction <maximumf>, %345, %cst_132 [0] : vector<16x32xf32> to vector<32xf32>
    %357 = vector.shape_cast %356 : vector<32xf32> to vector<1x32xf32>
    %358 = vector.broadcast %357 : vector<1x32xf32> to vector<16x32xf32>
    %359 = arith.subf %345, %358 : vector<16x32xf32>
    %360 = math.exp %359 : vector<16x32xf32>
    %cst_133 = arith.constant dense<0.000000e+00> : vector<32xf32>
    %361 = vector.multi_reduction <add>, %360, %cst_133 [0] : vector<16x32xf32> to vector<32xf32>
    %362 = vector.shape_cast %361 : vector<32xf32> to vector<1x32xf32>
    %363 = tpu.reciprocal %362 {approx = true} : vector<1x32xf32> -> vector<1x32xf32>
    %364 = vector.broadcast %363 : vector<1x32xf32> to vector<16x32xf32>
    %365 = arith.mulf %360, %364 : vector<16x32xf32>
    %366 = arith.addf %355, %365 : vector<16x32xf32>
    %cst_134 = arith.constant dense<0.000000e+00> : vector<16xf32>
    %367 = vector.multi_reduction <add>, %366, %cst_134 [1] : vector<16x32xf32> to vector<16xf32>
    %368 = vector.shape_cast %367 : vector<16xf32> to vector<16x1xf32>
    %c0_135 = arith.constant 0 : index
    %c2_136 = arith.constant 2 : index
    %369 = vector.load %arg12[%c0_135, %c2_136] : memref<16x8xf32, #tpu.memory_space<vmem>>, vector<16x1xf32>
    tpu.vector_store %arg12[%c0_135, %c2_136], %368 {strides = array<i32>} : memref<16x8xf32, #tpu.memory_space<vmem>>, vector<16x1xf32>,
    %370 = vector.extract_strided_slice %261 {offsets = [24, 0], sizes = [8, 32], strides = [1, 1]} : vector<64x32xf32> to vector<8x32xf32>
    %371 = arith.truncf %370 : vector<8x32xf32> to vector<8x32xbf16>
    %cst_137 = arith.constant dense<0.000000e+00> : vector<8x32xf32>
    %372 = tpu.matmul %125, %371, %cst_137 {dimension_numbers = #tpu.dot_dimension_numbers<[1], [0], [0], [1], [0, 0, 1, 1], [], []>} : vector<8x8xbf16>, vector<8x32xbf16>, vector<8x32xf32> -> vector<8x32xf32>
    %373 = vector.broadcast %2 : vector<1x32xf32> to vector<8x32xf32>
    %374 = arith.addf %372, %373 : vector<8x32xf32>
    %cst_138 = arith.constant 0.000000e+00 : f32
    %375 = vector.broadcast %cst_138 : f32 to vector<8x32xf32>
    %376 = arith.maximumf %374, %375 : vector<8x32xf32>
    %c24_139 = arith.constant 24 : index
    %c0_140 = arith.constant 0 : index
    %377 = vector.load %arg11[%c24_139, %c0_140] : memref<64x32xf32, #tpu.memory_space<vmem>>, vector<8x32xf32>
    %378 = arith.truncf %377 : vector<8x32xf32> to vector<8x32xbf16>
    %cst_141 = arith.constant dense<0.000000e+00> : vector<16x32xf32>
    %379 = tpu.matmul %4, %378, %cst_141 {dimension_numbers = #tpu.dot_dimension_numbers<[1], [0], [0], [1], [0, 0, 1, 1], [], []>} : vector<16x8xbf16>, vector<8x32xbf16>, vector<16x32xf32> -> vector<16x32xf32>
    %380 = arith.truncf %376 : vector<8x32xf32> to vector<8x32xbf16>
    %cst_142 = arith.constant dense<0.000000e+00> : vector<16x32xf32>
    %381 = tpu.matmul %6, %380, %cst_142 {dimension_numbers = #tpu.dot_dimension_numbers<[1], [0], [0], [1], [0, 0, 1, 1], [], []>} : vector<16x8xbf16>, vector<8x32xbf16>, vector<16x32xf32> -> vector<16x32xf32>
    %cst_143 = arith.constant dense<0xFF800000> : vector<32xf32>
    %382 = vector.multi_reduction <maximumf>, %379, %cst_143 [0] : vector<16x32xf32> to vector<32xf32>
    %383 = vector.shape_cast %382 : vector<32xf32> to vector<1x32xf32>
    %384 = vector.broadcast %383 : vector<1x32xf32> to vector<16x32xf32>
    %385 = arith.subf %379, %384 : vector<16x32xf32>
    %386 = math.exp %385 : vector<16x32xf32>
    %cst_144 = arith.constant dense<0.000000e+00> : vector<32xf32>
    %387 = vector.multi_reduction <add>, %386, %cst_144 [0] : vector<16x32xf32> to vector<32xf32>
    %388 = vector.shape_cast %387 : vector<32xf32> to vector<1x32xf32>
    %389 = tpu.reciprocal %388 {approx = true} : vector<1x32xf32> -> vector<1x32xf32>
    %390 = vector.broadcast %389 : vector<1x32xf32> to vector<16x32xf32>
    %391 = arith.mulf %386, %390 : vector<16x32xf32>
    %cst_145 = arith.constant dense<0xFF800000> : vector<32xf32>
    %392 = vector.multi_reduction <maximumf>, %381, %cst_145 [0] : vector<16x32xf32> to vector<32xf32>
    %393 = vector.shape_cast %392 : vector<32xf32> to vector<1x32xf32>
    %394 = vector.broadcast %393 : vector<1x32xf32> to vector<16x32xf32>
    %395 = arith.subf %381, %394 : vector<16x32xf32>
    %396 = math.exp %395 : vector<16x32xf32>
    %cst_146 = arith.constant dense<0.000000e+00> : vector<32xf32>
    %397 = vector.multi_reduction <add>, %396, %cst_146 [0] : vector<16x32xf32> to vector<32xf32>
    %398 = vector.shape_cast %397 : vector<32xf32> to vector<1x32xf32>
    %399 = tpu.reciprocal %398 {approx = true} : vector<1x32xf32> -> vector<1x32xf32>
    %400 = vector.broadcast %399 : vector<1x32xf32> to vector<16x32xf32>
    %401 = arith.mulf %396, %400 : vector<16x32xf32>
    %402 = arith.addf %391, %401 : vector<16x32xf32>
    %cst_147 = arith.constant dense<0.000000e+00> : vector<16xf32>
    %403 = vector.multi_reduction <add>, %402, %cst_147 [1] : vector<16x32xf32> to vector<16xf32>
    %404 = vector.shape_cast %403 : vector<16xf32> to vector<16x1xf32>
    %c0_148 = arith.constant 0 : index
    %c3_149 = arith.constant 3 : index
    %405 = vector.load %arg12[%c0_148, %c3_149] : memref<16x8xf32, #tpu.memory_space<vmem>>, vector<16x1xf32>
    tpu.vector_store %arg12[%c0_148, %c3_149], %404 {strides = array<i32>} : memref<16x8xf32, #tpu.memory_space<vmem>>, vector<16x1xf32>,
    %406 = vector.extract_strided_slice %261 {offsets = [32, 0], sizes = [8, 32], strides = [1, 1]} : vector<64x32xf32> to vector<8x32xf32>
    %407 = arith.truncf %406 : vector<8x32xf32> to vector<8x32xbf16>
    %cst_150 = arith.constant dense<0.000000e+00> : vector<8x32xf32>
    %408 = tpu.matmul %156, %407, %cst_150 {dimension_numbers = #tpu.dot_dimension_numbers<[1], [0], [0], [1], [0, 0, 1, 1], [], []>} : vector<8x8xbf16>, vector<8x32xbf16>, vector<8x32xf32> -> vector<8x32xf32>
    %409 = vector.broadcast %2 : vector<1x32xf32> to vector<8x32xf32>
    %410 = arith.addf %408, %409 : vector<8x32xf32>
    %cst_151 = arith.constant 0.000000e+00 : f32
    %411 = vector.broadcast %cst_151 : f32 to vector<8x32xf32>
    %412 = arith.maximumf %410, %411 : vector<8x32xf32>
    %c32_152 = arith.constant 32 : index
    %c0_153 = arith.constant 0 : index
    %413 = vector.load %arg11[%c32_152, %c0_153] : memref<64x32xf32, #tpu.memory_space<vmem>>, vector<8x32xf32>
    %414 = arith.truncf %413 : vector<8x32xf32> to vector<8x32xbf16>
    %cst_154 = arith.constant dense<0.000000e+00> : vector<16x32xf32>
    %415 = tpu.matmul %4, %414, %cst_154 {dimension_numbers = #tpu.dot_dimension_numbers<[1], [0], [0], [1], [0, 0, 1, 1], [], []>} : vector<16x8xbf16>, vector<8x32xbf16>, vector<16x32xf32> -> vector<16x32xf32>
    %416 = arith.truncf %412 : vector<8x32xf32> to vector<8x32xbf16>
    %cst_155 = arith.constant dense<0.000000e+00> : vector<16x32xf32>
    %417 = tpu.matmul %6, %416, %cst_155 {dimension_numbers = #tpu.dot_dimension_numbers<[1], [0], [0], [1], [0, 0, 1, 1], [], []>} : vector<16x8xbf16>, vector<8x32xbf16>, vector<16x32xf32> -> vector<16x32xf32>
    %cst_156 = arith.constant dense<0xFF800000> : vector<32xf32>
    %418 = vector.multi_reduction <maximumf>, %415, %cst_156 [0] : vector<16x32xf32> to vector<32xf32>
    %419 = vector.shape_cast %418 : vector<32xf32> to vector<1x32xf32>
    %420 = vector.broadcast %419 : vector<1x32xf32> to vector<16x32xf32>
    %421 = arith.subf %415, %420 : vector<16x32xf32>
    %422 = math.exp %421 : vector<16x32xf32>
    %cst_157 = arith.constant dense<0.000000e+00> : vector<32xf32>
    %423 = vector.multi_reduction <add>, %422, %cst_157 [0] : vector<16x32xf32> to vector<32xf32>
    %424 = vector.shape_cast %423 : vector<32xf32> to vector<1x32xf32>
    %425 = tpu.reciprocal %424 {approx = true} : vector<1x32xf32> -> vector<1x32xf32>
    %426 = vector.broadcast %425 : vector<1x32xf32> to vector<16x32xf32>
    %427 = arith.mulf %422, %426 : vector<16x32xf32>
    %cst_158 = arith.constant dense<0xFF800000> : vector<32xf32>
    %428 = vector.multi_reduction <maximumf>, %417, %cst_158 [0] : vector<16x32xf32> to vector<32xf32>
    %429 = vector.shape_cast %428 : vector<32xf32> to vector<1x32xf32>
    %430 = vector.broadcast %429 : vector<1x32xf32> to vector<16x32xf32>
    %431 = arith.subf %417, %430 : vector<16x32xf32>
    %432 = math.exp %431 : vector<16x32xf32>
    %cst_159 = arith.constant dense<0.000000e+00> : vector<32xf32>
    %433 = vector.multi_reduction <add>, %432, %cst_159 [0] : vector<16x32xf32> to vector<32xf32>
    %434 = vector.shape_cast %433 : vector<32xf32> to vector<1x32xf32>
    %435 = tpu.reciprocal %434 {approx = true} : vector<1x32xf32> -> vector<1x32xf32>
    %436 = vector.broadcast %435 : vector<1x32xf32> to vector<16x32xf32>
    %437 = arith.mulf %432, %436 : vector<16x32xf32>
    %438 = arith.addf %427, %437 : vector<16x32xf32>
    %cst_160 = arith.constant dense<0.000000e+00> : vector<16xf32>
    %439 = vector.multi_reduction <add>, %438, %cst_160 [1] : vector<16x32xf32> to vector<16xf32>
    %440 = vector.shape_cast %439 : vector<16xf32> to vector<16x1xf32>
    %c0_161 = arith.constant 0 : index
    %c4_162 = arith.constant 4 : index
    %441 = vector.load %arg12[%c0_161, %c4_162] : memref<16x8xf32, #tpu.memory_space<vmem>>, vector<16x1xf32>
    tpu.vector_store %arg12[%c0_161, %c4_162], %440 {strides = array<i32>} : memref<16x8xf32, #tpu.memory_space<vmem>>, vector<16x1xf32>,
    %442 = vector.extract_strided_slice %261 {offsets = [40, 0], sizes = [8, 32], strides = [1, 1]} : vector<64x32xf32> to vector<8x32xf32>
    %443 = arith.truncf %442 : vector<8x32xf32> to vector<8x32xbf16>
    %cst_163 = arith.constant dense<0.000000e+00> : vector<8x32xf32>
    %444 = tpu.matmul %187, %443, %cst_163 {dimension_numbers = #tpu.dot_dimension_numbers<[1], [0], [0], [1], [0, 0, 1, 1], [], []>} : vector<8x8xbf16>, vector<8x32xbf16>, vector<8x32xf32> -> vector<8x32xf32>
    %445 = vector.broadcast %2 : vector<1x32xf32> to vector<8x32xf32>
    %446 = arith.addf %444, %445 : vector<8x32xf32>
    %cst_164 = arith.constant 0.000000e+00 : f32
    %447 = vector.broadcast %cst_164 : f32 to vector<8x32xf32>
    %448 = arith.maximumf %446, %447 : vector<8x32xf32>
    %c40_165 = arith.constant 40 : index
    %c0_166 = arith.constant 0 : index
    %449 = vector.load %arg11[%c40_165, %c0_166] : memref<64x32xf32, #tpu.memory_space<vmem>>, vector<8x32xf32>
    %450 = arith.truncf %449 : vector<8x32xf32> to vector<8x32xbf16>
    %cst_167 = arith.constant dense<0.000000e+00> : vector<16x32xf32>
    %451 = tpu.matmul %4, %450, %cst_167 {dimension_numbers = #tpu.dot_dimension_numbers<[1], [0], [0], [1], [0, 0, 1, 1], [], []>} : vector<16x8xbf16>, vector<8x32xbf16>, vector<16x32xf32> -> vector<16x32xf32>
    %452 = arith.truncf %448 : vector<8x32xf32> to vector<8x32xbf16>
    %cst_168 = arith.constant dense<0.000000e+00> : vector<16x32xf32>
    %453 = tpu.matmul %6, %452, %cst_168 {dimension_numbers = #tpu.dot_dimension_numbers<[1], [0], [0], [1], [0, 0, 1, 1], [], []>} : vector<16x8xbf16>, vector<8x32xbf16>, vector<16x32xf32> -> vector<16x32xf32>
    %cst_169 = arith.constant dense<0xFF800000> : vector<32xf32>
    %454 = vector.multi_reduction <maximumf>, %451, %cst_169 [0] : vector<16x32xf32> to vector<32xf32>
    %455 = vector.shape_cast %454 : vector<32xf32> to vector<1x32xf32>
    %456 = vector.broadcast %455 : vector<1x32xf32> to vector<16x32xf32>
    %457 = arith.subf %451, %456 : vector<16x32xf32>
    %458 = math.exp %457 : vector<16x32xf32>
    %cst_170 = arith.constant dense<0.000000e+00> : vector<32xf32>
    %459 = vector.multi_reduction <add>, %458, %cst_170 [0] : vector<16x32xf32> to vector<32xf32>
    %460 = vector.shape_cast %459 : vector<32xf32> to vector<1x32xf32>
    %461 = tpu.reciprocal %460 {approx = true} : vector<1x32xf32> -> vector<1x32xf32>
    %462 = vector.broadcast %461 : vector<1x32xf32> to vector<16x32xf32>
    %463 = arith.mulf %458, %462 : vector<16x32xf32>
    %cst_171 = arith.constant dense<0xFF800000> : vector<32xf32>
    %464 = vector.multi_reduction <maximumf>, %453, %cst_171 [0] : vector<16x32xf32> to vector<32xf32>
    %465 = vector.shape_cast %464 : vector<32xf32> to vector<1x32xf32>
    %466 = vector.broadcast %465 : vector<1x32xf32> to vector<16x32xf32>
    %467 = arith.subf %453, %466 : vector<16x32xf32>
    %468 = math.exp %467 : vector<16x32xf32>
    %cst_172 = arith.constant dense<0.000000e+00> : vector<32xf32>
    %469 = vector.multi_reduction <add>, %468, %cst_172 [0] : vector<16x32xf32> to vector<32xf32>
    %470 = vector.shape_cast %469 : vector<32xf32> to vector<1x32xf32>
    %471 = tpu.reciprocal %470 {approx = true} : vector<1x32xf32> -> vector<1x32xf32>
    %472 = vector.broadcast %471 : vector<1x32xf32> to vector<16x32xf32>
    %473 = arith.mulf %468, %472 : vector<16x32xf32>
    %474 = arith.addf %463, %473 : vector<16x32xf32>
    %cst_173 = arith.constant dense<0.000000e+00> : vector<16xf32>
    %475 = vector.multi_reduction <add>, %474, %cst_173 [1] : vector<16x32xf32> to vector<16xf32>
    %476 = vector.shape_cast %475 : vector<16xf32> to vector<16x1xf32>
    %c0_174 = arith.constant 0 : index
    %c5_175 = arith.constant 5 : index
    %477 = vector.load %arg12[%c0_174, %c5_175] : memref<16x8xf32, #tpu.memory_space<vmem>>, vector<16x1xf32>
    tpu.vector_store %arg12[%c0_174, %c5_175], %476 {strides = array<i32>} : memref<16x8xf32, #tpu.memory_space<vmem>>, vector<16x1xf32>,
    %478 = vector.extract_strided_slice %261 {offsets = [48, 0], sizes = [8, 32], strides = [1, 1]} : vector<64x32xf32> to vector<8x32xf32>
    %479 = arith.truncf %478 : vector<8x32xf32> to vector<8x32xbf16>
    %cst_176 = arith.constant dense<0.000000e+00> : vector<8x32xf32>
    %480 = tpu.matmul %218, %479, %cst_176 {dimension_numbers = #tpu.dot_dimension_numbers<[1], [0], [0], [1], [0, 0, 1, 1], [], []>} : vector<8x8xbf16>, vector<8x32xbf16>, vector<8x32xf32> -> vector<8x32xf32>
    %481 = vector.broadcast %2 : vector<1x32xf32> to vector<8x32xf32>
    %482 = arith.addf %480, %481 : vector<8x32xf32>
    %cst_177 = arith.constant 0.000000e+00 : f32
    %483 = vector.broadcast %cst_177 : f32 to vector<8x32xf32>
    %484 = arith.maximumf %482, %483 : vector<8x32xf32>
    %c48_178 = arith.constant 48 : index
    %c0_179 = arith.constant 0 : index
    %485 = vector.load %arg11[%c48_178, %c0_179] : memref<64x32xf32, #tpu.memory_space<vmem>>, vector<8x32xf32>
    %486 = arith.truncf %485 : vector<8x32xf32> to vector<8x32xbf16>
    %cst_180 = arith.constant dense<0.000000e+00> : vector<16x32xf32>
    %487 = tpu.matmul %4, %486, %cst_180 {dimension_numbers = #tpu.dot_dimension_numbers<[1], [0], [0], [1], [0, 0, 1, 1], [], []>} : vector<16x8xbf16>, vector<8x32xbf16>, vector<16x32xf32> -> vector<16x32xf32>
    %488 = arith.truncf %484 : vector<8x32xf32> to vector<8x32xbf16>
    %cst_181 = arith.constant dense<0.000000e+00> : vector<16x32xf32>
    %489 = tpu.matmul %6, %488, %cst_181 {dimension_numbers = #tpu.dot_dimension_numbers<[1], [0], [0], [1], [0, 0, 1, 1], [], []>} : vector<16x8xbf16>, vector<8x32xbf16>, vector<16x32xf32> -> vector<16x32xf32>
    %cst_182 = arith.constant dense<0xFF800000> : vector<32xf32>
    %490 = vector.multi_reduction <maximumf>, %487, %cst_182 [0] : vector<16x32xf32> to vector<32xf32>
    %491 = vector.shape_cast %490 : vector<32xf32> to vector<1x32xf32>
    %492 = vector.broadcast %491 : vector<1x32xf32> to vector<16x32xf32>
    %493 = arith.subf %487, %492 : vector<16x32xf32>
    %494 = math.exp %493 : vector<16x32xf32>
    %cst_183 = arith.constant dense<0.000000e+00> : vector<32xf32>
    %495 = vector.multi_reduction <add>, %494, %cst_183 [0] : vector<16x32xf32> to vector<32xf32>
    %496 = vector.shape_cast %495 : vector<32xf32> to vector<1x32xf32>
    %497 = tpu.reciprocal %496 {approx = true} : vector<1x32xf32> -> vector<1x32xf32>
    %498 = vector.broadcast %497 : vector<1x32xf32> to vector<16x32xf32>
    %499 = arith.mulf %494, %498 : vector<16x32xf32>
    %cst_184 = arith.constant dense<0xFF800000> : vector<32xf32>
    %500 = vector.multi_reduction <maximumf>, %489, %cst_184 [0] : vector<16x32xf32> to vector<32xf32>
    %501 = vector.shape_cast %500 : vector<32xf32> to vector<1x32xf32>
    %502 = vector.broadcast %501 : vector<1x32xf32> to vector<16x32xf32>
    %503 = arith.subf %489, %502 : vector<16x32xf32>
    %504 = math.exp %503 : vector<16x32xf32>
    %cst_185 = arith.constant dense<0.000000e+00> : vector<32xf32>
    %505 = vector.multi_reduction <add>, %504, %cst_185 [0] : vector<16x32xf32> to vector<32xf32>
    %506 = vector.shape_cast %505 : vector<32xf32> to vector<1x32xf32>
    %507 = tpu.reciprocal %506 {approx = true} : vector<1x32xf32> -> vector<1x32xf32>
    %508 = vector.broadcast %507 : vector<1x32xf32> to vector<16x32xf32>
    %509 = arith.mulf %504, %508 : vector<16x32xf32>
    %510 = arith.addf %499, %509 : vector<16x32xf32>
    %cst_186 = arith.constant dense<0.000000e+00> : vector<16xf32>
    %511 = vector.multi_reduction <add>, %510, %cst_186 [1] : vector<16x32xf32> to vector<16xf32>
    %512 = vector.shape_cast %511 : vector<16xf32> to vector<16x1xf32>
    %c0_187 = arith.constant 0 : index
    %c6_188 = arith.constant 6 : index
    %513 = vector.load %arg12[%c0_187, %c6_188] : memref<16x8xf32, #tpu.memory_space<vmem>>, vector<16x1xf32>
    tpu.vector_store %arg12[%c0_187, %c6_188], %512 {strides = array<i32>} : memref<16x8xf32, #tpu.memory_space<vmem>>, vector<16x1xf32>,
    %514 = vector.extract_strided_slice %261 {offsets = [56, 0], sizes = [8, 32], strides = [1, 1]} : vector<64x32xf32> to vector<8x32xf32>
    %515 = arith.truncf %514 : vector<8x32xf32> to vector<8x32xbf16>
    %cst_189 = arith.constant dense<0.000000e+00> : vector<8x32xf32>
    %516 = tpu.matmul %249, %515, %cst_189 {dimension_numbers = #tpu.dot_dimension_numbers<[1], [0], [0], [1], [0, 0, 1, 1], [], []>} : vector<8x8xbf16>, vector<8x32xbf16>, vector<8x32xf32> -> vector<8x32xf32>
    %517 = vector.broadcast %2 : vector<1x32xf32> to vector<8x32xf32>
    %518 = arith.addf %516, %517 : vector<8x32xf32>
    %cst_190 = arith.constant 0.000000e+00 : f32
    %519 = vector.broadcast %cst_190 : f32 to vector<8x32xf32>
    %520 = arith.maximumf %518, %519 : vector<8x32xf32>
    %c56_191 = arith.constant 56 : index
    %c0_192 = arith.constant 0 : index
    %521 = vector.load %arg11[%c56_191, %c0_192] : memref<64x32xf32, #tpu.memory_space<vmem>>, vector<8x32xf32>
    %522 = arith.truncf %521 : vector<8x32xf32> to vector<8x32xbf16>
    %cst_193 = arith.constant dense<0.000000e+00> : vector<16x32xf32>
    %523 = tpu.matmul %4, %522, %cst_193 {dimension_numbers = #tpu.dot_dimension_numbers<[1], [0], [0], [1], [0, 0, 1, 1], [], []>} : vector<16x8xbf16>, vector<8x32xbf16>, vector<16x32xf32> -> vector<16x32xf32>
    %524 = arith.truncf %520 : vector<8x32xf32> to vector<8x32xbf16>
    %cst_194 = arith.constant dense<0.000000e+00> : vector<16x32xf32>
    %525 = tpu.matmul %6, %524, %cst_194 {dimension_numbers = #tpu.dot_dimension_numbers<[1], [0], [0], [1], [0, 0, 1, 1], [], []>} : vector<16x8xbf16>, vector<8x32xbf16>, vector<16x32xf32> -> vector<16x32xf32>
    %cst_195 = arith.constant dense<0xFF800000> : vector<32xf32>
    %526 = vector.multi_reduction <maximumf>, %523, %cst_195 [0] : vector<16x32xf32> to vector<32xf32>
    %527 = vector.shape_cast %526 : vector<32xf32> to vector<1x32xf32>
    %528 = vector.broadcast %527 : vector<1x32xf32> to vector<16x32xf32>
    %529 = arith.subf %523, %528 : vector<16x32xf32>
    %530 = math.exp %529 : vector<16x32xf32>
    %cst_196 = arith.constant dense<0.000000e+00> : vector<32xf32>
    %531 = vector.multi_reduction <add>, %530, %cst_196 [0] : vector<16x32xf32> to vector<32xf32>
    %532 = vector.shape_cast %531 : vector<32xf32> to vector<1x32xf32>
    %533 = tpu.reciprocal %532 {approx = true} : vector<1x32xf32> -> vector<1x32xf32>
    %534 = vector.broadcast %533 : vector<1x32xf32> to vector<16x32xf32>
    %535 = arith.mulf %530, %534 : vector<16x32xf32>
    %cst_197 = arith.constant dense<0xFF800000> : vector<32xf32>
    %536 = vector.multi_reduction <maximumf>, %525, %cst_197 [0] : vector<16x32xf32> to vector<32xf32>
    %537 = vector.shape_cast %536 : vector<32xf32> to vector<1x32xf32>
    %538 = vector.broadcast %537 : vector<1x32xf32> to vector<16x32xf32>
    %539 = arith.subf %525, %538 : vector<16x32xf32>
    %540 = math.exp %539 : vector<16x32xf32>
    %cst_198 = arith.constant dense<0.000000e+00> : vector<32xf32>
    %541 = vector.multi_reduction <add>, %540, %cst_198 [0] : vector<16x32xf32> to vector<32xf32>
    %542 = vector.shape_cast %541 : vector<32xf32> to vector<1x32xf32>
    %543 = tpu.reciprocal %542 {approx = true} : vector<1x32xf32> -> vector<1x32xf32>
    %544 = vector.broadcast %543 : vector<1x32xf32> to vector<16x32xf32>
    %545 = arith.mulf %540, %544 : vector<16x32xf32>
    %546 = arith.addf %535, %545 : vector<16x32xf32>
    %cst_199 = arith.constant dense<0.000000e+00> : vector<16xf32>
    %547 = vector.multi_reduction <add>, %546, %cst_199 [1] : vector<16x32xf32> to vector<16xf32>
    %548 = vector.shape_cast %547 : vector<16xf32> to vector<16x1xf32>
    %c0_200 = arith.constant 0 : index
    %c7_201 = arith.constant 7 : index
    %549 = vector.load %arg12[%c0_200, %c7_201] : memref<16x8xf32, #tpu.memory_space<vmem>>, vector<16x1xf32>
    tpu.vector_store %arg12[%c0_200, %c7_201], %548 {strides = array<i32>} : memref<16x8xf32, #tpu.memory_space<vmem>>, vector<16x1xf32>,
    %c0_202 = arith.constant 0 : index
    %c0_203 = arith.constant 0 : index
    %550 = vector.load %arg12[%c0_202, %c0_203] : memref<16x8xf32, #tpu.memory_space<vmem>>, vector<16x8xf32>
    %c0_204 = arith.constant 0 : index
    %c0_205 = arith.constant 0 : index
    %551 = vector.load %arg8[%c0_204, %c0_205] : memref<16x10xf32, #tpu.memory_space<vmem>>, vector<16x10xf32>
    %cst_206 = arith.constant dense<0.000000e+00> : vector<8x10xf32>
    %552 = tpu.matmul %550, %551, %cst_206 {dimension_numbers = #tpu.dot_dimension_numbers<[0], [0], [1], [1], [0, 1, 1, 1], [], []>} : vector<16x8xf32>, vector<16x10xf32>, vector<8x10xf32> -> vector<8x10xf32>
    %c0_207 = arith.constant 0 : index
    %c0_208 = arith.constant 0 : index
    %553 = vector.load %arg9[%c0_207, %c0_208] : memref<1x10xf32, #tpu.memory_space<vmem>>, vector<1x10xf32>
    %554 = vector.broadcast %553 : vector<1x10xf32> to vector<8x10xf32>
    %555 = arith.addf %552, %554 : vector<8x10xf32>
    %cst_209 = arith.constant dense<0xFF800000> : vector<8xf32>
    %556 = vector.multi_reduction <maximumf>, %555, %cst_209 [1] : vector<8x10xf32> to vector<8xf32>
    %557 = vector.shape_cast %556 : vector<8xf32> to vector<8x1xf32>
    %558 = vector.broadcast %557 : vector<8x1xf32> to vector<8x10xf32>
    %559 = arith.subf %555, %558 : vector<8x10xf32>
    %560 = math.exp %559 : vector<8x10xf32>
    %cst_210 = arith.constant dense<0.000000e+00> : vector<8xf32>
    %561 = vector.multi_reduction <add>, %560, %cst_210 [1] : vector<8x10xf32> to vector<8xf32>
    %562 = vector.shape_cast %561 : vector<8xf32> to vector<8x1xf32>
    %563 = vector.broadcast %562 : vector<8x1xf32> to vector<8x10xf32>
    %564 = arith.divf %560, %563 : vector<8x10xf32>
    %c0_211 = arith.constant 0 : index
    %c0_212 = arith.constant 0 : index
    %565 = vector.load %arg10[%c0_211, %c0_212] : memref<8x10xf32, #tpu.memory_space<vmem>>, vector<8x10xf32>
    tpu.vector_store %arg10[%c0_211, %c0_212], %564 {strides = array<i32>} : memref<8x10xf32, #tpu.memory_space<vmem>>, vector<8x10xf32>,
    return
  }
  func.func @transform_0(%arg0: i32) -> (i32, i32) {
    %c0_i32 = arith.constant 0 : i32
    %c0_i32_0 = arith.constant 0 : i32
    return %arg0, %c0_i32 : i32, i32
  }
  func.func @transform_1(%arg0: i32) -> (i32, i32, i32) {
    %c0_i32 = arith.constant 0 : i32
    %c0_i32_0 = arith.constant 0 : i32
    %c0_i32_1 = arith.constant 0 : i32
    return %arg0, %c0_i32, %c0_i32_0 : i32, i32, i32
  }
  func.func @transform_2(%arg0: i32) -> (i32, i32, i32) {
    %c0_i32 = arith.constant 0 : i32
    %c0_i32_0 = arith.constant 0 : i32
    %c0_i32_1 = arith.constant 0 : i32
    return %arg0, %c0_i32, %c0_i32_0 : i32, i32, i32
  }
  func.func @transform_3(%arg0: i32) -> (i32, i32) {
    %c0_i32 = arith.constant 0 : i32
    %c0_i32_0 = arith.constant 0 : i32
    %c0_i32_1 = arith.constant 0 : i32
    return %c0_i32, %c0_i32_0 : i32, i32
  }
  func.func @transform_4(%arg0: i32) -> (i32, i32) {
    %c0_i32 = arith.constant 0 : i32
    %c0_i32_0 = arith.constant 0 : i32
    %c0_i32_1 = arith.constant 0 : i32
    return %c0_i32, %c0_i32_0 : i32, i32
  }
  func.func @transform_5(%arg0: i32) -> (i32, i32) {
    %c0_i32 = arith.constant 0 : i32
    %c0_i32_0 = arith.constant 0 : i32
    %c0_i32_1 = arith.constant 0 : i32
    return %c0_i32, %c0_i32_0 : i32, i32
  }
  func.func @transform_6(%arg0: i32) -> (i32, i32, i32) {
    %c0_i32 = arith.constant 0 : i32
    %c0_i32_0 = arith.constant 0 : i32
    %c0_i32_1 = arith.constant 0 : i32
    %c0_i32_2 = arith.constant 0 : i32
    return %c0_i32, %c0_i32_0, %c0_i32_1 : i32, i32, i32
  }
  func.func @transform_7(%arg0: i32) -> (i32, i32) {
    %c0_i32 = arith.constant 0 : i32
    %c0_i32_0 = arith.constant 0 : i32
    %c0_i32_1 = arith.constant 0 : i32
    return %c0_i32, %c0_i32_0 : i32, i32
  }
  func.func @transform_8(%arg0: i32) -> (i32, i32) {
    %c0_i32 = arith.constant 0 : i32
    %c0_i32_0 = arith.constant 0 : i32
    %c0_i32_1 = arith.constant 0 : i32
    return %c0_i32, %c0_i32_0 : i32, i32
  }
  func.func @transform_9(%arg0: i32) -> (i32, i32) {
    %c0_i32 = arith.constant 0 : i32
    %c0_i32_0 = arith.constant 0 : i32
    return %arg0, %c0_i32 : i32, i32
  }
}

</mosaic_0001>

<llo_original>
// kernel: tpu_custom_call.1
$region0: #{tpu_custom_call.1}
  #allocation0 [shape = 'u32[]', space=smem, size = 0x4, offset = 0x4, fixed_abs, tag = 'smem constant byte address 0x4 - core index']
  #allocation1 [shape = 'u32[72,128]{1,0:T(1,128)}', space=vmem, size = 0x9000, scoped, tag = 'internal scratch']
  #allocation2 [shape = 'f32[64,32]{1,0:T(8,128)}', space=vmem, size = 0x8000, scoped, tag = 'scratch operand']
  #allocation3 [shape = 'f32[16,8]{1,0:T(8,128)}', space=vmem, size = 0x2000, scoped, tag = 'scratch operand']
  %s0 = inlined_call_operand.vmem [shape: bf16[128,5], index: 0, kind: input, shape index: {}]
  %s1 = inlined_call_operand.vmem [shape: f32[16,8,2], index: 1, kind: input, shape index: {}]
  %s2 = inlined_call_operand.vmem [shape: f32[16,2,8], index: 2, kind: input, shape index: {}]
  %s3 = inlined_call_operand.vmem [shape: bf16[5,32], index: 3, kind: input, shape index: {}]
  %s4 = inlined_call_operand.vmem [shape: f32[2,32], index: 4, kind: input, shape index: {}]
  %s5 = inlined_call_operand.vmem [shape: bf16[32,32], index: 5, kind: input, shape index: {}]
  %s6 = inlined_call_operand.vmem [shape: bf16[2,16,8], index: 6, kind: input, shape index: {}]
  %s7 = inlined_call_operand.vmem [shape: f32[16,10], index: 7, kind: input, shape index: {}]
  %s8 = inlined_call_operand.vmem [shape: f32[1,10], index: 8, kind: input, shape index: {}]
  %s9 = inlined_call_operand.hbm [shape: f32[16,10], index: 9, kind: output, shape index: {}]
  %s10 = sld [smem:[#allocation0]]
  $region69: #{tpu_custom_call.1} parent=0
    _
  %s12 = ssub.s32 1, %s10
  %s13 = scalar_select 0, %s12, %s10
  $region1: #{tpu_custom_call.1} parent=0
    #allocation4 [shape = 'u8[8192]{0}', space=vmem, size = 0x2000, scoped, tag = 'output window, operand 0']
    #allocation5 [shape = 's32[2]{0}', space=sflag, size = 0x8, scoped, tag = 'scoped memory for tpu_custom_call.1']
    %14 = vsyncpa [#allocation5], 0
    %s15 = scalar_lea.sflag [#allocation5], 1
    %16 = vsyncpa %s15, 0
    loop: start=0, step=1, limit=4
    $region2: #{tpu_custom_call.1} parent=1 // loop_pre_header
      _
    $region3: #{tpu_custom_call.1} parent=1 // loop_header
      %s18 = sphi 0, %s22
      %p19 = scmp.ge.s32.totalorder %s18, 4
      %s28 = sphi 0, %s30
      %s31 = sphi 0, %s28
      %s32 = sphi 0, %s31
      %s48 = sphi 0, %s32
      %s54 = sphi 0, %s56
      %s57 = sphi 0, %s54
      %s58 = sphi 0, %s57
      %s74 = sphi 0, %s58
      %s80 = sphi 0, %s82
      %s83 = sphi 0, %s80
      %s84 = sphi 0, %s83
      %s100 = sphi 0, %s84
      %s104 = sphi 0, %s104
      %s106 = sphi 0, %s104
      %s107 = sphi 0, %s106
      %s121 = sphi 0, %s107
      %s125 = sphi 0, %s125
      %s127 = sphi 0, %s125
      %s128 = sphi 0, %s127
      %s142 = sphi 0, %s128
      %s146 = sphi 0, %s146
      %s148 = sphi 0, %s146
      %s149 = sphi 0, %s148
      %s163 = sphi 0, %s149
      %s167 = sphi 0, %s167
      %s169 = sphi 0, %s167
      %s170 = sphi 0, %s169
      %s184 = sphi 0, %s170
      %s188 = sphi 0, %s188
      %s190 = sphi 0, %s188
      %s191 = sphi 0, %s190
      %s205 = sphi 0, %s191
      %s209 = sphi 0, %s209
      %s211 = sphi 0, %s209
      %s212 = sphi 0, %s211
      %s226 = sphi 0, %s212
      %s232 = sphi 0, %s234
      %s235 = sphi 0, %s232
      %s236 = sphi 0, %s235
      %s252 = sphi 0, %s236
    $region4: #{tpu_custom_call.1} parent=1 // loop_header_branch
      %21 = sbr.rel (%p19) target = $region8
    $region5: #{tpu_custom_call.1} parent=1 // loop_body
      %s23 = ssub.s32 %s18, 1
      %s24 = ssub.s32 %s18, 2
      %s25 = sadd.s32 %s18, 1
      %s26 = ssub.s32 %s18, %s25
      %p27 = scmp.eq.s32.totalorder %s26, 0
      %s29 = sadd.s32 %s28, 1
      %s30 = scalar_select %p27, %s28, %s29
      %p33 = pneg %p27
      %p34 = scmp.eq.s32.totalorder %s18, 1
      %p35 = por %p33, %p34
      %p36 = scmp.ne.s32.totalorder %s28, %s31
      %p37 = scmp.eq.s32.totalorder %s18, 0
      %p38 = por %p36, %p37
      %p39 = scmp.ne.s32.totalorder %s28, %s31
      %p40 = scmp.eq.s32.totalorder %s23, 1
      %p41 = por %p39, %p40
      %p42 = scmp.ne.s32.totalorder %s31, %s32
      %p43 = scmp.eq.s32.totalorder %s23, 0
      %p44 = por %p42, %p43
      %p45 = scmp.ne.s32.totalorder %s31, %s32
      %p46 = scmp.eq.s32.totalorder %s24, 1
      %p47 = por %p45, %p46
      %p49 = scmp.ne.s32.totalorder %s32, %s48
      %p50 = scmp.eq.s32.totalorder %s24, 0
      %p51 = por %p49, %p50
      %s52 = ssub.s32 %s18, %s25
      %p53 = scmp.eq.s32.totalorder %s52, 0
      %s55 = sadd.s32 %s54, 1
      %s56 = scalar_select %p53, %s54, %s55
      %p59 = pneg %p53
      %p60 = scmp.eq.s32.totalorder %s18, 1
      %p61 = por %p59, %p60
      %p62 = scmp.ne.s32.totalorder %s54, %s57
      %p63 = scmp.eq.s32.totalorder %s18, 0
      %p64 = por %p62, %p63
      %p65 = scmp.ne.s32.totalorder %s54, %s57
      %p66 = scmp.eq.s32.totalorder %s23, 1
      %p67 = por %p65, %p66
      %p68 = scmp.ne.s32.totalorder %s57, %s58
      %p69 = scmp.eq.s32.totalorder %s23, 0
      %p70 = por %p68, %p69
      %p71 = scmp.ne.s32.totalorder %s57, %s58
      %p72 = scmp.eq.s32.totalorder %s24, 1
      %p73 = por %p71, %p72
      %p75 = scmp.ne.s32.totalorder %s58, %s74
      %p76 = scmp.eq.s32.totalorder %s24, 0
      %p77 = por %p75, %p76
      %s78 = ssub.s32 %s18, %s25
      %p79 = scmp.eq.s32.totalorder %s78, 0
      %s81 = sadd.s32 %s80, 1
      %s82 = scalar_select %p79, %s80, %s81
      %p85 = pneg %p79
      %p86 = scmp.eq.s32.totalorder %s18, 1
      %p87 = por %p85, %p86
      %p88 = scmp.ne.s32.totalorder %s80, %s83
      %p89 = scmp.eq.s32.totalorder %s18, 0
      %p90 = por %p88, %p89
      %p91 = scmp.ne.s32.totalorder %s80, %s83
      %p92 = scmp.eq.s32.totalorder %s23, 1
      %p93 = por %p91, %p92
      %p94 = scmp.ne.s32.totalorder %s83, %s84
      %p95 = scmp.eq.s32.totalorder %s23, 0
      %p96 = por %p94, %p95
      %p97 = scmp.ne.s32.totalorder %s83, %s84
      %p98 = scmp.eq.s32.totalorder %s24, 1
      %p99 = por %p97, %p98
      %p101 = scmp.ne.s32.totalorder %s84, %s100
      %p102 = scmp.eq.s32.totalorder %s24, 0
      %p103 = por %p101, %p102
      %s105 = sadd.s32 %s104, 1
      %p108 = scmp.eq.s32.totalorder %s18, 1
      %p109 = scmp.ne.s32.totalorder %s104, %s106
      %p110 = scmp.eq.s32.totalorder %s18, 0
      %p111 = por %p109, %p110
      %p112 = scmp.ne.s32.totalorder %s104, %s106
      %p113 = scmp.eq.s32.totalorder %s23, 1
      %p114 = por %p112, %p113
      %p115 = scmp.ne.s32.totalorder %s106, %s107
      %p116 = scmp.eq.s32.totalorder %s23, 0
      %p117 = por %p115, %p116
      %p118 = scmp.ne.s32.totalorder %s106, %s107
      %p119 = scmp.eq.s32.totalorder %s24, 1
      %p120 = por %p118, %p119
      %p122 = scmp.ne.s32.totalorder %s107, %s121
      %p123 = scmp.eq.s32.totalorder %s24, 0
      %p124 = por %p122, %p123
      %s126 = sadd.s32 %s125, 1
      %p129 = scmp.eq.s32.totalorder %s18, 1
      %p130 = scmp.ne.s32.totalorder %s125, %s127
      %p131 = scmp.eq.s32.totalorder %s18, 0
      %p132 = por %p130, %p131
      %p133 = scmp.ne.s32.totalorder %s125, %s127
      %p134 = scmp.eq.s32.totalorder %s23, 1
      %p135 = por %p133, %p134
      %p136 = scmp.ne.s32.totalorder %s127, %s128
      %p137 = scmp.eq.s32.totalorder %s23, 0
      %p138 = por %p136, %p137
      %p139 = scmp.ne.s32.totalorder %s127, %s128
      %p140 = scmp.eq.s32.totalorder %s24, 1
      %p141 = por %p139, %p140
      %p143 = scmp.ne.s32.totalorder %s128, %s142
      %p144 = scmp.eq.s32.totalorder %s24, 0
      %p145 = por %p143, %p144
      %s147 = sadd.s32 %s146, 1
      %p150 = scmp.eq.s32.totalorder %s18, 1
      %p151 = scmp.ne.s32.totalorder %s146, %s148
      %p152 = scmp.eq.s32.totalorder %s18, 0
      %p153 = por %p151, %p152
      %p154 = scmp.ne.s32.totalorder %s146, %s148
      %p155 = scmp.eq.s32.totalorder %s23, 1
      %p156 = por %p154, %p155
      %p157 = scmp.ne.s32.totalorder %s148, %s149
      %p158 = scmp.eq.s32.totalorder %s23, 0
      %p159 = por %p157, %p158
      %p160 = scmp.ne.s32.totalorder %s148, %s149
      %p161 = scmp.eq.s32.totalorder %s24, 1
      %p162 = por %p160, %p161
      %p164 = scmp.ne.s32.totalorder %s149, %s163
      %p165 = scmp.eq.s32.totalorder %s24, 0
      %p166 = por %p164, %p165
      %s168 = sadd.s32 %s167, 1
      %p171 = scmp.eq.s32.totalorder %s18, 1
      %p172 = scmp.ne.s32.totalorder %s167, %s169
      %p173 = scmp.eq.s32.totalorder %s18, 0
      %p174 = por %p172, %p173
      %p175 = scmp.ne.s32.totalorder %s167, %s169
      %p176 = scmp.eq.s32.totalorder %s23, 1
      %p177 = por %p175, %p176
      %p178 = scmp.ne.s32.totalorder %s169, %s170
      %p179 = scmp.eq.s32.totalorder %s23, 0
      %p180 = por %p178, %p179
      %p181 = scmp.ne.s32.totalorder %s169, %s170
      %p182 = scmp.eq.s32.totalorder %s24, 1
      %p183 = por %p181, %p182
      %p185 = scmp.ne.s32.totalorder %s170, %s184
      %p186 = scmp.eq.s32.totalorder %s24, 0
      %p187 = por %p185, %p186
      %s189 = sadd.s32 %s188, 1
      %p192 = scmp.eq.s32.totalorder %s18, 1
      %p193 = scmp.ne.s32.totalorder %s188, %s190
      %p194 = scmp.eq.s32.totalorder %s18, 0
      %p195 = por %p193, %p194
      %p196 = scmp.ne.s32.totalorder %s188, %s190
      %p197 = scmp.eq.s32.totalorder %s23, 1
      %p198 = por %p196, %p197
      %p199 = scmp.ne.s32.totalorder %s190, %s191
      %p200 = scmp.eq.s32.totalorder %s23, 0
      %p201 = por %p199, %p200
      %p202 = scmp.ne.s32.totalorder %s190, %s191
      %p203 = scmp.eq.s32.totalorder %s24, 1
      %p204 = por %p202, %p203
      %p206 = scmp.ne.s32.totalorder %s191, %s205
      %p207 = scmp.eq.s32.totalorder %s24, 0
      %p208 = por %p206, %p207
      %s210 = sadd.s32 %s209, 1
      %p213 = scmp.eq.s32.totalorder %s18, 1
      %p214 = scmp.ne.s32.totalorder %s209, %s211
      %p215 = scmp.eq.s32.totalorder %s18, 0
      %p216 = por %p214, %p215
      %p217 = scmp.ne.s32.totalorder %s209, %s211
      %p218 = scmp.eq.s32.totalorder %s23, 1
      %p219 = por %p217, %p218
      %p220 = scmp.ne.s32.totalorder %s211, %s212
      %p221 = scmp.eq.s32.totalorder %s23, 0
      %p222 = por %p220, %p221
      %p223 = scmp.ne.s32.totalorder %s211, %s212
      %p224 = scmp.eq.s32.totalorder %s24, 1
      %p225 = por %p223, %p224
      %p227 = scmp.ne.s32.totalorder %s212, %s226
      %p228 = scmp.eq.s32.totalorder %s24, 0
      %p229 = por %p227, %p228
      %s230 = ssub.s32 %s18, %s25
      %p231 = scmp.eq.s32.totalorder %s230, 0
      %s233 = sadd.s32 %s232, 1
      %s234 = scalar_select %p231, %s232, %s233
      %p237 = pneg %p231
      %p238 = scmp.eq.s32.totalorder %s18, 1
      %p239 = por %p237, %p238
      %p240 = scmp.ne.s32.totalorder %s232, %s235
      %p241 = scmp.eq.s32.totalorder %s18, 0
      %p242 = por %p240, %p241
      %p243 = scmp.ne.s32.totalorder %s232, %s235
      %p244 = scmp.eq.s32.totalorder %s23, 1
      %p245 = por %p243, %p244
      %p246 = scmp.ne.s32.totalorder %s235, %s236
      %p247 = scmp.eq.s32.totalorder %s23, 0
      %p248 = por %p246, %p247
      %p249 = scmp.ne.s32.totalorder %s235, %s236
      %p250 = scmp.eq.s32.totalorder %s24, 1
      %p251 = por %p249, %p250
      %p253 = scmp.ne.s32.totalorder %s236, %s252
      %p254 = scmp.eq.s32.totalorder %s24, 0
      %p255 = por %p253, %p254
      %p256 = scmp.le.s32.totalorder 1, %s18
      %p257 = scmp.lt.s32.totalorder %s18, 3
      %p258 = pnand %p256, %p257
      %p259 = pneg %p258
      // Predicated region
      $region9: #{tpu_custom_call.1} parent=5 // pred_check
        _
      $region10: #{tpu_custom_call.1} parent=5 // pred_check_branch
        %261 = sbr.rel (%p258) target = $region12
      $region11: #{tpu_custom_call.1} parent=5 // pred_region
        %s262 = ssub.s32 %s18, 1
        // Predicated region
        $region13: #{tpu_custom_call.1} parent=11 // pred_check
          %p263 = pneg %p117
        $region14: #{tpu_custom_call.1} parent=11 // pred_check_branch
          %265 = sbr.rel (%p263) target = $region16
        $region15: #{tpu_custom_call.1} parent=11 // pred_region
          _
        $region16: #{tpu_custom_call.1} parent=11 // pred_fallthru
          _
        // Predicated region
        $region17: #{tpu_custom_call.1} parent=11 // pred_check
          %p266 = pneg %p138
        $region18: #{tpu_custom_call.1} parent=11 // pred_check_branch
          %268 = sbr.rel (%p266) target = $region20
        $region19: #{tpu_custom_call.1} parent=11 // pred_region
          _
        $region20: #{tpu_custom_call.1} parent=11 // pred_fallthru
          _
        // Predicated region
        $region21: #{tpu_custom_call.1} parent=11 // pred_check
          %p269 = pneg %p159
        $region22: #{tpu_custom_call.1} parent=11 // pred_check_branch
          %271 = sbr.rel (%p269) target = $region24
        $region23: #{tpu_custom_call.1} parent=11 // pred_region
          _
        $region24: #{tpu_custom_call.1} parent=11 // pred_fallthru
          _
        // Predicated region
        $region25: #{tpu_custom_call.1} parent=11 // pred_check
          %p272 = pneg %p180
        $region26: #{tpu_custom_call.1} parent=11 // pred_check_branch
          %274 = sbr.rel (%p272) target = $region28
        $region27: #{tpu_custom_call.1} parent=11 // pred_region
          _
        $region28: #{tpu_custom_call.1} parent=11 // pred_fallthru
          _
        // Predicated region
        $region29: #{tpu_custom_call.1} parent=11 // pred_check
          %p275 = pneg %p201
        $region30: #{tpu_custom_call.1} parent=11 // pred_check_branch
          %277 = sbr.rel (%p275) target = $region32
        $region31: #{tpu_custom_call.1} parent=11 // pred_region
          _
        $region32: #{tpu_custom_call.1} parent=11 // pred_fallthru
          _
        // Predicated region
        $region33: #{tpu_custom_call.1} parent=11 // pred_check
          %p278 = pneg %p222
        $region34: #{tpu_custom_call.1} parent=11 // pred_check_branch
          %280 = sbr.rel (%p278) target = $region36
        $region35: #{tpu_custom_call.1} parent=11 // pred_region
          _
        $region36: #{tpu_custom_call.1} parent=11 // pred_fallthru
          _
      $region12: #{tpu_custom_call.1} parent=5 // pred_fallthru
        _
      %p281 = scmp.lt.s32.totalorder %s18, 2
      // Predicated region
      $region37: #{tpu_custom_call.1} parent=5 // pred_check
        %p282 = pneg %p281
      $region38: #{tpu_custom_call.1} parent=5 // pred_check_branch
        %284 = sbr.rel (%p282) target = $region40
      $region39: #{tpu_custom_call.1} parent=5 // pred_region
        // Predicated region
        $region41: #{tpu_custom_call.1} parent=39 // pred_check
          %p285 = pneg %p38
        $region42: #{tpu_custom_call.1} parent=39 // pred_check_branch
          %287 = sbr.rel (%p285) target = $region44
        $region43: #{tpu_custom_call.1} parent=39 // pred_region
          %s288 = smul.u32 8, %s18
          %p289 = scmp.lt.s32.totalorder %s288, 15
          %s290 = scalar_select %p289, %s288, 15
          %s291 = smul.addr %s290, 4
          %s292 = scalar_lea.vmem %s0, %s291
          %s293 = smul.u32 8, %s18
        $region44: #{tpu_custom_call.1} parent=39 // pred_fallthru
          _
        // Predicated region
        $region45: #{tpu_custom_call.1} parent=39 // pred_check
          %p294 = pneg %p64
        $region46: #{tpu_custom_call.1} parent=39 // pred_check_branch
          %296 = sbr.rel (%p294) target = $region48
        $region47: #{tpu_custom_call.1} parent=39 // pred_region
          %s297 = smul.u32 8, %s18
          %p298 = scmp.lt.s32.totalorder %s297, 15
          %s299 = scalar_select %p298, %s297, 15
          %s300 = smul.addr %s299, 8
          %s301 = scalar_lea.vmem %s1, %s300
          %s302 = smul.u32 8, %s18
        $region48: #{tpu_custom_call.1} parent=39 // pred_fallthru
          _
        // Predicated region
        $region49: #{tpu_custom_call.1} parent=39 // pred_check
          %p303 = pneg %p90
        $region50: #{tpu_custom_call.1} parent=39 // pred_check_branch
          %305 = sbr.rel (%p303) target = $region52
        $region51: #{tpu_custom_call.1} parent=39 // pred_region
          %s306 = smul.u32 8, %s18
          %p307 = scmp.lt.s32.totalorder %s306, 15
          %s308 = scalar_select %p307, %s306, 15
          %s309 = smul.addr %s308, 2
          %s310 = scalar_lea.vmem %s2, %s309
          %s311 = smul.u32 8, %s18
        $region52: #{tpu_custom_call.1} parent=39 // pred_fallthru
          _
      $region40: #{tpu_custom_call.1} parent=5 // pred_fallthru
        _
      %p312 = scmp.le.s32.totalorder 1, %s18
      %p313 = scmp.lt.s32.totalorder %s18, 3
      %p314 = pnand %p312, %p313
      %p315 = pneg %p314
      // Predicated region
      $region53: #{tpu_custom_call.1} parent=5 // pred_check
        _
      $region54: #{tpu_custom_call.1} parent=5 // pred_check_branch
        %317 = sbr.rel (%p314) target = $region56
      $region55: #{tpu_custom_call.1} parent=5 // pred_region
        %s318 = ssub.s32 %s18, 1
        %s319 = smul.u32 8, %s23
        %p320 = scmp.lt.s32.totalorder %s319, 15
        %s321 = scalar_select %p320, %s319, 15
        %s322 = smul.addr %s321, 4
        %s323 = scalar_lea.vmem %s0, %s322
        %p324 = pneg %p44
        %p325 = pneg %p41
        %s326 = smul.u32 8, %s23
        %p327 = scmp.lt.s32.totalorder %s326, 15
        %s328 = scalar_select %p327, %s326, 15
        %s329 = smul.addr %s328, 8
        %s330 = scalar_lea.vmem %s1, %s329
        %p331 = pneg %p70
        %p332 = pneg %p67
        %s333 = smul.u32 8, %s23
        %p334 = scmp.lt.s32.totalorder %s333, 15
        %s335 = scalar_select %p334, %s333, 15
        %s336 = smul.addr %s335, 2
        %s337 = scalar_lea.vmem %s2, %s336
        %p338 = pneg %p96
        %p339 = pneg %p93
        %p340 = pneg %p117
        %p341 = pneg %p114
        %p342 = pneg %p138
        %p343 = pneg %p135
        %p344 = pneg %p159
        %p345 = pneg %p156
        %p346 = pneg %p180
        %p347 = pneg %p177
        %p348 = pneg %p201
        %p349 = pneg %p198
        %p350 = pneg %p222
        %p351 = pneg %p219
        %p352 = pneg %p248
        %p353 = pneg %p245
        %s354 = sand.u32 %s235, 1
        %s355 = scalar_lea.sflag [#allocation5], %s354
        %s356 = sand.u32 %s235, 1
        %s357 = smul.addr %s356, 8
        %s358 = scalar_lea.vmem [#allocation4], %s357
        %s359 = smul.u32 8, %s23
        %p360 = scmp.lt.s32.totalorder %s359, 15
        %s361 = scalar_select %p360, %s359, 15
        %s362 = smul.addr %s361, 4
        %s363 = scalar_lea.vmem %s0, %s362
        %s364 = smul.u32 8, %s23
        %s365 = smul.u32 8, %s23
        %p366 = scmp.lt.s32.totalorder %s365, 15
        %s367 = scalar_select %p366, %s365, 15
        %s368 = smul.addr %s367, 8
        %s369 = scalar_lea.vmem %s1, %s368
        %s370 = smul.u32 8, %s23
        %s371 = smul.u32 8, %s23
        %p372 = scmp.lt.s32.totalorder %s371, 15
        %s373 = scalar_select %p372, %s371, 15
        %s374 = smul.addr %s373, 2
        %s375 = scalar_lea.vmem %s2, %s374
        %s376 = smul.u32 8, %s23
        %v378 = vld [vmem:[%s4] sm:$0x3]
        %v379 = vld [vmem:[%s6] sm:$0xf]
        %v380 = vld [vmem:[%s6 + $0x4] sm:$0xf]
        %s381 = scalar_lea.vmem %s6, 8
        %v382 = vld [vmem:[%s381] sm:$0xf]
        %v383 = vld [vmem:[%s381 + $0x4] sm:$0xf]
        %v384 = vld [vmem:[%s363] sm:$0xf]
        %v385 = vld [vmem:[%s363 + $0x4] sm:$0xf]
        %v386 = vld [vmem:[%s363 + $0x8] sm:$0xf]
        %v387 = vld [vmem:[%s363 + $0xc] sm:$0xf]
        %v388 = vld [vmem:[%s363 + $0x10] sm:$0xf]
        %v389 = vld [vmem:[%s363 + $0x14] sm:$0xf]
        %v390 = vld [vmem:[%s363 + $0x18] sm:$0xf]
        %v391 = vld [vmem:[%s363 + $0x1c] sm:$0xf]
        %v392 = vld [vmem:[%s3] sm:$0x7]
        %v401 = vunpack.c.l.b16 %v384
        %v402 = vunpack.c.l.b16 %v385
        %v403 = vunpack.c.l.b16 %v386
        %v404 = vunpack.c.l.b16 %v387
        %v405 = vunpack.c.l.b16 %v388
        %v406 = vunpack.c.l.b16 %v389
        %v407 = vunpack.c.l.b16 %v390
        %v408 = vunpack.c.l.b16 %v391
        %v409 = vpack.c.b16 %v402, %v401
        %v410 = vpack.c.b16 %v404, %v403
        %v411 = vpack.c.b16 %v406, %v405
        %v412 = vpack.c.b16 %v408, %v407
        %vm413 = vcmask 39936
        %v415 = vsel %vm413, %v409, 0
        %v418 = vsel %vm413, %v410, 0
        %v421 = vsel %vm413, %v411, 0
        %v424 = vsel %vm413, %v412, 0
        %vm426 = vcmask 1041408
        %vm427 = vcmask 1042432
        %v428 = vsel %vm426, 4294967295, 65535
        %v429 = vsel %vm427, %v428, 0
        %v431 = vand.u32 %v392, %v429
        %433 = vmatpush.bf16.msra.mxu0 0
        %434 = vmatpush.bf16.msra.mxu0 0
        %435 = vmatpush.bf16.msra.mxu0 0
        %436 = vmatpush.bf16.msra.mxu0 0
        %437 = vmatpush.bf16.msra.mxu0 0
        %438 = vmatpush.bf16.msra.mxu0 0
        %439 = vmatpush.bf16.msra.mxu0 0
        %440 = vmatpush.bf16.msra.mxu0 %v431
        %441 = vmatmul.bf16.gmra.mxu0 %v415
        %v442 = vpop.f32.mrf.mxu0
        %v443 = vadd.f32 0.0, %v442
        %v444 = vpop.f32.mrf.mxu0
        %v445 = vadd.f32 0.0, %v444
        %446 = vmatmul.bf16.gmra.mxu0 %v418
        %v447 = vpop.f32.mrf.mxu0
        %v448 = vadd.f32 0.0, %v447
        %v449 = vpop.f32.mrf.mxu0
        %v450 = vadd.f32 0.0, %v449
        %451 = vmatmul.bf16.gmra.mxu0 %v421
        %v452 = vpop.f32.mrf.mxu0
        %v453 = vadd.f32 0.0, %v452
        %v454 = vpop.f32.mrf.mxu0
        %v455 = vadd.f32 0.0, %v454
        %456 = vmatmul.bf16.gmra.mxu0 %v424
        %v457 = vpop.f32.mrf.mxu0
        %v458 = vadd.f32 0.0, %v457
        %v459 = vpop.f32.mrf.mxu0
        %v460 = vadd.f32 0.0, %v459
        %461 = vdwg.mxu0
        %v462 = vld [vmem:[%s369] sm:$0xff]
        %v463 = vld [vmem:[%s375] sm:$0x3]
        %465 = vset.pattern.permute.xlu0 0
        %466 = vperm.xlu0 %465, %v462
        %v467 = vpop.permute.xlu0 %466
        %v469 = vperm.slane %v463, 0
        %v470 = vsub.f32 %v467, %v469
        %471 = vset.pattern.permute.xlu0 1
        %472 = vperm.xlu0 %471, %v462
        %v473 = vpop.permute.xlu0 %472
        %v475 = vperm.slane %v463, 1
        %v476 = vsub.f32 %v473, %v475
        %v477 = vmul.f32 %v470, %v470
        %v478 = vmul.f32 %v476, %v476
        %v479 = vadd.f32 %v477, %v478
        %v480 = vmul.f32 %v479, 0.5
        %v481 = vadd.f32 %v480, 1.0
        %v482 = vrcp.pop %v481
        %v483 = vpack.c.bf16 %v482, %v482
        %v484 = vpack.c.bf16 %v443, %v443
        %v485 = vperm.slane %v378, 0
        %vm486 = vcmask 64512
        %v488 = vsel %vm486, %v483, 0
        %vm490 = vcmask 1043456
        %v492 = vsel %vm490, %v484, 0
        %494 = vmatpush.bf16.msra.mxu0 0
        %495 = vmatpush.bf16.msra.mxu0 0
        %496 = vmatpush.bf16.msra.mxu0 0
        %497 = vmatpush.bf16.msra.mxu0 0
        %498 = vmatpush.bf16.msra.mxu0 0
        %499 = vmatpush.bf16.msra.mxu0 0
        %500 = vmatpush.bf16.msra.mxu0 0
        %501 = vmatpush.bf16.msra.mxu0 %v492
        %502 = vmatmul.bf16.gmra.mxu0 %v488
        %v503 = vpop.f32.mrf.mxu0
        %v504 = vadd.f32 %v485, %v503
        %v505 = vpop.f32.mrf.mxu0
        %506 = vdwg.mxu0
        %v507 = vmax.f32 %v504, 0.0
        %vm508 = vcmask 261120
        %509 = vst.msk [vmem:[#allocation2] sm:$0xff] %vm508, %v507
        %s510 = scalar_lea.vmem %s369, 8
        %v511 = vld [vmem:[%s510] sm:$0xff]
        %s512 = scalar_lea.vmem %s375, 2
        %v513 = vld [vmem:[%s512] sm:$0x3]
        %515 = vset.pattern.permute.xlu0 0
        %516 = vperm.xlu0 %515, %v511
        %v517 = vpop.permute.xlu0 %516
        %v519 = vperm.slane %v513, 0
        %v520 = vsub.f32 %v517, %v519
        %521 = vset.pattern.permute.xlu0 1
        %522 = vperm.xlu0 %521, %v511
        %v523 = vpop.permute.xlu0 %522
        %v525 = vperm.slane %v513, 1
        %v526 = vsub.f32 %v523, %v525
        %v527 = vmul.f32 %v520, %v520
        %v528 = vmul.f32 %v526, %v526
        %v529 = vadd.f32 %v527, %v528
        %v530 = vmul.f32 %v529, 0.5
        %v531 = vadd.f32 %v530, 1.0
        %v532 = vrcp.pop %v531
        %v533 = vpack.c.bf16 %v532, %v532
        %v534 = vpack.c.bf16 %v445, %v445
        %v536 = vsel %vm486, %v533, 0
        %v539 = vsel %vm490, %v534, 0
        %541 = vmatpush.bf16.msra.mxu0 0
        %542 = vmatpush.bf16.msra.mxu0 0
        %543 = vmatpush.bf16.msra.mxu0 0
        %544 = vmatpush.bf16.msra.mxu0 0
        %545 = vmatpush.bf16.msra.mxu0 0
        %546 = vmatpush.bf16.msra.mxu0 0
        %547 = vmatpush.bf16.msra.mxu0 0
        %548 = vmatpush.bf16.msra.mxu0 %v539
        %549 = vmatmul.bf16.gmra.mxu0 %v536
        %v550 = vpop.f32.mrf.mxu0
        %v551 = vadd.f32 %v485, %v550
        %v552 = vpop.f32.mrf.mxu0
        %553 = vdwg.mxu0
        %v554 = vmax.f32 %v551, 0.0
        %555 = vst.msk [vmem:[#allocation2 + $0x8] sm:$0xff] %vm508, %v554
        %s556 = scalar_lea.vmem %s369, 16
        %v557 = vld [vmem:[%s556] sm:$0xff]
        %s558 = scalar_lea.vmem %s375, 4
        %v559 = vld [vmem:[%s558] sm:$0x3]
        %561 = vset.pattern.permute.xlu0 0
        %562 = vperm.xlu0 %561, %v557
        %v563 = vpop.permute.xlu0 %562
        %v565 = vperm.slane %v559, 0
        %v566 = vsub.f32 %v563, %v565
        %567 = vset.pattern.permute.xlu0 1
        %568 = vperm.xlu0 %567, %v557
        %v569 = vpop.permute.xlu0 %568
        %v571 = vperm.slane %v559, 1
        %v572 = vsub.f32 %v569, %v571
        %v573 = vmul.f32 %v566, %v566
        %v574 = vmul.f32 %v572, %v572
        %v575 = vadd.f32 %v573, %v574
        %v576 = vmul.f32 %v575, 0.5
        %v577 = vadd.f32 %v576, 1.0
        %v578 = vrcp.pop %v577
        %v579 = vpack.c.bf16 %v578, %v578
        %v580 = vpack.c.bf16 %v448, %v448
        %v582 = vsel %vm486, %v579, 0
        %v585 = vsel %vm490, %v580, 0
        %587 = vmatpush.bf16.msra.mxu0 0
        %588 = vmatpush.bf16.msra.mxu0 0
        %589 = vmatpush.bf16.msra.mxu0 0
        %590 = vmatpush.bf16.msra.mxu0 0
        %591 = vmatpush.bf16.msra.mxu0 0
        %592 = vmatpush.bf16.msra.mxu0 0
        %593 = vmatpush.bf16.msra.mxu0 0
        %594 = vmatpush.bf16.msra.mxu0 %v585
        %595 = vmatmul.bf16.gmra.mxu0 %v582
        %v596 = vpop.f32.mrf.mxu0
        %v597 = vadd.f32 %v485, %v596
        %v598 = vpop.f32.mrf.mxu0
        %599 = vdwg.mxu0
        %v600 = vmax.f32 %v597, 0.0
        %601 = vst.msk [vmem:[#allocation2 + $0x10] sm:$0xff] %vm508, %v600
        %s602 = scalar_lea.vmem %s369, 24
        %v603 = vld [vmem:[%s602] sm:$0xff]
        %s604 = scalar_lea.vmem %s375, 6
        %v605 = vld [vmem:[%s604] sm:$0x3]
        %607 = vset.pattern.permute.xlu0 0
        %608 = vperm.xlu0 %607, %v603
        %v609 = vpop.permute.xlu0 %608
        %v611 = vperm.slane %v605, 0
        %v612 = vsub.f32 %v609, %v611
        %613 = vset.pattern.permute.xlu0 1
        %614 = vperm.xlu0 %613, %v603
        %v615 = vpop.permute.xlu0 %614
        %v617 = vperm.slane %v605, 1
        %v618 = vsub.f32 %v615, %v617
        %v619 = vmul.f32 %v612, %v612
        %v620 = vmul.f32 %v618, %v618
        %v621 = vadd.f32 %v619, %v620
        %v622 = vmul.f32 %v621, 0.5
        %v623 = vadd.f32 %v622, 1.0
        %v624 = vrcp.pop %v623
        %v625 = vpack.c.bf16 %v624, %v624
        %v626 = vpack.c.bf16 %v450, %v450
        %v628 = vsel %vm486, %v625, 0
        %v631 = vsel %vm490, %v626, 0
        %633 = vmatpush.bf16.msra.mxu0 0
        %634 = vmatpush.bf16.msra.mxu0 0
        %635 = vmatpush.bf16.msra.mxu0 0
        %636 = vmatpush.bf16.msra.mxu0 0
        %637 = vmatpush.bf16.msra.mxu0 0
        %638 = vmatpush.bf16.msra.mxu0 0
        %639 = vmatpush.bf16.msra.mxu0 0
        %640 = vmatpush.bf16.msra.mxu0 %v631
        %641 = vmatmul.bf16.gmra.mxu0 %v628
        %v642 = vpop.f32.mrf.mxu0
        %v643 = vadd.f32 %v485, %v642
        %v644 = vpop.f32.mrf.mxu0
        %645 = vdwg.mxu0
        %v646 = vmax.f32 %v643, 0.0
        %647 = vst.msk [vmem:[#allocation2 + $0x18] sm:$0xff] %vm508, %v646
        %s648 = scalar_lea.vmem %s369, 32
        %v649 = vld [vmem:[%s648] sm:$0xff]
        %s650 = scalar_lea.vmem %s375, 8
        %v651 = vld [vmem:[%s650] sm:$0x3]
        %653 = vset.pattern.permute.xlu0 0
        %654 = vperm.xlu0 %653, %v649
        %v655 = vpop.permute.xlu0 %654
        %v657 = vperm.slane %v651, 0
        %v658 = vsub.f32 %v655, %v657
        %659 = vset.pattern.permute.xlu0 1
        %660 = vperm.xlu0 %659, %v649
        %v661 = vpop.permute.xlu0 %660
        %v663 = vperm.slane %v651, 1
        %v664 = vsub.f32 %v661, %v663
        %v665 = vmul.f32 %v658, %v658
        %v666 = vmul.f32 %v664, %v664
        %v667 = vadd.f32 %v665, %v666
        %v668 = vmul.f32 %v667, 0.5
        %v669 = vadd.f32 %v668, 1.0
        %v670 = vrcp.pop %v669
        %v671 = vpack.c.bf16 %v670, %v670
        %v672 = vpack.c.bf16 %v453, %v453
        %v674 = vsel %vm486, %v671, 0
        %v677 = vsel %vm490, %v672, 0
        %679 = vmatpush.bf16.msra.mxu0 0
        %680 = vmatpush.bf16.msra.mxu0 0
        %681 = vmatpush.bf16.msra.mxu0 0
        %682 = vmatpush.bf16.msra.mxu0 0
        %683 = vmatpush.bf16.msra.mxu0 0
        %684 = vmatpush.bf16.msra.mxu0 0
        %685 = vmatpush.bf16.msra.mxu0 0
        %686 = vmatpush.bf16.msra.mxu0 %v677
        %687 = vmatmul.bf16.gmra.mxu0 %v674
        %v688 = vpop.f32.mrf.mxu0
        %v689 = vadd.f32 %v485, %v688
        %v690 = vpop.f32.mrf.mxu0
        %691 = vdwg.mxu0
        %v692 = vmax.f32 %v689, 0.0
        %693 = vst.msk [vmem:[#allocation2 + $0x20] sm:$0xff] %vm508, %v692
        %s694 = scalar_lea.vmem %s369, 40
        %v695 = vld [vmem:[%s694] sm:$0xff]
        %s696 = scalar_lea.vmem %s375, 10
        %v697 = vld [vmem:[%s696] sm:$0x3]
        %699 = vset.pattern.permute.xlu0 0
        %700 = vperm.xlu0 %699, %v695
        %v701 = vpop.permute.xlu0 %700
        %v703 = vperm.slane %v697, 0
        %v704 = vsub.f32 %v701, %v703
        %705 = vset.pattern.permute.xlu0 1
        %706 = vperm.xlu0 %705, %v695
        %v707 = vpop.permute.xlu0 %706
        %v709 = vperm.slane %v697, 1
        %v710 = vsub.f32 %v707, %v709
        %v711 = vmul.f32 %v704, %v704
        %v712 = vmul.f32 %v710, %v710
        %v713 = vadd.f32 %v711, %v712
        %v714 = vmul.f32 %v713, 0.5
        %v715 = vadd.f32 %v714, 1.0
        %v716 = vrcp.pop %v715
        %v717 = vpack.c.bf16 %v716, %v716
        %v718 = vpack.c.bf16 %v455, %v455
        %v720 = vsel %vm486, %v717, 0
        %v723 = vsel %vm490, %v718, 0
        %725 = vmatpush.bf16.msra.mxu0 0
        %726 = vmatpush.bf16.msra.mxu0 0
        %727 = vmatpush.bf16.msra.mxu0 0
        %728 = vmatpush.bf16.msra.mxu0 0
        %729 = vmatpush.bf16.msra.mxu0 0
        %730 = vmatpush.bf16.msra.mxu0 0
        %731 = vmatpush.bf16.msra.mxu0 0
        %732 = vmatpush.bf16.msra.mxu0 %v723
        %733 = vmatmul.bf16.gmra.mxu0 %v720
        %v734 = vpop.f32.mrf.mxu0
        %v735 = vadd.f32 %v485, %v734
        %v736 = vpop.f32.mrf.mxu0
        %737 = vdwg.mxu0
        %v738 = vmax.f32 %v735, 0.0
        %739 = vst.msk [vmem:[#allocation2 + $0x28] sm:$0xff] %vm508, %v738
        %s740 = scalar_lea.vmem %s369, 48
        %v741 = vld [vmem:[%s740] sm:$0xff]
        %s742 = scalar_lea.vmem %s375, 12
        %v743 = vld [vmem:[%s742] sm:$0x3]
        %745 = vset.pattern.permute.xlu0 0
        %746 = vperm.xlu0 %745, %v741
        %v747 = vpop.permute.xlu0 %746
        %v749 = vperm.slane %v743, 0
        %v750 = vsub.f32 %v747, %v749
        %751 = vset.pattern.permute.xlu0 1
        %752 = vperm.xlu0 %751, %v741
        %v753 = vpop.permute.xlu0 %752
        %v755 = vperm.slane %v743, 1
        %v756 = vsub.f32 %v753, %v755
        %v757 = vmul.f32 %v750, %v750
        %v758 = vmul.f32 %v756, %v756
        %v759 = vadd.f32 %v757, %v758
        %v760 = vmul.f32 %v759, 0.5
        %v761 = vadd.f32 %v760, 1.0
        %v762 = vrcp.pop %v761
        %v763 = vpack.c.bf16 %v762, %v762
        %v764 = vpack.c.bf16 %v458, %v458
        %v766 = vsel %vm486, %v763, 0
        %v769 = vsel %vm490, %v764, 0
        %771 = vmatpush.bf16.msra.mxu0 0
        %772 = vmatpush.bf16.msra.mxu0 0
        %773 = vmatpush.bf16.msra.mxu0 0
        %774 = vmatpush.bf16.msra.mxu0 0
        %775 = vmatpush.bf16.msra.mxu0 0
        %776 = vmatpush.bf16.msra.mxu0 0
        %777 = vmatpush.bf16.msra.mxu0 0
        %778 = vmatpush.bf16.msra.mxu0 %v769
        %779 = vmatmul.bf16.gmra.mxu0 %v766
        %v780 = vpop.f32.mrf.mxu0
        %v781 = vadd.f32 %v485, %v780
        %v782 = vpop.f32.mrf.mxu0
        %783 = vdwg.mxu0
        %v784 = vmax.f32 %v781, 0.0
        %785 = vst.msk [vmem:[#allocation2 + $0x30] sm:$0xff] %vm508, %v784
        %s786 = scalar_lea.vmem %s369, 56
        %v787 = vld [vmem:[%s786] sm:$0xff]
        %s788 = scalar_lea.vmem %s375, 14
        %v789 = vld [vmem:[%s788] sm:$0x3]
        %791 = vset.pattern.permute.xlu0 0
        %792 = vperm.xlu0 %791, %v787
        %v793 = vpop.permute.xlu0 %792
        %v795 = vperm.slane %v789, 0
        %v796 = vsub.f32 %v793, %v795
        %797 = vset.pattern.permute.xlu0 1
        %798 = vperm.xlu0 %797, %v787
        %v799 = vpop.permute.xlu0 %798
        %v801 = vperm.slane %v789, 1
        %v802 = vsub.f32 %v799, %v801
        %v803 = vmul.f32 %v796, %v796
        %v804 = vmul.f32 %v802, %v802
        %v805 = vadd.f32 %v803, %v804
        %v806 = vmul.f32 %v805, 0.5
        %v807 = vadd.f32 %v806, 1.0
        %v808 = vrcp.pop %v807
        %v809 = vpack.c.bf16 %v808, %v808
        %v810 = vpack.c.bf16 %v460, %v460
        %v812 = vsel %vm486, %v809, 0
        %v815 = vsel %vm490, %v810, 0
        %817 = vmatpush.bf16.msra.mxu0 0
        %818 = vmatpush.bf16.msra.mxu0 0
        %819 = vmatpush.bf16.msra.mxu0 0
        %820 = vmatpush.bf16.msra.mxu0 0
        %821 = vmatpush.bf16.msra.mxu0 0
        %822 = vmatpush.bf16.msra.mxu0 0
        %823 = vmatpush.bf16.msra.mxu0 0
        %824 = vmatpush.bf16.msra.mxu0 %v815
        %825 = vmatmul.bf16.gmra.mxu0 %v812
        %v826 = vpop.f32.mrf.mxu0
        %v827 = vadd.f32 %v485, %v826
        %v828 = vpop.f32.mrf.mxu0
        %829 = vdwg.mxu0
        %v830 = vmax.f32 %v827, 0.0
        %831 = vst.msk [vmem:[#allocation2 + $0x38] sm:$0xff] %vm508, %v830
        %v832 = vld [vmem:[#allocation2] sm:$0xff]
        %v833 = vld [vmem:[#allocation2 + $0x8] sm:$0xff]
        %v834 = vld [vmem:[#allocation2 + $0x10] sm:$0xff]
        %v835 = vld [vmem:[#allocation2 + $0x18] sm:$0xff]
        %v836 = vld [vmem:[#allocation2 + $0x20] sm:$0xff]
        %v837 = vld [vmem:[#allocation2 + $0x28] sm:$0xff]
        %v838 = vld [vmem:[#allocation2 + $0x30] sm:$0xff]
        %v839 = vld [vmem:[#allocation2 + $0x38] sm:$0xff]
        %v840 = vpack.c.bf16 %v833, %v832
        %v841 = vpack.c.bf16 %v835, %v834
        %v842 = vpack.c.bf16 %v837, %v836
        %v843 = vpack.c.bf16 %v839, %v838
        %v844 = vld [vmem:[%s5] sm:$0xf]
        %v845 = vld [vmem:[%s5 + $0x4] sm:$0xf]
        %v846 = vld [vmem:[%s5 + $0x8] sm:$0xf]
        %v847 = vld [vmem:[%s5 + $0xc] sm:$0xf]
        %v852 = vunpack.c.l.b16 %v844
        %v853 = vunpack.c.l.b16 %v845
        %v854 = vunpack.c.l.b16 %v846
        %v855 = vunpack.c.l.b16 %v847
        %v856 = vpack.c.b16 %v853, %v852
        %v857 = vpack.c.b16 %v855, %v854
        %v861 = vsel %vm508, %v840, 0
        %v864 = vsel %vm508, %v841, 0
        %v867 = vsel %vm508, %v842, 0
        %v870 = vsel %vm508, %v843, 0
        %872 = vmatpush.bf16.msra.mxu0 0
        %873 = vmatpush.bf16.msra.mxu0 0
        %874 = vmatpush.bf16.msra.mxu0 0
        %875 = vmatpush.bf16.msra.mxu0 0
        %876 = vmatpush.bf16.msra.mxu0 0
        %877 = vmatpush.bf16.msra.mxu0 0
        %878 = vmatpush.bf16.msra.mxu0 %v857
        %879 = vmatpush.bf16.msra.mxu0 %v856
        %880 = vmatmul.bf16.gmra.mxu0 %v861
        %v881 = vpop.f32.mrf.mxu0
        %v882 = vadd.f32 0.0, %v881
        %v883 = vpop.f32.mrf.mxu0
        %v884 = vadd.f32 0.0, %v883
        %885 = vmatmul.bf16.gmra.mxu0 %v864
        %v886 = vpop.f32.mrf.mxu0
        %v887 = vadd.f32 0.0, %v886
        %v888 = vpop.f32.mrf.mxu0
        %v889 = vadd.f32 0.0, %v888
        %890 = vmatmul.bf16.gmra.mxu0 %v867
        %v891 = vpop.f32.mrf.mxu0
        %v892 = vadd.f32 0.0, %v891
        %v893 = vpop.f32.mrf.mxu0
        %v894 = vadd.f32 0.0, %v893
        %895 = vmatmul.bf16.gmra.mxu0 %v870
        %v896 = vpop.f32.mrf.mxu0
        %v897 = vadd.f32 0.0, %v896
        %v898 = vpop.f32.mrf.mxu0
        %v899 = vadd.f32 0.0, %v898
        %900 = vdwg.mxu0
        %v901 = vpack.c.bf16 %v882, %v882
        %v902 = vperm.slane %v378, 1
        %v904 = vsel %vm490, %v901, 0
        %906 = vmatpush.bf16.msra.mxu0 0
        %907 = vmatpush.bf16.msra.mxu0 0
        %908 = vmatpush.bf16.msra.mxu0 0
        %909 = vmatpush.bf16.msra.mxu0 0
        %910 = vmatpush.bf16.msra.mxu0 0
        %911 = vmatpush.bf16.msra.mxu0 0
        %912 = vmatpush.bf16.msra.mxu0 0
        %913 = vmatpush.bf16.msra.mxu0 %v904
        %914 = vmatmul.bf16.gmra.mxu0 %v488
        %v915 = vpop.f32.mrf.mxu0
        %v916 = vadd.f32 %v902, %v915
        %v917 = vpop.f32.mrf.mxu0
        %918 = vdwg.mxu0
        %v919 = vmax.f32 %v916, 0.0
        %v920 = vld [vmem:[#allocation2] sm:$0xff]
        %v921 = vpack.c.bf16 %v920, %v920
        %v924 = vunpack.c.l.b16 %v379
        %v925 = vunpack.c.l.b16 %v380
        %v926 = vpack.c.b16 %v925, %v924
        %v928 = vsel %vm486, %v926, 0
        %v931 = vsel %vm490, %v921, 0
        %933 = vmatpush.bf16.msra.mxu0 0
        %934 = vmatpush.bf16.msra.mxu0 0
        %935 = vmatpush.bf16.msra.mxu0 0
        %936 = vmatpush.bf16.msra.mxu0 0
        %937 = vmatpush.bf16.msra.mxu0 0
        %938 = vmatpush.bf16.msra.mxu0 0
        %939 = vmatpush.bf16.msra.mxu0 0
        %940 = vmatpush.bf16.msra.mxu0 %v931
        %941 = vmatmul.bf16.gmra.mxu0 %v928
        %v942 = vpop.f32.mrf.mxu0
        %v943 = vadd.f32 0.0, %v942
        %v944 = vpop.f32.mrf.mxu0
        %v945 = vadd.f32 0.0, %v944
        %946 = vdwg.mxu0
        %v947 = vpack.c.bf16 %v919, %v919
        %v950 = vunpack.c.l.b16 %v382
        %v951 = vunpack.c.l.b16 %v383
        %v952 = vpack.c.b16 %v951, %v950
        %v954 = vsel %vm486, %v952, 0
        %v957 = vsel %vm490, %v947, 0
        %959 = vmatpush.bf16.msra.mxu0 0
        %960 = vmatpush.bf16.msra.mxu0 0
        %961 = vmatpush.bf16.msra.mxu0 0
        %962 = vmatpush.bf16.msra.mxu0 0
        %963 = vmatpush.bf16.msra.mxu0 0
        %964 = vmatpush.bf16.msra.mxu0 0
        %965 = vmatpush.bf16.msra.mxu0 0
        %966 = vmatpush.bf16.msra.mxu0 %v957
        %967 = vmatmul.bf16.gmra.mxu0 %v954
        %v968 = vpop.f32.mrf.mxu0
        %v969 = vadd.f32 0.0, %v968
        %v970 = vpop.f32.mrf.mxu0
        %v971 = vadd.f32 0.0, %v970
        %972 = vdwg.mxu0
        %v973 = vsel %vm508, %v943, -inf
        %v974 = vsel %vm508, %v945, -inf
        %v975 = vmax.f32 %v973, %v974
        %v976 = vrot.slane %v975, 4
        %v977 = vmax.f32 %v975, %v976
        %v978 = vrot.slane %v977, 2
        %v979 = vmax.f32 %v977, %v978
        %v980 = vrot.slane %v979, 1
        %v981 = vmax.f32 %v979, %v980
        %v982 = vsub.f32 %v943, %v981
        %v983 = vsub.f32 %v945, %v981
        %v984 = vmul.f32 %v982, 1.442695
        %v985 = vpow.pop %v984
        %v986 = vmul.f32 %v983, 1.442695
        %v987 = vpow.pop %v986
        %v988 = vsel %vm508, %v985, 0.0
        %v989 = vsel %vm508, %v987, 0.0
        %v990 = vadd.f32 %v988, %v989
        %v991 = vrot.slane %v990, 4
        %v992 = vadd.f32 %v990, %v991
        %v993 = vrot.slane %v992, 2
        %v994 = vadd.f32 %v992, %v993
        %v995 = vrot.slane %v994, 1
        %v996 = vadd.f32 %v994, %v995
        %v997 = vrcp.pop %v996
        %v998 = vmul.f32 %v985, %v997
        %v999 = vmul.f32 %v987, %v997
        %v1000 = vsel %vm508, %v969, -inf
        %v1001 = vsel %vm508, %v971, -inf
        %v1002 = vmax.f32 %v1000, %v1001
        %v1003 = vrot.slane %v1002, 4
        %v1004 = vmax.f32 %v1002, %v1003
        %v1005 = vrot.slane %v1004, 2
        %v1006 = vmax.f32 %v1004, %v1005
        %v1007 = vrot.slane %v1006, 1
        %v1008 = vmax.f32 %v1006, %v1007
        %v1009 = vsub.f32 %v969, %v1008
        %v1010 = vsub.f32 %v971, %v1008
        %v1011 = vmul.f32 %v1009, 1.442695
        %v1012 = vpow.pop %v1011
        %v1013 = vmul.f32 %v1010, 1.442695
        %v1014 = vpow.pop %v1013
        %v1015 = vsel %vm508, %v1012, 0.0
        %v1016 = vsel %vm508, %v1014, 0.0
        %v1017 = vadd.f32 %v1015, %v1016
        %v1018 = vrot.slane %v1017, 4
        %v1019 = vadd.f32 %v1017, %v1018
        %v1020 = vrot.slane %v1019, 2
        %v1021 = vadd.f32 %v1019, %v1020
        %v1022 = vrot.slane %v1021, 1
        %v1023 = vadd.f32 %v1021, %v1022
        %v1024 = vrcp.pop %v1023
        %v1025 = vmul.f32 %v1012, %v1024
        %v1026 = vmul.f32 %v1014, %v1024
        %v1027 = vadd.f32 %v998, %v1025
        %v1028 = vadd.f32 %v999, %v1026
        %v1029 = vsel %vm508, %v1027, 0.0
        %1030 = vadd.xlane.f32.xlu0 %v1029
        %v1031 = vpop.xlane.xlu0 %1030
        %v1032 = vsel %vm508, %v1028, 0.0
        %1033 = vadd.xlane.f32.xlu0 %v1032
        %v1034 = vpop.xlane.xlu0 %1033
        %vm1035 = vcmask 7168
        %1036 = vst.msk [vmem:[#allocation3] sm:$0xff] %vm1035, %v1031
        %1037 = vst.msk [vmem:[#allocation3 + $0x8] sm:$0xff] %vm1035, %v1034
        %v1038 = vpack.c.bf16 %v884, %v884
        %v1040 = vsel %vm490, %v1038, 0
        %1042 = vmatpush.bf16.msra.mxu0 0
        %1043 = vmatpush.bf16.msra.mxu0 0
        %1044 = vmatpush.bf16.msra.mxu0 0
        %1045 = vmatpush.bf16.msra.mxu0 0
        %1046 = vmatpush.bf16.msra.mxu0 0
        %1047 = vmatpush.bf16.msra.mxu0 0
        %1048 = vmatpush.bf16.msra.mxu0 0
        %1049 = vmatpush.bf16.msra.mxu0 %v1040
        %1050 = vmatmul.bf16.gmra.mxu0 %v536
        %v1051 = vpop.f32.mrf.mxu0
        %v1052 = vadd.f32 %v902, %v1051
        %v1053 = vpop.f32.mrf.mxu0
        %1054 = vdwg.mxu0
        %v1055 = vmax.f32 %v1052, 0.0
        %v1056 = vld [vmem:[#allocation2 + $0x8] sm:$0xff]
        %v1057 = vpack.c.bf16 %v1056, %v1056
        %v1059 = vsel %vm490, %v1057, 0
        %1061 = vmatpush.bf16.msra.mxu0 0
        %1062 = vmatpush.bf16.msra.mxu0 0
        %1063 = vmatpush.bf16.msra.mxu0 0
        %1064 = vmatpush.bf16.msra.mxu0 0
        %1065 = vmatpush.bf16.msra.mxu0 0
        %1066 = vmatpush.bf16.msra.mxu0 0
        %1067 = vmatpush.bf16.msra.mxu0 0
        %1068 = vmatpush.bf16.msra.mxu0 %v1059
        %1069 = vmatmul.bf16.gmra.mxu0 %v928
        %v1070 = vpop.f32.mrf.mxu0
        %v1071 = vadd.f32 0.0, %v1070
        %v1072 = vpop.f32.mrf.mxu0
        %v1073 = vadd.f32 0.0, %v1072
        %1074 = vdwg.mxu0
        %v1075 = vpack.c.bf16 %v1055, %v1055
        %v1077 = vsel %vm490, %v1075, 0
        %1079 = vmatpush.bf16.msra.mxu0 0
        %1080 = vmatpush.bf16.msra.mxu0 0
        %1081 = vmatpush.bf16.msra.mxu0 0
        %1082 = vmatpush.bf16.msra.mxu0 0
        %1083 = vmatpush.bf16.msra.mxu0 0
        %1084 = vmatpush.bf16.msra.mxu0 0
        %1085 = vmatpush.bf16.msra.mxu0 0
        %1086 = vmatpush.bf16.msra.mxu0 %v1077
        %1087 = vmatmul.bf16.gmra.mxu0 %v954
        %v1088 = vpop.f32.mrf.mxu0
        %v1089 = vadd.f32 0.0, %v1088
        %v1090 = vpop.f32.mrf.mxu0
        %v1091 = vadd.f32 0.0, %v1090
        %1092 = vdwg.mxu0
        %v1093 = vsel %vm508, %v1071, -inf
        %v1094 = vsel %vm508, %v1073, -inf
        %v1095 = vmax.f32 %v1093, %v1094
        %v1096 = vrot.slane %v1095, 4
        %v1097 = vmax.f32 %v1095, %v1096
        %v1098 = vrot.slane %v1097, 2
        %v1099 = vmax.f32 %v1097, %v1098
        %v1100 = vrot.slane %v1099, 1
        %v1101 = vmax.f32 %v1099, %v1100
        %v1102 = vsub.f32 %v1071, %v1101
        %v1103 = vsub.f32 %v1073, %v1101
        %v1104 = vmul.f32 %v1102, 1.442695
        %v1105 = vpow.pop %v1104
        %v1106 = vmul.f32 %v1103, 1.442695
        %v1107 = vpow.pop %v1106
        %v1108 = vsel %vm508, %v1105, 0.0
        %v1109 = vsel %vm508, %v1107, 0.0
        %v1110 = vadd.f32 %v1108, %v1109
        %v1111 = vrot.slane %v1110, 4
        %v1112 = vadd.f32 %v1110, %v1111
        %v1113 = vrot.slane %v1112, 2
        %v1114 = vadd.f32 %v1112, %v1113
        %v1115 = vrot.slane %v1114, 1
        %v1116 = vadd.f32 %v1114, %v1115
        %v1117 = vrcp.pop %v1116
        %v1118 = vmul.f32 %v1105, %v1117
        %v1119 = vmul.f32 %v1107, %v1117
        %v1120 = vsel %vm508, %v1089, -inf
        %v1121 = vsel %vm508, %v1091, -inf
        %v1122 = vmax.f32 %v1120, %v1121
        %v1123 = vrot.slane %v1122, 4
        %v1124 = vmax.f32 %v1122, %v1123
        %v1125 = vrot.slane %v1124, 2
        %v1126 = vmax.f32 %v1124, %v1125
        %v1127 = vrot.slane %v1126, 1
        %v1128 = vmax.f32 %v1126, %v1127
        %v1129 = vsub.f32 %v1089, %v1128
        %v1130 = vsub.f32 %v1091, %v1128
        %v1131 = vmul.f32 %v1129, 1.442695
        %v1132 = vpow.pop %v1131
        %v1133 = vmul.f32 %v1130, 1.442695
        %v1134 = vpow.pop %v1133
        %v1135 = vsel %vm508, %v1132, 0.0
        %v1136 = vsel %vm508, %v1134, 0.0
        %v1137 = vadd.f32 %v1135, %v1136
        %v1138 = vrot.slane %v1137, 4
        %v1139 = vadd.f32 %v1137, %v1138
        %v1140 = vrot.slane %v1139, 2
        %v1141 = vadd.f32 %v1139, %v1140
        %v1142 = vrot.slane %v1141, 1
        %v1143 = vadd.f32 %v1141, %v1142
        %v1144 = vrcp.pop %v1143
        %v1145 = vmul.f32 %v1132, %v1144
        %v1146 = vmul.f32 %v1134, %v1144
        %v1147 = vadd.f32 %v1118, %v1145
        %v1148 = vadd.f32 %v1119, %v1146
        %v1149 = vsel %vm508, %v1147, 0.0
        %1150 = vadd.xlane.f32.xlu0 %v1149
        %v1151 = vpop.xlane.xlu0 %1150
        %v1152 = vsel %vm508, %v1148, 0.0
        %1153 = vadd.xlane.f32.xlu0 %v1152
        %v1154 = vpop.xlane.xlu0 %1153
        %vm1155 = vcmask 15368
        %1156 = vst.msk [vmem:[#allocation3] sm:$0xff] %vm1155, %v1151
        %1157 = vst.msk [vmem:[#allocation3 + $0x8] sm:$0xff] %vm1155, %v1154
        %v1158 = vpack.c.bf16 %v887, %v887
        %v1160 = vsel %vm490, %v1158, 0
        %1162 = vmatpush.bf16.msra.mxu0 0
        %1163 = vmatpush.bf16.msra.mxu0 0
        %1164 = vmatpush.bf16.msra.mxu0 0
        %1165 = vmatpush.bf16.msra.mxu0 0
        %1166 = vmatpush.bf16.msra.mxu0 0
        %1167 = vmatpush.bf16.msra.mxu0 0
        %1168 = vmatpush.bf16.msra.mxu0 0
        %1169 = vmatpush.bf16.msra.mxu0 %v1160
        %1170 = vmatmul.bf16.gmra.mxu0 %v582
        %v1171 = vpop.f32.mrf.mxu0
        %v1172 = vadd.f32 %v902, %v1171
        %v1173 = vpop.f32.mrf.mxu0
        %1174 = vdwg.mxu0
        %v1175 = vmax.f32 %v1172, 0.0
        %v1176 = vld [vmem:[#allocation2 + $0x10] sm:$0xff]
        %v1177 = vpack.c.bf16 %v1176, %v1176
        %v1179 = vsel %vm490, %v1177, 0
        %1181 = vmatpush.bf16.msra.mxu0 0
        %1182 = vmatpush.bf16.msra.mxu0 0
        %1183 = vmatpush.bf16.msra.mxu0 0
        %1184 = vmatpush.bf16.msra.mxu0 0
        %1185 = vmatpush.bf16.msra.mxu0 0
        %1186 = vmatpush.bf16.msra.mxu0 0
        %1187 = vmatpush.bf16.msra.mxu0 0
        %1188 = vmatpush.bf16.msra.mxu0 %v1179
        %1189 = vmatmul.bf16.gmra.mxu0 %v928
        %v1190 = vpop.f32.mrf.mxu0
        %v1191 = vadd.f32 0.0, %v1190
        %v1192 = vpop.f32.mrf.mxu0
        %v1193 = vadd.f32 0.0, %v1192
        %1194 = vdwg.mxu0
        %v1195 = vpack.c.bf16 %v1175, %v1175
        %v1197 = vsel %vm490, %v1195, 0
        %1199 = vmatpush.bf16.msra.mxu0 0
        %1200 = vmatpush.bf16.msra.mxu0 0
        %1201 = vmatpush.bf16.msra.mxu0 0
        %1202 = vmatpush.bf16.msra.mxu0 0
        %1203 = vmatpush.bf16.msra.mxu0 0
        %1204 = vmatpush.bf16.msra.mxu0 0
        %1205 = vmatpush.bf16.msra.mxu0 0
        %1206 = vmatpush.bf16.msra.mxu0 %v1197
        %1207 = vmatmul.bf16.gmra.mxu0 %v954
        %v1208 = vpop.f32.mrf.mxu0
        %v1209 = vadd.f32 0.0, %v1208
        %v1210 = vpop.f32.mrf.mxu0
        %v1211 = vadd.f32 0.0, %v1210
        %1212 = vdwg.mxu0
        %v1213 = vsel %vm508, %v1191, -inf
        %v1214 = vsel %vm508, %v1193, -inf
        %v1215 = vmax.f32 %v1213, %v1214
        %v1216 = vrot.slane %v1215, 4
        %v1217 = vmax.f32 %v1215, %v1216
        %v1218 = vrot.slane %v1217, 2
        %v1219 = vmax.f32 %v1217, %v1218
        %v1220 = vrot.slane %v1219, 1
        %v1221 = vmax.f32 %v1219, %v1220
        %v1222 = vsub.f32 %v1191, %v1221
        %v1223 = vsub.f32 %v1193, %v1221
        %v1224 = vmul.f32 %v1222, 1.442695
        %v1225 = vpow.pop %v1224
        %v1226 = vmul.f32 %v1223, 1.442695
        %v1227 = vpow.pop %v1226
        %v1228 = vsel %vm508, %v1225, 0.0
        %v1229 = vsel %vm508, %v1227, 0.0
        %v1230 = vadd.f32 %v1228, %v1229
        %v1231 = vrot.slane %v1230, 4
        %v1232 = vadd.f32 %v1230, %v1231
        %v1233 = vrot.slane %v1232, 2
        %v1234 = vadd.f32 %v1232, %v1233
        %v1235 = vrot.slane %v1234, 1
        %v1236 = vadd.f32 %v1234, %v1235
        %v1237 = vrcp.pop %v1236
        %v1238 = vmul.f32 %v1225, %v1237
        %v1239 = vmul.f32 %v1227, %v1237
        %v1240 = vsel %vm508, %v1209, -inf
        %v1241 = vsel %vm508, %v1211, -inf
        %v1242 = vmax.f32 %v1240, %v1241
        %v1243 = vrot.slane %v1242, 4
        %v1244 = vmax.f32 %v1242, %v1243
        %v1245 = vrot.slane %v1244, 2
        %v1246 = vmax.f32 %v1244, %v1245
        %v1247 = vrot.slane %v1246, 1
        %v1248 = vmax.f32 %v1246, %v1247
        %v1249 = vsub.f32 %v1209, %v1248
        %v1250 = vsub.f32 %v1211, %v1248
        %v1251 = vmul.f32 %v1249, 1.442695
        %v1252 = vpow.pop %v1251
        %v1253 = vmul.f32 %v1250, 1.442695
        %v1254 = vpow.pop %v1253
        %v1255 = vsel %vm508, %v1252, 0.0
        %v1256 = vsel %vm508, %v1254, 0.0
        %v1257 = vadd.f32 %v1255, %v1256
        %v1258 = vrot.slane %v1257, 4
        %v1259 = vadd.f32 %v1257, %v1258
        %v1260 = vrot.slane %v1259, 2
        %v1261 = vadd.f32 %v1259, %v1260
        %v1262 = vrot.slane %v1261, 1
        %v1263 = vadd.f32 %v1261, %v1262
        %v1264 = vrcp.pop %v1263
        %v1265 = vmul.f32 %v1252, %v1264
        %v1266 = vmul.f32 %v1254, %v1264
        %v1267 = vadd.f32 %v1238, %v1265
        %v1268 = vadd.f32 %v1239, %v1266
        %v1269 = vsel %vm508, %v1267, 0.0
        %1270 = vadd.xlane.f32.xlu0 %v1269
        %v1271 = vpop.xlane.xlu0 %1270
        %v1272 = vsel %vm508, %v1268, 0.0
        %1273 = vadd.xlane.f32.xlu0 %v1272
        %v1274 = vpop.xlane.xlu0 %1273
        %vm1275 = vcmask 23568
        %1276 = vst.msk [vmem:[#allocation3] sm:$0xff] %vm1275, %v1271
        %1277 = vst.msk [vmem:[#allocation3 + $0x8] sm:$0xff] %vm1275, %v1274
        %v1278 = vpack.c.bf16 %v889, %v889
        %v1280 = vsel %vm490, %v1278, 0
        %1282 = vmatpush.bf16.msra.mxu0 0
        %1283 = vmatpush.bf16.msra.mxu0 0
        %1284 = vmatpush.bf16.msra.mxu0 0
        %1285 = vmatpush.bf16.msra.mxu0 0
        %1286 = vmatpush.bf16.msra.mxu0 0
        %1287 = vmatpush.bf16.msra.mxu0 0
        %1288 = vmatpush.bf16.msra.mxu0 0
        %1289 = vmatpush.bf16.msra.mxu0 %v1280
        %1290 = vmatmul.bf16.gmra.mxu0 %v628
        %v1291 = vpop.f32.mrf.mxu0
        %v1292 = vadd.f32 %v902, %v1291
        %v1293 = vpop.f32.mrf.mxu0
        %1294 = vdwg.mxu0
        %v1295 = vmax.f32 %v1292, 0.0
        %v1296 = vld [vmem:[#allocation2 + $0x18] sm:$0xff]
        %v1297 = vpack.c.bf16 %v1296, %v1296
        %v1299 = vsel %vm490, %v1297, 0
        %1301 = vmatpush.bf16.msra.mxu0 0
        %1302 = vmatpush.bf16.msra.mxu0 0
        %1303 = vmatpush.bf16.msra.mxu0 0
        %1304 = vmatpush.bf16.msra.mxu0 0
        %1305 = vmatpush.bf16.msra.mxu0 0
        %1306 = vmatpush.bf16.msra.mxu0 0
        %1307 = vmatpush.bf16.msra.mxu0 0
        %1308 = vmatpush.bf16.msra.mxu0 %v1299
        %1309 = vmatmul.bf16.gmra.mxu0 %v928
        %v1310 = vpop.f32.mrf.mxu0
        %v1311 = vadd.f32 0.0, %v1310
        %v1312 = vpop.f32.mrf.mxu0
        %v1313 = vadd.f32 0.0, %v1312
        %1314 = vdwg.mxu0
        %v1315 = vpack.c.bf16 %v1295, %v1295
        %v1317 = vsel %vm490, %v1315, 0
        %1319 = vmatpush.bf16.msra.mxu0 0
        %1320 = vmatpush.bf16.msra.mxu0 0
        %1321 = vmatpush.bf16.msra.mxu0 0
        %1322 = vmatpush.bf16.msra.mxu0 0
        %1323 = vmatpush.bf16.msra.mxu0 0
        %1324 = vmatpush.bf16.msra.mxu0 0
        %1325 = vmatpush.bf16.msra.mxu0 0
        %1326 = vmatpush.bf16.msra.mxu0 %v1317
        %1327 = vmatmul.bf16.gmra.mxu0 %v954
        %v1328 = vpop.f32.mrf.mxu0
        %v1329 = vadd.f32 0.0, %v1328
        %v1330 = vpop.f32.mrf.mxu0
        %v1331 = vadd.f32 0.0, %v1330
        %1332 = vdwg.mxu0
        %v1333 = vsel %vm508, %v1311, -inf
        %v1334 = vsel %vm508, %v1313, -inf
        %v1335 = vmax.f32 %v1333, %v1334
        %v1336 = vrot.slane %v1335, 4
        %v1337 = vmax.f32 %v1335, %v1336
        %v1338 = vrot.slane %v1337, 2
        %v1339 = vmax.f32 %v1337, %v1338
        %v1340 = vrot.slane %v1339, 1
        %v1341 = vmax.f32 %v1339, %v1340
        %v1342 = vsub.f32 %v1311, %v1341
        %v1343 = vsub.f32 %v1313, %v1341
        %v1344 = vmul.f32 %v1342, 1.442695
        %v1345 = vpow.pop %v1344
        %v1346 = vmul.f32 %v1343, 1.442695
        %v1347 = vpow.pop %v1346
        %v1348 = vsel %vm508, %v1345, 0.0
        %v1349 = vsel %vm508, %v1347, 0.0
        %v1350 = vadd.f32 %v1348, %v1349
        %v1351 = vrot.slane %v1350, 4
        %v1352 = vadd.f32 %v1350, %v1351
        %v1353 = vrot.slane %v1352, 2
        %v1354 = vadd.f32 %v1352, %v1353
        %v1355 = vrot.slane %v1354, 1
        %v1356 = vadd.f32 %v1354, %v1355
        %v1357 = vrcp.pop %v1356
        %v1358 = vmul.f32 %v1345, %v1357
        %v1359 = vmul.f32 %v1347, %v1357
        %v1360 = vsel %vm508, %v1329, -inf
        %v1361 = vsel %vm508, %v1331, -inf
        %v1362 = vmax.f32 %v1360, %v1361
        %v1363 = vrot.slane %v1362, 4
        %v1364 = vmax.f32 %v1362, %v1363
        %v1365 = vrot.slane %v1364, 2
        %v1366 = vmax.f32 %v1364, %v1365
        %v1367 = vrot.slane %v1366, 1
        %v1368 = vmax.f32 %v1366, %v1367
        %v1369 = vsub.f32 %v1329, %v1368
        %v1370 = vsub.f32 %v1331, %v1368
        %v1371 = vmul.f32 %v1369, 1.442695
        %v1372 = vpow.pop %v1371
        %v1373 = vmul.f32 %v1370, 1.442695
        %v1374 = vpow.pop %v1373
        %v1375 = vsel %vm508, %v1372, 0.0
        %v1376 = vsel %vm508, %v1374, 0.0
        %v1377 = vadd.f32 %v1375, %v1376
        %v1378 = vrot.slane %v1377, 4
        %v1379 = vadd.f32 %v1377, %v1378
        %v1380 = vrot.slane %v1379, 2
        %v1381 = vadd.f32 %v1379, %v1380
        %v1382 = vrot.slane %v1381, 1
        %v1383 = vadd.f32 %v1381, %v1382
        %v1384 = vrcp.pop %v1383
        %v1385 = vmul.f32 %v1372, %v1384
        %v1386 = vmul.f32 %v1374, %v1384
        %v1387 = vadd.f32 %v1358, %v1385
        %v1388 = vadd.f32 %v1359, %v1386
        %v1389 = vsel %vm508, %v1387, 0.0
        %1390 = vadd.xlane.f32.xlu0 %v1389
        %v1391 = vpop.xlane.xlu0 %1390
        %v1392 = vsel %vm508, %v1388, 0.0
        %1393 = vadd.xlane.f32.xlu0 %v1392
        %v1394 = vpop.xlane.xlu0 %1393
        %vm1395 = vcmask 31768
        %1396 = vst.msk [vmem:[#allocation3] sm:$0xff] %vm1395, %v1391
        %1397 = vst.msk [vmem:[#allocation3 + $0x8] sm:$0xff] %vm1395, %v1394
        %v1398 = vpack.c.bf16 %v892, %v892
        %v1400 = vsel %vm490, %v1398, 0
        %1402 = vmatpush.bf16.msra.mxu0 0
        %1403 = vmatpush.bf16.msra.mxu0 0
        %1404 = vmatpush.bf16.msra.mxu0 0
        %1405 = vmatpush.bf16.msra.mxu0 0
        %1406 = vmatpush.bf16.msra.mxu0 0
        %1407 = vmatpush.bf16.msra.mxu0 0
        %1408 = vmatpush.bf16.msra.mxu0 0
        %1409 = vmatpush.bf16.msra.mxu0 %v1400
        %1410 = vmatmul.bf16.gmra.mxu0 %v674
        %v1411 = vpop.f32.mrf.mxu0
        %v1412 = vadd.f32 %v902, %v1411
        %v1413 = vpop.f32.mrf.mxu0
        %1414 = vdwg.mxu0
        %v1415 = vmax.f32 %v1412, 0.0
        %v1416 = vld [vmem:[#allocation2 + $0x20] sm:$0xff]
        %v1417 = vpack.c.bf16 %v1416, %v1416
        %v1419 = vsel %vm490, %v1417, 0
        %1421 = vmatpush.bf16.msra.mxu0 0
        %1422 = vmatpush.bf16.msra.mxu0 0
        %1423 = vmatpush.bf16.msra.mxu0 0
        %1424 = vmatpush.bf16.msra.mxu0 0
        %1425 = vmatpush.bf16.msra.mxu0 0
        %1426 = vmatpush.bf16.msra.mxu0 0
        %1427 = vmatpush.bf16.msra.mxu0 0
        %1428 = vmatpush.bf16.msra.mxu0 %v1419
        %1429 = vmatmul.bf16.gmra.mxu0 %v928
        %v1430 = vpop.f32.mrf.mxu0
        %v1431 = vadd.f32 0.0, %v1430
        %v1432 = vpop.f32.mrf.mxu0
        %v1433 = vadd.f32 0.0, %v1432
        %1434 = vdwg.mxu0
        %v1435 = vpack.c.bf16 %v1415, %v1415
        %v1437 = vsel %vm490, %v1435, 0
        %1439 = vmatpush.bf16.msra.mxu0 0
        %1440 = vmatpush.bf16.msra.mxu0 0
        %1441 = vmatpush.bf16.msra.mxu0 0
        %1442 = vmatpush.bf16.msra.mxu0 0
        %1443 = vmatpush.bf16.msra.mxu0 0
        %1444 = vmatpush.bf16.msra.mxu0 0
        %1445 = vmatpush.bf16.msra.mxu0 0
        %1446 = vmatpush.bf16.msra.mxu0 %v1437
        %1447 = vmatmul.bf16.gmra.mxu0 %v954
        %v1448 = vpop.f32.mrf.mxu0
        %v1449 = vadd.f32 0.0, %v1448
        %v1450 = vpop.f32.mrf.mxu0
        %v1451 = vadd.f32 0.0, %v1450
        %1452 = vdwg.mxu0
        %v1453 = vsel %vm508, %v1431, -inf
        %v1454 = vsel %vm508, %v1433, -inf
        %v1455 = vmax.f32 %v1453, %v1454
        %v1456 = vrot.slane %v1455, 4
        %v1457 = vmax.f32 %v1455, %v1456
        %v1458 = vrot.slane %v1457, 2
        %v1459 = vmax.f32 %v1457, %v1458
        %v1460 = vrot.slane %v1459, 1
        %v1461 = vmax.f32 %v1459, %v1460
        %v1462 = vsub.f32 %v1431, %v1461
        %v1463 = vsub.f32 %v1433, %v1461
        %v1464 = vmul.f32 %v1462, 1.442695
        %v1465 = vpow.pop %v1464
        %v1466 = vmul.f32 %v1463, 1.442695
        %v1467 = vpow.pop %v1466
        %v1468 = vsel %vm508, %v1465, 0.0
        %v1469 = vsel %vm508, %v1467, 0.0
        %v1470 = vadd.f32 %v1468, %v1469
        %v1471 = vrot.slane %v1470, 4
        %v1472 = vadd.f32 %v1470, %v1471
        %v1473 = vrot.slane %v1472, 2
        %v1474 = vadd.f32 %v1472, %v1473
        %v1475 = vrot.slane %v1474, 1
        %v1476 = vadd.f32 %v1474, %v1475
        %v1477 = vrcp.pop %v1476
        %v1478 = vmul.f32 %v1465, %v1477
        %v1479 = vmul.f32 %v1467, %v1477
        %v1480 = vsel %vm508, %v1449, -inf
        %v1481 = vsel %vm508, %v1451, -inf
        %v1482 = vmax.f32 %v1480, %v1481
        %v1483 = vrot.slane %v1482, 4
        %v1484 = vmax.f32 %v1482, %v1483
        %v1485 = vrot.slane %v1484, 2
        %v1486 = vmax.f32 %v1484, %v1485
        %v1487 = vrot.slane %v1486, 1
        %v1488 = vmax.f32 %v1486, %v1487
        %v1489 = vsub.f32 %v1449, %v1488
        %v1490 = vsub.f32 %v1451, %v1488
        %v1491 = vmul.f32 %v1489, 1.442695
        %v1492 = vpow.pop %v1491
        %v1493 = vmul.f32 %v1490, 1.442695
        %v1494 = vpow.pop %v1493
        %v1495 = vsel %vm508, %v1492, 0.0
        %v1496 = vsel %vm508, %v1494, 0.0
        %v1497 = vadd.f32 %v1495, %v1496
        %v1498 = vrot.slane %v1497, 4
        %v1499 = vadd.f32 %v1497, %v1498
        %v1500 = vrot.slane %v1499, 2
        %v1501 = vadd.f32 %v1499, %v1500
        %v1502 = vrot.slane %v1501, 1
        %v1503 = vadd.f32 %v1501, %v1502
        %v1504 = vrcp.pop %v1503
        %v1505 = vmul.f32 %v1492, %v1504
        %v1506 = vmul.f32 %v1494, %v1504
        %v1507 = vadd.f32 %v1478, %v1505
        %v1508 = vadd.f32 %v1479, %v1506
        %v1509 = vsel %vm508, %v1507, 0.0
        %1510 = vadd.xlane.f32.xlu0 %v1509
        %v1511 = vpop.xlane.xlu0 %1510
        %v1512 = vsel %vm508, %v1508, 0.0
        %1513 = vadd.xlane.f32.xlu0 %v1512
        %v1514 = vpop.xlane.xlu0 %1513
        %vm1515 = vcmask 39968
        %1516 = vst.msk [vmem:[#allocation3] sm:$0xff] %vm1515, %v1511
        %1517 = vst.msk [vmem:[#allocation3 + $0x8] sm:$0xff] %vm1515, %v1514
        %v1518 = vpack.c.bf16 %v894, %v894
        %v1520 = vsel %vm490, %v1518, 0
        %1522 = vmatpush.bf16.msra.mxu0 0
        %1523 = vmatpush.bf16.msra.mxu0 0
        %1524 = vmatpush.bf16.msra.mxu0 0
        %1525 = vmatpush.bf16.msra.mxu0 0
        %1526 = vmatpush.bf16.msra.mxu0 0
        %1527 = vmatpush.bf16.msra.mxu0 0
        %1528 = vmatpush.bf16.msra.mxu0 0
        %1529 = vmatpush.bf16.msra.mxu0 %v1520
        %1530 = vmatmul.bf16.gmra.mxu0 %v720
        %v1531 = vpop.f32.mrf.mxu0
        %v1532 = vadd.f32 %v902, %v1531
        %v1533 = vpop.f32.mrf.mxu0
        %1534 = vdwg.mxu0
        %v1535 = vmax.f32 %v1532, 0.0
        %v1536 = vld [vmem:[#allocation2 + $0x28] sm:$0xff]
        %v1537 = vpack.c.bf16 %v1536, %v1536
        %v1539 = vsel %vm490, %v1537, 0
        %1541 = vmatpush.bf16.msra.mxu0 0
        %1542 = vmatpush.bf16.msra.mxu0 0
        %1543 = vmatpush.bf16.msra.mxu0 0
        %1544 = vmatpush.bf16.msra.mxu0 0
        %1545 = vmatpush.bf16.msra.mxu0 0
        %1546 = vmatpush.bf16.msra.mxu0 0
        %1547 = vmatpush.bf16.msra.mxu0 0
        %1548 = vmatpush.bf16.msra.mxu0 %v1539
        %1549 = vmatmul.bf16.gmra.mxu0 %v928
        %v1550 = vpop.f32.mrf.mxu0
        %v1551 = vadd.f32 0.0, %v1550
        %v1552 = vpop.f32.mrf.mxu0
        %v1553 = vadd.f32 0.0, %v1552
        %1554 = vdwg.mxu0
        %v1555 = vpack.c.bf16 %v1535, %v1535
        %v1557 = vsel %vm490, %v1555, 0
        %1559 = vmatpush.bf16.msra.mxu0 0
        %1560 = vmatpush.bf16.msra.mxu0 0
        %1561 = vmatpush.bf16.msra.mxu0 0
        %1562 = vmatpush.bf16.msra.mxu0 0
        %1563 = vmatpush.bf16.msra.mxu0 0
        %1564 = vmatpush.bf16.msra.mxu0 0
        %1565 = vmatpush.bf16.msra.mxu0 0
        %1566 = vmatpush.bf16.msra.mxu0 %v1557
        %1567 = vmatmul.bf16.gmra.mxu0 %v954
        %v1568 = vpop.f32.mrf.mxu0
        %v1569 = vadd.f32 0.0, %v1568
        %v1570 = vpop.f32.mrf.mxu0
        %v1571 = vadd.f32 0.0, %v1570
        %1572 = vdwg.mxu0
        %v1573 = vsel %vm508, %v1551, -inf
        %v1574 = vsel %vm508, %v1553, -inf
        %v1575 = vmax.f32 %v1573, %v1574
        %v1576 = vrot.slane %v1575, 4
        %v1577 = vmax.f32 %v1575, %v1576
        %v1578 = vrot.slane %v1577, 2
        %v1579 = vmax.f32 %v1577, %v1578
        %v1580 = vrot.slane %v1579, 1
        %v1581 = vmax.f32 %v1579, %v1580
        %v1582 = vsub.f32 %v1551, %v1581
        %v1583 = vsub.f32 %v1553, %v1581
        %v1584 = vmul.f32 %v1582, 1.442695
        %v1585 = vpow.pop %v1584
        %v1586 = vmul.f32 %v1583, 1.442695
        %v1587 = vpow.pop %v1586
        %v1588 = vsel %vm508, %v1585, 0.0
        %v1589 = vsel %vm508, %v1587, 0.0
        %v1590 = vadd.f32 %v1588, %v1589
        %v1591 = vrot.slane %v1590, 4
        %v1592 = vadd.f32 %v1590, %v1591
        %v1593 = vrot.slane %v1592, 2
        %v1594 = vadd.f32 %v1592, %v1593
        %v1595 = vrot.slane %v1594, 1
        %v1596 = vadd.f32 %v1594, %v1595
        %v1597 = vrcp.pop %v1596
        %v1598 = vmul.f32 %v1585, %v1597
        %v1599 = vmul.f32 %v1587, %v1597
        %v1600 = vsel %vm508, %v1569, -inf
        %v1601 = vsel %vm508, %v1571, -inf
        %v1602 = vmax.f32 %v1600, %v1601
        %v1603 = vrot.slane %v1602, 4
        %v1604 = vmax.f32 %v1602, %v1603
        %v1605 = vrot.slane %v1604, 2
        %v1606 = vmax.f32 %v1604, %v1605
        %v1607 = vrot.slane %v1606, 1
        %v1608 = vmax.f32 %v1606, %v1607
        %v1609 = vsub.f32 %v1569, %v1608
        %v1610 = vsub.f32 %v1571, %v1608
        %v1611 = vmul.f32 %v1609, 1.442695
        %v1612 = vpow.pop %v1611
        %v1613 = vmul.f32 %v1610, 1.442695
        %v1614 = vpow.pop %v1613
        %v1615 = vsel %vm508, %v1612, 0.0
        %v1616 = vsel %vm508, %v1614, 0.0
        %v1617 = vadd.f32 %v1615, %v1616
        %v1618 = vrot.slane %v1617, 4
        %v1619 = vadd.f32 %v1617, %v1618
        %v1620 = vrot.slane %v1619, 2
        %v1621 = vadd.f32 %v1619, %v1620
        %v1622 = vrot.slane %v1621, 1
        %v1623 = vadd.f32 %v1621, %v1622
        %v1624 = vrcp.pop %v1623
        %v1625 = vmul.f32 %v1612, %v1624
        %v1626 = vmul.f32 %v1614, %v1624
        %v1627 = vadd.f32 %v1598, %v1625
        %v1628 = vadd.f32 %v1599, %v1626
        %v1629 = vsel %vm508, %v1627, 0.0
        %1630 = vadd.xlane.f32.xlu0 %v1629
        %v1631 = vpop.xlane.xlu0 %1630
        %v1632 = vsel %vm508, %v1628, 0.0
        %1633 = vadd.xlane.f32.xlu0 %v1632
        %v1634 = vpop.xlane.xlu0 %1633
        %vm1635 = vcmask 48168
        %1636 = vst.msk [vmem:[#allocation3] sm:$0xff] %vm1635, %v1631
        %1637 = vst.msk [vmem:[#allocation3 + $0x8] sm:$0xff] %vm1635, %v1634
        %v1638 = vpack.c.bf16 %v897, %v897
        %v1640 = vsel %vm490, %v1638, 0
        %1642 = vmatpush.bf16.msra.mxu0 0
        %1643 = vmatpush.bf16.msra.mxu0 0
        %1644 = vmatpush.bf16.msra.mxu0 0
        %1645 = vmatpush.bf16.msra.mxu0 0
        %1646 = vmatpush.bf16.msra.mxu0 0
        %1647 = vmatpush.bf16.msra.mxu0 0
        %1648 = vmatpush.bf16.msra.mxu0 0
        %1649 = vmatpush.bf16.msra.mxu0 %v1640
        %1650 = vmatmul.bf16.gmra.mxu0 %v766
        %v1651 = vpop.f32.mrf.mxu0
        %v1652 = vadd.f32 %v902, %v1651
        %v1653 = vpop.f32.mrf.mxu0
        %1654 = vdwg.mxu0
        %v1655 = vmax.f32 %v1652, 0.0
        %v1656 = vld [vmem:[#allocation2 + $0x30] sm:$0xff]
        %v1657 = vpack.c.bf16 %v1656, %v1656
        %v1659 = vsel %vm490, %v1657, 0
        %1661 = vmatpush.bf16.msra.mxu0 0
        %1662 = vmatpush.bf16.msra.mxu0 0
        %1663 = vmatpush.bf16.msra.mxu0 0
        %1664 = vmatpush.bf16.msra.mxu0 0
        %1665 = vmatpush.bf16.msra.mxu0 0
        %1666 = vmatpush.bf16.msra.mxu0 0
        %1667 = vmatpush.bf16.msra.mxu0 0
        %1668 = vmatpush.bf16.msra.mxu0 %v1659
        %1669 = vmatmul.bf16.gmra.mxu0 %v928
        %v1670 = vpop.f32.mrf.mxu0
        %v1671 = vadd.f32 0.0, %v1670
        %v1672 = vpop.f32.mrf.mxu0
        %v1673 = vadd.f32 0.0, %v1672
        %1674 = vdwg.mxu0
        %v1675 = vpack.c.bf16 %v1655, %v1655
        %v1677 = vsel %vm490, %v1675, 0
        %1679 = vmatpush.bf16.msra.mxu0 0
        %1680 = vmatpush.bf16.msra.mxu0 0
        %1681 = vmatpush.bf16.msra.mxu0 0
        %1682 = vmatpush.bf16.msra.mxu0 0
        %1683 = vmatpush.bf16.msra.mxu0 0
        %1684 = vmatpush.bf16.msra.mxu0 0
        %1685 = vmatpush.bf16.msra.mxu0 0
        %1686 = vmatpush.bf16.msra.mxu0 %v1677
        %1687 = vmatmul.bf16.gmra.mxu0 %v954
        %v1688 = vpop.f32.mrf.mxu0
        %v1689 = vadd.f32 0.0, %v1688
        %v1690 = vpop.f32.mrf.mxu0
        %v1691 = vadd.f32 0.0, %v1690
        %1692 = vdwg.mxu0
        %v1693 = vsel %vm508, %v1671, -inf
        %v1694 = vsel %vm508, %v1673, -inf
        %v1695 = vmax.f32 %v1693, %v1694
        %v1696 = vrot.slane %v1695, 4
        %v1697 = vmax.f32 %v1695, %v1696
        %v1698 = vrot.slane %v1697, 2
        %v1699 = vmax.f32 %v1697, %v1698
        %v1700 = vrot.slane %v1699, 1
        %v1701 = vmax.f32 %v1699, %v1700
        %v1702 = vsub.f32 %v1671, %v1701
        %v1703 = vsub.f32 %v1673, %v1701
        %v1704 = vmul.f32 %v1702, 1.442695
        %v1705 = vpow.pop %v1704
        %v1706 = vmul.f32 %v1703, 1.442695
        %v1707 = vpow.pop %v1706
        %v1708 = vsel %vm508, %v1705, 0.0
        %v1709 = vsel %vm508, %v1707, 0.0
        %v1710 = vadd.f32 %v1708, %v1709
        %v1711 = vrot.slane %v1710, 4
        %v1712 = vadd.f32 %v1710, %v1711
        %v1713 = vrot.slane %v1712, 2
        %v1714 = vadd.f32 %v1712, %v1713
        %v1715 = vrot.slane %v1714, 1
        %v1716 = vadd.f32 %v1714, %v1715
        %v1717 = vrcp.pop %v1716
        %v1718 = vmul.f32 %v1705, %v1717
        %v1719 = vmul.f32 %v1707, %v1717
        %v1720 = vsel %vm508, %v1689, -inf
        %v1721 = vsel %vm508, %v1691, -inf
        %v1722 = vmax.f32 %v1720, %v1721
        %v1723 = vrot.slane %v1722, 4
        %v1724 = vmax.f32 %v1722, %v1723
        %v1725 = vrot.slane %v1724, 2
        %v1726 = vmax.f32 %v1724, %v1725
        %v1727 = vrot.slane %v1726, 1
        %v1728 = vmax.f32 %v1726, %v1727
        %v1729 = vsub.f32 %v1689, %v1728
        %v1730 = vsub.f32 %v1691, %v1728
        %v1731 = vmul.f32 %v1729, 1.442695
        %v1732 = vpow.pop %v1731
        %v1733 = vmul.f32 %v1730, 1.442695
        %v1734 = vpow.pop %v1733
        %v1735 = vsel %vm508, %v1732, 0.0
        %v1736 = vsel %vm508, %v1734, 0.0
        %v1737 = vadd.f32 %v1735, %v1736
        %v1738 = vrot.slane %v1737, 4
        %v1739 = vadd.f32 %v1737, %v1738
        %v1740 = vrot.slane %v1739, 2
        %v1741 = vadd.f32 %v1739, %v1740
        %v1742 = vrot.slane %v1741, 1
        %v1743 = vadd.f32 %v1741, %v1742
        %v1744 = vrcp.pop %v1743
        %v1745 = vmul.f32 %v1732, %v1744
        %v1746 = vmul.f32 %v1734, %v1744
        %v1747 = vadd.f32 %v1718, %v1745
        %v1748 = vadd.f32 %v1719, %v1746
        %v1749 = vsel %vm508, %v1747, 0.0
        %1750 = vadd.xlane.f32.xlu0 %v1749
        %v1751 = vpop.xlane.xlu0 %1750
        %v1752 = vsel %vm508, %v1748, 0.0
        %1753 = vadd.xlane.f32.xlu0 %v1752
        %v1754 = vpop.xlane.xlu0 %1753
        %vm1755 = vcmask 56368
        %1756 = vst.msk [vmem:[#allocation3] sm:$0xff] %vm1755, %v1751
        %1757 = vst.msk [vmem:[#allocation3 + $0x8] sm:$0xff] %vm1755, %v1754
        %v1758 = vpack.c.bf16 %v899, %v899
        %v1760 = vsel %vm490, %v1758, 0
        %1762 = vmatpush.bf16.msra.mxu0 0
        %1763 = vmatpush.bf16.msra.mxu0 0
        %1764 = vmatpush.bf16.msra.mxu0 0
        %1765 = vmatpush.bf16.msra.mxu0 0
        %1766 = vmatpush.bf16.msra.mxu0 0
        %1767 = vmatpush.bf16.msra.mxu0 0
        %1768 = vmatpush.bf16.msra.mxu0 0
        %1769 = vmatpush.bf16.msra.mxu0 %v1760
        %1770 = vmatmul.bf16.gmra.mxu0 %v812
        %v1771 = vpop.f32.mrf.mxu0
        %v1772 = vadd.f32 %v902, %v1771
        %v1773 = vpop.f32.mrf.mxu0
        %1774 = vdwg.mxu0
        %v1775 = vmax.f32 %v1772, 0.0
        %v1776 = vld [vmem:[#allocation2 + $0x38] sm:$0xff]
        %v1777 = vpack.c.bf16 %v1776, %v1776
        %v1779 = vsel %vm490, %v1777, 0
        %1781 = vmatpush.bf16.msra.mxu0 0
        %1782 = vmatpush.bf16.msra.mxu0 0
        %1783 = vmatpush.bf16.msra.mxu0 0
        %1784 = vmatpush.bf16.msra.mxu0 0
        %1785 = vmatpush.bf16.msra.mxu0 0
        %1786 = vmatpush.bf16.msra.mxu0 0
        %1787 = vmatpush.bf16.msra.mxu0 0
        %1788 = vmatpush.bf16.msra.mxu0 %v1779
        %1789 = vmatmul.bf16.gmra.mxu0 %v928
        %v1790 = vpop.f32.mrf.mxu0
        %v1791 = vadd.f32 0.0, %v1790
        %v1792 = vpop.f32.mrf.mxu0
        %v1793 = vadd.f32 0.0, %v1792
        %1794 = vdwg.mxu0
        %v1795 = vpack.c.bf16 %v1775, %v1775
        %v1797 = vsel %vm490, %v1795, 0
        %1799 = vmatpush.bf16.msra.mxu0 0
        %1800 = vmatpush.bf16.msra.mxu0 0
        %1801 = vmatpush.bf16.msra.mxu0 0
        %1802 = vmatpush.bf16.msra.mxu0 0
        %1803 = vmatpush.bf16.msra.mxu0 0
        %1804 = vmatpush.bf16.msra.mxu0 0
        %1805 = vmatpush.bf16.msra.mxu0 0
        %1806 = vmatpush.bf16.msra.mxu0 %v1797
        %1807 = vmatmul.bf16.gmra.mxu0 %v954
        %v1808 = vpop.f32.mrf.mxu0
        %v1809 = vadd.f32 0.0, %v1808
        %v1810 = vpop.f32.mrf.mxu0
        %v1811 = vadd.f32 0.0, %v1810
        %1812 = vdwg.mxu0
        %v1813 = vsel %vm508, %v1791, -inf
        %v1814 = vsel %vm508, %v1793, -inf
        %v1815 = vmax.f32 %v1813, %v1814
        %v1816 = vrot.slane %v1815, 4
        %v1817 = vmax.f32 %v1815, %v1816
        %v1818 = vrot.slane %v1817, 2
        %v1819 = vmax.f32 %v1817, %v1818
        %v1820 = vrot.slane %v1819, 1
        %v1821 = vmax.f32 %v1819, %v1820
        %v1822 = vsub.f32 %v1791, %v1821
        %v1823 = vsub.f32 %v1793, %v1821
        %v1824 = vmul.f32 %v1822, 1.442695
        %v1825 = vpow.pop %v1824
        %v1826 = vmul.f32 %v1823, 1.442695
        %v1827 = vpow.pop %v1826
        %v1828 = vsel %vm508, %v1825, 0.0
        %v1829 = vsel %vm508, %v1827, 0.0
        %v1830 = vadd.f32 %v1828, %v1829
        %v1831 = vrot.slane %v1830, 4
        %v1832 = vadd.f32 %v1830, %v1831
        %v1833 = vrot.slane %v1832, 2
        %v1834 = vadd.f32 %v1832, %v1833
        %v1835 = vrot.slane %v1834, 1
        %v1836 = vadd.f32 %v1834, %v1835
        %v1837 = vrcp.pop %v1836
        %v1838 = vmul.f32 %v1825, %v1837
        %v1839 = vmul.f32 %v1827, %v1837
        %v1840 = vsel %vm508, %v1809, -inf
        %v1841 = vsel %vm508, %v1811, -inf
        %v1842 = vmax.f32 %v1840, %v1841
        %v1843 = vrot.slane %v1842, 4
        %v1844 = vmax.f32 %v1842, %v1843
        %v1845 = vrot.slane %v1844, 2
        %v1846 = vmax.f32 %v1844, %v1845
        %v1847 = vrot.slane %v1846, 1
        %v1848 = vmax.f32 %v1846, %v1847
        %v1849 = vsub.f32 %v1809, %v1848
        %v1850 = vsub.f32 %v1811, %v1848
        %v1851 = vmul.f32 %v1849, 1.442695
        %v1852 = vpow.pop %v1851
        %v1853 = vmul.f32 %v1850, 1.442695
        %v1854 = vpow.pop %v1853
        %v1855 = vsel %vm508, %v1852, 0.0
        %v1856 = vsel %vm508, %v1854, 0.0
        %v1857 = vadd.f32 %v1855, %v1856
        %v1858 = vrot.slane %v1857, 4
        %v1859 = vadd.f32 %v1857, %v1858
        %v1860 = vrot.slane %v1859, 2
        %v1861 = vadd.f32 %v1859, %v1860
        %v1862 = vrot.slane %v1861, 1
        %v1863 = vadd.f32 %v1861, %v1862
        %v1864 = vrcp.pop %v1863
        %v1865 = vmul.f32 %v1852, %v1864
        %v1866 = vmul.f32 %v1854, %v1864
        %v1867 = vadd.f32 %v1838, %v1865
        %v1868 = vadd.f32 %v1839, %v1866
        %v1869 = vsel %vm508, %v1867, 0.0
        %1870 = vadd.xlane.f32.xlu0 %v1869
        %v1871 = vpop.xlane.xlu0 %1870
        %v1872 = vsel %vm508, %v1868, 0.0
        %1873 = vadd.xlane.f32.xlu0 %v1872
        %v1874 = vpop.xlane.xlu0 %1873
        %vm1875 = vcmask 64568
        %1876 = vst.msk [vmem:[#allocation3] sm:$0xff] %vm1875, %v1871
        %1877 = vst.msk [vmem:[#allocation3 + $0x8] sm:$0xff] %vm1875, %v1874
        %v1878 = vld [vmem:[#allocation3] sm:$0xff]
        %v1879 = vld [vmem:[#allocation3 + $0x8] sm:$0xff]
        %v1880 = vld [vmem:[%s7] sm:$0xff]
        %v1881 = vld [vmem:[%s7 + $0x8] sm:$0xff]
        %v1882 = vld [vmem:[%s8] sm:$0x1]
        %v1884 = vperm.slane %v1882, 0
        %1886 = vxpose.xlu0.b32.start [1/16] %v1878, 128
        %1887 = vxpose.xlu0.b32.cont [2/16] %v1879, 128
        %1888 = vxpose.xlu0.b32.cont [3/16] 0.0, 128
        %1889 = vxpose.xlu0.b32.cont [4/16] 0.0, 128
        %1890 = vxpose.xlu0.b32.cont [5/16] 0.0, 128
        %1891 = vxpose.xlu0.b32.cont [6/16] 0.0, 128
        %1892 = vxpose.xlu0.b32.cont [7/16] 0.0, 128
        %1893 = vxpose.xlu0.b32.cont [8/16] 0.0, 128
        %1894 = vxpose.xlu0.b32.cont [9/16] 0.0, 128
        %1895 = vxpose.xlu0.b32.cont [10/16] 0.0, 128
        %1896 = vxpose.xlu0.b32.cont [11/16] 0.0, 128
        %1897 = vxpose.xlu0.b32.cont [12/16] 0.0, 128
        %1898 = vxpose.xlu0.b32.cont [13/16] 0.0, 128
        %1899 = vxpose.xlu0.b32.cont [14/16] 0.0, 128
        %1900 = vxpose.xlu0.b32.cont [15/16] 0.0, 128
        %1901 = vxpose.xlu0.b32.end [16/16] 0.0, 128
        %v1902 = vpop.trf.xlu0
        %v1903 = vpop.trf.xlu0
        %v1904 = vpop.trf.xlu0
        %v1905 = vpop.trf.xlu0
        %v1906 = vpop.trf.xlu0
        %v1907 = vpop.trf.xlu0
        %v1908 = vpop.trf.xlu0
        %v1909 = vpop.trf.xlu0
        %v1910 = vpop.trf.xlu0
        %v1911 = vpop.trf.xlu0
        %v1912 = vpop.trf.xlu0
        %v1913 = vpop.trf.xlu0
        %v1914 = vpop.trf.xlu0
        %v1915 = vpop.trf.xlu0
        %v1916 = vpop.trf.xlu0
        %v1917 = vpop.trf.xlu0
        %vm1918 = vcmask 130048
        %v1920 = vsel %vm1918, %v1902, 0
        %1922 = vmatpush.msra.mxu0 0.0
        %1923 = vmatpush.msra.mxu0 0.0
        %1924 = vmatpush.msra.mxu0 0.0
        %1925 = vmatpush.msra.mxu0 0.0
        %1926 = vmatpush.msra.mxu0 0.0
        %1927 = vmatpush.msra.mxu0 0.0
        %1928 = vmatpush.msra.mxu0 0.0
        %1929 = vmatpush.msra.mxu0 0.0
        %1930 = vmatpush.msra.mxu0 0.0
        %1931 = vmatpush.msra.mxu0 0.0
        %1932 = vmatpush.msra.mxu0 0.0
        %1933 = vmatpush.msra.mxu0 0.0
        %1934 = vmatpush.msra.mxu0 0.0
        %1935 = vmatpush.msra.mxu0 0.0
        %1936 = vmatpush.msra.mxu0 %v1881
        %1937 = vmatpush.msra.mxu0 %v1880
        %1938 = vmatmul.f32.gmra.mxu0 %v1920
        %v1939 = vpop.f32.mrf.mxu0
        %v1940 = vadd.f32 %v1884, %v1939
        %1941 = vdwg.mxu0
        %vm1942 = vcmask 80896
        %v1943 = vsel %vm1942, %v1940, -inf
        %1944 = vmax.xlane.f32.xlu0 %v1943
        %v1945 = vpop.xlane.xlu0 %1944
        %v1946 = vsub.f32 %v1940, %v1945
        %v1947 = vmul.f32 %v1946, 1.442695
        %v1948 = vpow.pop %v1947
        %v1949 = vsel %vm1942, %v1948, 0.0
        %1950 = vadd.xlane.f32.xlu0 %v1949
        %v1951 = vpop.xlane.xlu0 %1950
        %v1952 = vrcp.pop %v1951
        %v1953 = vmul.f32 %v1951, %v1952
        %v1954 = vsub.f32 1.0, %v1953
        %v1955 = vmul.f32 %v1952, %v1954
        %v1956 = vadd.f32 %v1952, %v1955
        %vm1957 = vweird.f32 %v1951
        %vm1958 = vweird.f32 %v1952
        %vm1959 = vmor %vm1957, %vm1958
        %v1960 = vsel %vm1959, %v1952, %v1956
        %v1961 = vand.u32 2147483647, %v1951
        %vm1962 = vcmp.eq.f32.partialorder %v1961, 8.507059e+37
        %v1963 = vand.u32 %v1951, 2147483648
        %v1964 = vor.u32 1.1754944e-38, %v1963
        %v1965 = vsel %vm1962, %v1964, %v1960
        %v1966 = vmul.f32 %v1948, %v1965
        %1967 = vst.msk [vmem:[%s358] sm:$0xff] %vm1942, %v1966
        %s1968 = sand.u32 %s235, 1
        %s1969 = scalar_lea.sflag [#allocation5], %s1968
        %s1970 = sand.u32 %s235, 1
        %s1971 = smul.addr %s1970, 8
        %s1972 = scalar_lea.vmem [#allocation4], %s1971
        // Predicated region
        $region57: #{tpu_custom_call.1} parent=55 // pred_check
          %p1973 = pneg %p245
        $region58: #{tpu_custom_call.1} parent=55 // pred_check_branch
          %1975 = sbr.rel (%p1973) target = $region60
        $region59: #{tpu_custom_call.1} parent=55 // pred_region
          %1977 = vsyncadd %s1969, 0
          %s1978 = smul.addr %s23, 8
          %s1979 = scalar_lea.hbm %s9, %s1978
          %s1981 = sshll.u32 %s1972, 4
          %s1982 = int_to_ptr.vmem [resolvable:$true] %s1981
          %s1983 = sshll.u32 %s1979, 4
          %s1984 = int_to_ptr.hbm [resolvable:$true] %s1983
          %1986 = dma.vmem_to_hbm [thread:$0]  %s1982, 128, %s1984, %s1969
        $region60: #{tpu_custom_call.1} parent=55 // pred_fallthru
          _
      $region56: #{tpu_custom_call.1} parent=5 // pred_fallthru
        _
      %p1987 = scmp.le.s32.totalorder 2, %s18
      // Predicated region
      $region61: #{tpu_custom_call.1} parent=5 // pred_check
        %p1988 = pneg %p1987
      $region62: #{tpu_custom_call.1} parent=5 // pred_check_branch
        %1990 = sbr.rel (%p1988) target = $region64
      $region63: #{tpu_custom_call.1} parent=5 // pred_region
        %s1991 = ssub.s32 %s18, 2
        // Predicated region
        $region65: #{tpu_custom_call.1} parent=63 // pred_check
          %p1992 = pneg %p251
        $region66: #{tpu_custom_call.1} parent=63 // pred_check_branch
          %1994 = sbr.rel (%p1992) target = $region68
        $region67: #{tpu_custom_call.1} parent=63 // pred_region
          %s1995 = sand.u32 %s236, 1
          %s1996 = scalar_lea.sflag [#allocation5], %s1995
          %s1997 = sand.u32 %s236, 1
          %s1998 = smul.addr %s1997, 8
          %s1999 = scalar_lea.vmem [#allocation4], %s1998
          %2001 = dma.done %s1996, 128
        $region68: #{tpu_custom_call.1} parent=63 // pred_fallthru
          _
      $region64: #{tpu_custom_call.1} parent=5 // pred_fallthru
        _
    $region6: #{tpu_custom_call.1} parent=1 // loop_footer
      %s22 = sadd.s32 1, %s18
    $region7: #{tpu_custom_call.1} parent=1 // loop_footer_branch
      %17 = sbr.rel target = $region3
    $region8: #{tpu_custom_call.1} parent=1 // loop_exit
      _
    %2002 = vsyncpa [#allocation5], 1
    %s2003 = scalar_lea.sflag [#allocation5], 1
    %2004 = vsyncpa %s2003, 1

</llo_original>
